<compile_context>
chip_gen: v7x
topology: tpu7x:2x2x1
jax: 0.10.0
libtpu: 0.0.40
codegen_flags: <defaults>
</compile_context>

<pallas_src>
from functools import partial

import jax
import jax.numpy as jnp
import numpy as np
from jax.experimental import pallas as pl
from jax.experimental.pallas import tpu as pltpu

SUBLANES = 8
LANES = 128


def _round_up(v, m):
    return ((v + m - 1) // m) * m


def make_dqgn_kernel(n_pad, gh, use_prng):
    """gh = G * hidden_dim = lane width of the packed activations (128)."""

    def kernel(seed_ref, x_ref, a_ref, drop_ref,
               w1_ref, b1_ref, w2_ref, b2_ref, w3_ref, b3_ref,
               wq_ref, sel_ref, red_ref, bq_ref,
               q_ref, mask_ref):
        if use_prng:
            # Fresh dropout bits drawn on-chip; seeding with program_id keeps
            # the draw deterministic regardless of which TensorCore runs
            # which grid step ("parallel" megacore sharding).
            pltpu.prng_seed(seed_ref[0] + pl.program_id(0))

            def draw():
                bits = pltpu.prng_random_bits((n_pad, gh))
                return (bits & 1).astype(jnp.float32) * 2.0   # {0, 1/keep} for p=0.5

            d1, d2, d3 = draw(), draw(), draw()
        else:
            d1, d2, d3 = drop_ref[0], drop_ref[1], drop_ref[2]

        # Export the masks actually used (exact reference check; a trainer
        # would also need them for the backward pass).
        mask_ref[0] = d1
        mask_ref[1] = d2
        mask_ref[2] = d3

        a = a_ref[...]                                   # [n_pad, n_pad] shared adjacency
        f32 = jnp.float32

        # --- Layer 1: GCNConv(1, H).  x is pre-expanded to [n_pad, G*H];
        # the outer product x*w1 is a single-vreg VPU multiply.
        h = x_ref[...] * w1_ref[...]
        h = jnp.maximum(jnp.dot(a, h, preferred_element_type=f32) + b1_ref[...], 0.0) * d1

        # --- Layer 2: GCNConv(H, H) as one full-lane block-diagonal matmul.
        h = jnp.dot(h, w2_ref[...], preferred_element_type=f32)
        h = jnp.maximum(jnp.dot(a, h, preferred_element_type=f32) + b2_ref[...], 0.0) * d2

        # --- Layer 3: GCNConv(H, H)
        h = jnp.dot(h, w3_ref[...], preferred_element_type=f32)
        h = jnp.maximum(jnp.dot(a, h, preferred_element_type=f32) + b3_ref[...], 0.0) * d3

        # --- Per-node Q heads, fully on the MXU:
        #   bigq[n, g*64 + m*8 + p] = sum_h h[n, g*H+h] * wq[m, h, p]
        #   sel picks m == n,  red sums over m and keeps (g, p) columns.
        bigq = jnp.dot(h, wq_ref[...], preferred_element_type=f32)        # [8, 256]
        q = jnp.dot(bigq * sel_ref[...], red_ref[...],
                    preferred_element_type=f32)                           # [8, G*p_pad]
        q_ref[...] = q + bq_ref[...]

    return kernel


def gcn_norm_adj(edge_index, num_nodes, n_pad):
    """Dense D^-1/2 (A + I) D^-1/2 matching torch_geometric GCNConv gcn_norm,
    zero-padded to [n_pad, n_pad] (padded rows AND columns are zero)."""
    src = edge_index[0]
    dst = edge_index[1]
    loops = jnp.arange(num_nodes, dtype=edge_index.dtype)
    src = jnp.concatenate([src, loops])
    dst = jnp.concatenate([dst, loops])
    deg = jnp.zeros((num_nodes,), jnp.float32).at[dst].add(1.0)
    dinv = jnp.where(deg > 0, 1.0 / jnp.sqrt(deg), 0.0)
    norm = dinv[src] * dinv[dst]
    a_hat = jnp.zeros((n_pad, n_pad), jnp.float32).at[dst, src].add(norm)
    return a_hat


def make_dropout_scales(key, blocks, n_pad, gh, p=0.5):
    """Host-side fallback masks (only used if pltpu.prng_* cannot lower)."""
    keep = jax.random.bernoulli(key, 1.0 - p, (blocks, 3, n_pad, gh))
    return keep.astype(jnp.float32) / (1.0 - p)


def init_params(key, hidden_dim, num_nodes_phases, n_pad, p_pad):
    n_real = len(num_nodes_phases)
    ks = jax.random.split(key, 8)
    params = {
        # GCNConv(1, H): lin weight stored as [in, out], bias [1, out]
        "w1": jax.random.normal(ks[0], (1, hidden_dim), jnp.float32) * 0.5,
        "b1": jax.random.normal(ks[1], (1, hidden_dim), jnp.float32) * 0.1,
        # GCNConv(H, H) x2
        "w2": jax.random.normal(ks[2], (hidden_dim, hidden_dim), jnp.float32) * 0.1,
        "b2": jax.random.normal(ks[3], (1, hidden_dim), jnp.float32) * 0.1,
        "w3": jax.random.normal(ks[4], (hidden_dim, hidden_dim), jnp.float32) * 0.1,
        "b3": jax.random.normal(ks[5], (1, hidden_dim), jnp.float32) * 0.1,
    }
    # Per-node Linear(H, n_i) heads, stacked + zero-masked to [n_pad, H, p_pad].
    wq = jax.random.normal(ks[6], (n_pad, hidden_dim, p_pad), jnp.float32) * 0.1
    bq = jax.random.normal(ks[7], (n_pad, p_pad), jnp.float32) * 0.1
    phases = jnp.zeros((n_pad,), jnp.int32).at[:n_real].set(
        jnp.array(num_nodes_phases, jnp.int32))
    valid = (jnp.arange(p_pad)[None, :] < phases[:, None]).astype(jnp.float32)
    params["wq"] = wq * valid[:, None, :]
    params["bq"] = bq * valid
    return params


def pack_params(params, G):
    """Host-side, once: lane-packed / block-diagonal weight layout."""
    H = params["w2"].shape[0]
    n_pad, _, p_pad = params["wq"].shape
    npp = n_pad * p_pad
    eye_g = jnp.eye(G, dtype=jnp.float32)
    # Per-node heads flattened to [H, n_pad*p_pad], then block-diag over graphs.
    wq_flat = params["wq"].transpose(1, 0, 2).reshape(H, npp)
    cols = jnp.arange(G * npp)
    # sel[n, g*npp + m*p_pad + p] = (m == n)
    sel = ((cols[None, :] // p_pad) % n_pad ==
           jnp.arange(n_pad)[:, None]).astype(jnp.float32)
    # red[g*npp + m*p_pad + p, g'*p_pad + p'] = (g == g') & (p == p')
    ocols = jnp.arange(G * p_pad)
    red = (((cols[:, None] // npp) == (ocols[None, :] // p_pad))
           & ((cols[:, None] % p_pad) == (ocols[None, :] % p_pad))).astype(jnp.float32)
    return {
        "w1": jnp.tile(params["w1"], (1, G)),          # [1, G*H]
        "b1": jnp.tile(params["b1"], (1, G)),
        "w2": jnp.kron(eye_g, params["w2"]),           # [G*H, G*H] block-diag
        "b2": jnp.tile(params["b2"], (1, G)),
        "w3": jnp.kron(eye_g, params["w3"]),
        "b3": jnp.tile(params["b3"], (1, G)),
        "wq": jnp.kron(eye_g, wq_flat),                # [G*H, G*n_pad*p_pad]
        "sel": sel,                                    # [n_pad, G*n_pad*p_pad]
        "red": red,                                    # [G*n_pad*p_pad, G*p_pad]
        "bq": jnp.tile(params["bq"], (1, G)),          # [n_pad, G*p_pad]
    }


@partial(jax.jit, static_argnames=("hidden_dim", "use_prng"))
def dqgn_forward(packed, x, a_hat, seed, drop_scales=None, *,
                 hidden_dim, use_prng=True):
    """x: [B, N, 1] node pressures.  Returns (q [B, n_pad, p_pad],
    masks [B, 3, n_pad, H] actually used for dropout)."""
    assert LANES % hidden_dim == 0, "hidden_dim must divide 128 for lane packing"
    G = LANES // hidden_dim
    GH = G * hidden_dim
    B, n_real, _ = x.shape
    n_pad = a_hat.shape[0]
    p_pack = packed["bq"].shape[1]
    p_pad = p_pack // G

    blocks = -(-B // G)              # ceil(B / G) lane-packed blocks == grid size
    Bp = blocks * G

    # Pack G graphs per lane group: x_exp[blk, n, g*H + h] = pressure(graph blk*G+g, node n)
    x_flat = jnp.zeros((Bp, n_pad), jnp.float32).at[:B, :n_real].set(x[:, :, 0])
    x_packed = x_flat.reshape(blocks, G, n_pad).transpose(0, 2, 1)
    x_exp = jnp.broadcast_to(x_packed[..., None],
                             (blocks, n_pad, G, hidden_dim)).reshape(blocks, n_pad, GH)

    if drop_scales is None:          # unused when use_prng=True
        drop_scales = jnp.zeros((blocks, 3, n_pad, GH), jnp.float32)

    seed_arr = jnp.asarray(seed, jnp.int32).reshape((1,))

    def const(shape):                # shared operand: DMA'd once, reused every step
        return pl.BlockSpec(shape, lambda blk, *_: (0,) * len(shape))

    in_specs = [
        pl.BlockSpec((None, n_pad, GH), lambda blk, *_: (blk, 0, 0)),        # x (packed)
        const((n_pad, n_pad)),                                               # a_hat
        pl.BlockSpec((None, 3, n_pad, GH), lambda blk, *_: (blk, 0, 0, 0)),  # fallback masks
        const((1, GH)), const((1, GH)),                                      # w1_t, b1_t
        const((GH, GH)), const((1, GH)),                                     # w2_bd, b2_t
        const((GH, GH)), const((1, GH)),                                     # w3_bd, b3_t
        const((GH, G * n_pad * p_pad)),                                      # wq_all
        const((n_pad, G * n_pad * p_pad)),                                   # sel
        const((G * n_pad * p_pad, p_pack)),                                  # red
        const((n_pad, p_pack)),                                              # bq
    ]
    out_specs = (
        pl.BlockSpec((None, n_pad, p_pack), lambda blk, *_: (blk, 0, 0)),
        pl.BlockSpec((None, 3, n_pad, GH), lambda blk, *_: (blk, 0, 0, 0)),
    )
    out_shape = (jax.ShapeDtypeStruct((blocks, n_pad, p_pack), jnp.float32),
                 jax.ShapeDtypeStruct((blocks, 3, n_pad, GH), jnp.float32))

    q_packed, masks_packed = pl.pallas_call(
        make_dqgn_kernel(n_pad, GH, use_prng),
        grid_spec=pltpu.PrefetchScalarGridSpec(
            num_scalar_prefetch=1,
            grid=(blocks,),
            in_specs=in_specs,
            out_specs=out_specs),
        out_shape=out_shape,
        compiler_params=pltpu.CompilerParams(
            dimension_semantics=("parallel",)),
    )(seed_arr, x_exp, a_hat, drop_scales,
      packed["w1"], packed["b1"], packed["w2"], packed["b2"],
      packed["w3"], packed["b3"], packed["wq"], packed["sel"],
      packed["red"], packed["bq"])

    # Unpack lane-packed outputs back to per-graph layout.
    q = (q_packed.reshape(blocks, n_pad, G, p_pad)
                 .transpose(0, 2, 1, 3)
                 .reshape(Bp, n_pad, p_pad)[:B])
    masks = (masks_packed.reshape(blocks, 3, n_pad, G, hidden_dim)
                         .transpose(0, 3, 1, 2, 4)
                         .reshape(Bp, 3, n_pad, hidden_dim)[:B])
    return q, masks


def forward_reference(params, x_p, a_hat, masks):
    """Pure-JAX reference using the exact masks the kernel drew."""
    def one(xb, db):
        h = jnp.maximum(a_hat @ (xb * params["w1"]) + params["b1"], 0.0) * db[0]
        h = jnp.maximum(a_hat @ (h @ params["w2"]) + params["b2"], 0.0) * db[1]
        h = jnp.maximum(a_hat @ (h @ params["w3"]) + params["b3"], 0.0) * db[2]
        return jnp.einsum("nh,nhp->np", h, params["wq"]) + params["bq"]
    return jax.vmap(one)(x_p, masks)


if __name__ == "__main__":
    key = jax.random.PRNGKey(0)

    # Synthetic "grid environment": 4 traffic lights with 2/3/4/3 phases in a
    # ring; hidden_dim = 32; B = 16 env-step forwards -> 4 lane-packed blocks
    # -> grid=(4,) (>= 2 steps so both v7x TensorCores get work).
    num_nodes_phases = [2, 3, 4, 3]
    N = len(num_nodes_phases)
    hidden_dim = 32
    B = 16

    G = LANES // hidden_dim                               # 4 graphs per lane group
    n_pad = _round_up(N, SUBLANES)                        # 8
    p_pad = _round_up(max(num_nodes_phases), SUBLANES)    # 8 (was 128)

    edge_index = jnp.array([[0, 1, 1, 2, 2, 3, 3, 0],
                            [1, 0, 2, 1, 3, 2, 0, 3]], dtype=jnp.int32)
    a_hat = gcn_norm_adj(edge_index, N, n_pad)

    k_params, k_x, k_drop = jax.random.split(key, 3)
    params = init_params(k_params, hidden_dim, num_nodes_phases, n_pad, p_pad)
    packed = pack_params(params, G)

    # Input == current_pressure(): one scalar pressure per traffic light.
    x = jax.random.normal(k_x, (B, N, 1), jnp.float32)

    seed = 1234   # vary per env step in real use -> fresh dropout, no recompile
    try:
        q, masks = dqgn_forward(packed, x, a_hat, seed,
                                hidden_dim=hidden_dim, use_prng=True)
        q, masks = jax.block_until_ready((q, masks))
    except Exception:
        # TODO(synk): pltpu.prng_* has no interpret/CPU lowering; fall back to
        # host-drawn masks only if this environment cannot lower it.
        blocks = -(-B // G)
        drop = make_dropout_scales(jax.random.fold_in(k_drop, seed),
                                   blocks, n_pad, G * hidden_dim)
        q, masks = dqgn_forward(packed, x, a_hat, seed, drop,
                                hidden_dim=hidden_dim, use_prng=False)
        q, masks = jax.block_until_ready((q, masks))

    assert q.shape == (B, n_pad, p_pad)
    assert masks.shape == (B, 3, n_pad, hidden_dim)

    # Dropout sanity: scales are in {0, 2} with ~50% keep rate.
    masks_host = np.asarray(masks)
    assert set(np.unique(masks_host)).issubset({0.0, 2.0})
    assert 0.7 < masks_host.mean() < 1.3

    # Correctness vs pure-JAX reference with identical masks (tight tolerance).
    x_p = jnp.pad(x, ((0, 0), (0, n_pad - N), (0, 0)))
    q_ref = jax.block_until_ready(forward_reference(params, x_p, a_hat, masks))
    assert np.allclose(np.asarray(q), np.asarray(q_ref), rtol=1e-4, atol=1e-5), \
        "kernel output mismatch vs reference"

    # Padding never leaks into Q-values: padded nodes / phases are exactly zero.
    q_host = np.asarray(q)
    assert np.all(q_host[:, N:, :] == 0.0)
    for i, n_ph in enumerate(num_nodes_phases):
        assert np.all(q_host[:, i, n_ph:] == 0.0)

    # Same structure as the PyTorch module: list of per-node Q-value vectors,
    # sliced once on the host (no per-node device dispatches).
    for b in range(B):
        q_values = [q_host[b, i, :n] for i, n in enumerate(num_nodes_phases)]
        assert len(q_values) == N
        for qv, n in zip(q_values, num_nodes_phases):
            assert qv.shape == (n,)

    print("KERNEL_OK")
</pallas_src>

<mosaic_0001>
module attributes {stable_mosaic.version = 11 : i64} {
  func.func @kernel(%arg0: i32, %arg1: memref<1xi32, #tpu.memory_space<smem>>, %arg2: memref<1x8x128xf32, #tpu.memory_space<vmem>>, %arg3: memref<8x8xf32, #tpu.memory_space<vmem>>, %arg4: memref<1x3x8x128xf32, #tpu.memory_space<vmem>>, %arg5: memref<1x128xf32, #tpu.memory_space<vmem>>, %arg6: memref<1x128xf32, #tpu.memory_space<vmem>>, %arg7: memref<128x128xf32, #tpu.memory_space<vmem>>, %arg8: memref<1x128xf32, #tpu.memory_space<vmem>>, %arg9: memref<128x128xf32, #tpu.memory_space<vmem>>, %arg10: memref<1x128xf32, #tpu.memory_space<vmem>>, %arg11: memref<128x256xf32, #tpu.memory_space<vmem>>, %arg12: memref<8x256xf32, #tpu.memory_space<vmem>>, %arg13: memref<256x32xf32, #tpu.memory_space<vmem>>, %arg14: memref<8x32xf32, #tpu.memory_space<vmem>>, %arg15: memref<1x8x32xf32, #tpu.memory_space<vmem>>, %arg16: memref<1x3x8x128xf32, #tpu.memory_space<vmem>>) attributes {dimension_semantics = [#tpu.dimension_semantics<parallel>], iteration_bounds = array<i64: 4>, scalar_prefetch = 1 : i64, scratch_operands = 0 : i64, tpu.core_type = #tpu.core_type<tc>, window_params = [{transform_indices = @transform_0, window_bounds = array<i64: 1, 8, 128>}, {pipeline_mode = #tpu.pipeline_mode<synchronous>, transform_indices = @transform_1, window_bounds = array<i64: 8, 8>}, {transform_indices = @transform_2, window_bounds = array<i64: 1, 3, 8, 128>}, {pipeline_mode = #tpu.pipeline_mode<synchronous>, transform_indices = @transform_3, window_bounds = array<i64: 1, 128>}, {pipeline_mode = #tpu.pipeline_mode<synchronous>, transform_indices = @transform_4, window_bounds = array<i64: 1, 128>}, {pipeline_mode = #tpu.pipeline_mode<synchronous>, transform_indices = @transform_5, window_bounds = array<i64: 128, 128>}, {pipeline_mode = #tpu.pipeline_mode<synchronous>, transform_indices = @transform_6, window_bounds = array<i64: 1, 128>}, {pipeline_mode = #tpu.pipeline_mode<synchronous>, transform_indices = @transform_7, window_bounds = array<i64: 128, 128>}, {pipeline_mode = #tpu.pipeline_mode<synchronous>, transform_indices = @transform_8, window_bounds = array<i64: 1, 128>}, {pipeline_mode = #tpu.pipeline_mode<synchronous>, transform_indices = @transform_9, window_bounds = array<i64: 128, 256>}, {pipeline_mode = #tpu.pipeline_mode<synchronous>, transform_indices = @transform_10, window_bounds = array<i64: 8, 256>}, {pipeline_mode = #tpu.pipeline_mode<synchronous>, transform_indices = @transform_11, window_bounds = array<i64: 256, 32>}, {pipeline_mode = #tpu.pipeline_mode<synchronous>, transform_indices = @transform_12, window_bounds = array<i64: 8, 32>}, {transform_indices = @transform_13, window_bounds = array<i64: 1, 8, 32>}, {transform_indices = @transform_14, window_bounds = array<i64: 1, 3, 8, 128>}]} {
    %c0 = arith.constant 0 : index
    %0 = memref.load %arg1[%c0] : memref<1xi32, #tpu.memory_space<smem>>
    %1 = arith.addi %0, %arg0 : i32
    "tpu.prng_set_seed_32"(%1) : (i32) -> ()
    %2 = "tpu.prng_random_bits"() : () -> vector<8x128xi32>
    %c1_i32 = arith.constant 1 : i32
    %3 = vector.broadcast %c1_i32 : i32 to vector<8x128xi32>
    %4 = arith.andi %2, %3 : vector<8x128xi32>
    %5 = arith.sitofp %4 : vector<8x128xi32> to vector<8x128xf32>
    %cst = arith.constant 2.000000e+00 : f32
    %6 = vector.broadcast %cst : f32 to vector<8x128xf32>
    %7 = arith.mulf %5, %6 : vector<8x128xf32>
    %8 = "tpu.prng_random_bits"() : () -> vector<8x128xi32>
    %c1_i32_0 = arith.constant 1 : i32
    %9 = vector.broadcast %c1_i32_0 : i32 to vector<8x128xi32>
    %10 = arith.andi %8, %9 : vector<8x128xi32>
    %11 = arith.sitofp %10 : vector<8x128xi32> to vector<8x128xf32>
    %cst_1 = arith.constant 2.000000e+00 : f32
    %12 = vector.broadcast %cst_1 : f32 to vector<8x128xf32>
    %13 = arith.mulf %11, %12 : vector<8x128xf32>
    %14 = "tpu.prng_random_bits"() : () -> vector<8x128xi32>
    %c1_i32_2 = arith.constant 1 : i32
    %15 = vector.broadcast %c1_i32_2 : i32 to vector<8x128xi32>
    %16 = arith.andi %14, %15 : vector<8x128xi32>
    %17 = arith.sitofp %16 : vector<8x128xi32> to vector<8x128xf32>
    %cst_3 = arith.constant 2.000000e+00 : f32
    %18 = vector.broadcast %cst_3 : f32 to vector<8x128xf32>
    %19 = arith.mulf %17, %18 : vector<8x128xf32>
    %c0_4 = arith.constant 0 : index
    %c0_5 = arith.constant 0 : index
    %c0_6 = arith.constant 0 : index
    %c0_7 = arith.constant 0 : index
    %20 = vector.load %arg16[%c0_4, %c0_5, %c0_6, %c0_7] : memref<1x3x8x128xf32, #tpu.memory_space<vmem>>, vector<1x1x8x128xf32>
    %21 = vector.shape_cast %20 : vector<1x1x8x128xf32> to vector<8x128xf32>
    %22 = vector.shape_cast %7 : vector<8x128xf32> to vector<1x1x8x128xf32>
    tpu.vector_store %arg16[%c0_4, %c0_5, %c0_6, %c0_7], %22 {strides = array<i32>} : memref<1x3x8x128xf32, #tpu.memory_space<vmem>>, vector<1x1x8x128xf32>,
    %c0_8 = arith.constant 0 : index
    %c1 = arith.constant 1 : index
    %c0_9 = arith.constant 0 : index
    %c0_10 = arith.constant 0 : index
    %23 = vector.load %arg16[%c0_8, %c1, %c0_9, %c0_10] : memref<1x3x8x128xf32, #tpu.memory_space<vmem>>, vector<1x1x8x128xf32>
    %24 = vector.shape_cast %23 : vector<1x1x8x128xf32> to vector<8x128xf32>
    %25 = vector.shape_cast %13 : vector<8x128xf32> to vector<1x1x8x128xf32>
    tpu.vector_store %arg16[%c0_8, %c1, %c0_9, %c0_10], %25 {strides = array<i32>} : memref<1x3x8x128xf32, #tpu.memory_space<vmem>>, vector<1x1x8x128xf32>,
    %c0_11 = arith.constant 0 : index
    %c2 = arith.constant 2 : index
    %c0_12 = arith.constant 0 : index
    %c0_13 = arith.constant 0 : index
    %26 = vector.load %arg16[%c0_11, %c2, %c0_12, %c0_13] : memref<1x3x8x128xf32, #tpu.memory_space<vmem>>, vector<1x1x8x128xf32>
    %27 = vector.shape_cast %26 : vector<1x1x8x128xf32> to vector<8x128xf32>
    %28 = vector.shape_cast %19 : vector<8x128xf32> to vector<1x1x8x128xf32>
    tpu.vector_store %arg16[%c0_11, %c2, %c0_12, %c0_13], %28 {strides = array<i32>} : memref<1x3x8x128xf32, #tpu.memory_space<vmem>>, vector<1x1x8x128xf32>,
    %c0_14 = arith.constant 0 : index
    %c0_15 = arith.constant 0 : index
    %29 = vector.load %arg3[%c0_14, %c0_15] : memref<8x8xf32, #tpu.memory_space<vmem>>, vector<8x8xf32>
    %c0_16 = arith.constant 0 : index
    %c0_17 = arith.constant 0 : index
    %c0_18 = arith.constant 0 : index
    %30 = vector.load %arg2[%c0_16, %c0_17, %c0_18] : memref<1x8x128xf32, #tpu.memory_space<vmem>>, vector<1x8x128xf32>
    %31 = vector.shape_cast %30 : vector<1x8x128xf32> to vector<8x128xf32>
    %c0_19 = arith.constant 0 : index
    %c0_20 = arith.constant 0 : index
    %32 = vector.load %arg5[%c0_19, %c0_20] : memref<1x128xf32, #tpu.memory_space<vmem>>, vector<1x128xf32>
    %33 = vector.broadcast %32 : vector<1x128xf32> to vector<8x128xf32>
    %34 = arith.mulf %31, %33 : vector<8x128xf32>
    %cst_21 = arith.constant dense<0.000000e+00> : vector<8x128xf32>
    %35 = tpu.matmul %29, %34, %cst_21 {dimension_numbers = #tpu.dot_dimension_numbers<[1], [0], [0], [1], [0, 0, 1, 1], [], []>} : vector<8x8xf32>, vector<8x128xf32>, vector<8x128xf32> -> vector<8x128xf32>
    %c0_22 = arith.constant 0 : index
    %c0_23 = arith.constant 0 : index
    %36 = vector.load %arg6[%c0_22, %c0_23] : memref<1x128xf32, #tpu.memory_space<vmem>>, vector<1x128xf32>
    %37 = vector.broadcast %36 : vector<1x128xf32> to vector<8x128xf32>
    %38 = arith.addf %35, %37 : vector<8x128xf32>
    %cst_24 = arith.constant 0.000000e+00 : f32
    %39 = vector.broadcast %cst_24 : f32 to vector<8x128xf32>
    %40 = arith.maximumf %38, %39 : vector<8x128xf32>
    %41 = arith.mulf %40, %7 : vector<8x128xf32>
    %c0_25 = arith.constant 0 : index
    %c0_26 = arith.constant 0 : index
    %42 = vector.load %arg7[%c0_25, %c0_26] : memref<128x128xf32, #tpu.memory_space<vmem>>, vector<128x128xf32>
    %cst_27 = arith.constant dense<0.000000e+00> : vector<8x128xf32>
    %43 = tpu.matmul %41, %42, %cst_27 {dimension_numbers = #tpu.dot_dimension_numbers<[1], [0], [0], [1], [0, 0, 1, 1], [], []>} : vector<8x128xf32>, vector<128x128xf32>, vector<8x128xf32> -> vector<8x128xf32>
    %cst_28 = arith.constant dense<0.000000e+00> : vector<8x128xf32>
    %44 = tpu.matmul %29, %43, %cst_28 {dimension_numbers = #tpu.dot_dimension_numbers<[1], [0], [0], [1], [0, 0, 1, 1], [], []>} : vector<8x8xf32>, vector<8x128xf32>, vector<8x128xf32> -> vector<8x128xf32>
    %c0_29 = arith.constant 0 : index
    %c0_30 = arith.constant 0 : index
    %45 = vector.load %arg8[%c0_29, %c0_30] : memref<1x128xf32, #tpu.memory_space<vmem>>, vector<1x128xf32>
    %46 = vector.broadcast %45 : vector<1x128xf32> to vector<8x128xf32>
    %47 = arith.addf %44, %46 : vector<8x128xf32>
    %cst_31 = arith.constant 0.000000e+00 : f32
    %48 = vector.broadcast %cst_31 : f32 to vector<8x128xf32>
    %49 = arith.maximumf %47, %48 : vector<8x128xf32>
    %50 = arith.mulf %49, %13 : vector<8x128xf32>
    %c0_32 = arith.constant 0 : index
    %c0_33 = arith.constant 0 : index
    %51 = vector.load %arg9[%c0_32, %c0_33] : memref<128x128xf32, #tpu.memory_space<vmem>>, vector<128x128xf32>
    %cst_34 = arith.constant dense<0.000000e+00> : vector<8x128xf32>
    %52 = tpu.matmul %50, %51, %cst_34 {dimension_numbers = #tpu.dot_dimension_numbers<[1], [0], [0], [1], [0, 0, 1, 1], [], []>} : vector<8x128xf32>, vector<128x128xf32>, vector<8x128xf32> -> vector<8x128xf32>
    %cst_35 = arith.constant dense<0.000000e+00> : vector<8x128xf32>
    %53 = tpu.matmul %29, %52, %cst_35 {dimension_numbers = #tpu.dot_dimension_numbers<[1], [0], [0], [1], [0, 0, 1, 1], [], []>} : vector<8x8xf32>, vector<8x128xf32>, vector<8x128xf32> -> vector<8x128xf32>
    %c0_36 = arith.constant 0 : index
    %c0_37 = arith.constant 0 : index
    %54 = vector.load %arg10[%c0_36, %c0_37] : memref<1x128xf32, #tpu.memory_space<vmem>>, vector<1x128xf32>
    %55 = vector.broadcast %54 : vector<1x128xf32> to vector<8x128xf32>
    %56 = arith.addf %53, %55 : vector<8x128xf32>
    %cst_38 = arith.constant 0.000000e+00 : f32
    %57 = vector.broadcast %cst_38 : f32 to vector<8x128xf32>
    %58 = arith.maximumf %56, %57 : vector<8x128xf32>
    %59 = arith.mulf %58, %19 : vector<8x128xf32>
    %c0_39 = arith.constant 0 : index
    %c0_40 = arith.constant 0 : index
    %60 = vector.load %arg11[%c0_39, %c0_40] : memref<128x256xf32, #tpu.memory_space<vmem>>, vector<128x256xf32>
    %cst_41 = arith.constant dense<0.000000e+00> : vector<8x256xf32>
    %61 = tpu.matmul %59, %60, %cst_41 {dimension_numbers = #tpu.dot_dimension_numbers<[1], [0], [0], [1], [0, 0, 1, 1], [], []>} : vector<8x128xf32>, vector<128x256xf32>, vector<8x256xf32> -> vector<8x256xf32>
    %c0_42 = arith.constant 0 : index
    %c0_43 = arith.constant 0 : index
    %62 = vector.load %arg12[%c0_42, %c0_43] : memref<8x256xf32, #tpu.memory_space<vmem>>, vector<8x256xf32>
    %63 = arith.mulf %61, %62 : vector<8x256xf32>
    %c0_44 = arith.constant 0 : index
    %c0_45 = arith.constant 0 : index
    %64 = vector.load %arg13[%c0_44, %c0_45] : memref<256x32xf32, #tpu.memory_space<vmem>>, vector<256x32xf32>
    %cst_46 = arith.constant dense<0.000000e+00> : vector<8x32xf32>
    %65 = tpu.matmul %63, %64, %cst_46 {dimension_numbers = #tpu.dot_dimension_numbers<[1], [0], [0], [1], [0, 0, 1, 1], [], []>} : vector<8x256xf32>, vector<256x32xf32>, vector<8x32xf32> -> vector<8x32xf32>
    %c0_47 = arith.constant 0 : index
    %c0_48 = arith.constant 0 : index
    %66 = vector.load %arg14[%c0_47, %c0_48] : memref<8x32xf32, #tpu.memory_space<vmem>>, vector<8x32xf32>
    %67 = arith.addf %65, %66 : vector<8x32xf32>
    %c0_49 = arith.constant 0 : index
    %c0_50 = arith.constant 0 : index
    %c0_51 = arith.constant 0 : index
    %68 = vector.load %arg15[%c0_49, %c0_50, %c0_51] : memref<1x8x32xf32, #tpu.memory_space<vmem>>, vector<1x8x32xf32>
    %69 = vector.shape_cast %68 : vector<1x8x32xf32> to vector<8x32xf32>
    %70 = vector.shape_cast %67 : vector<8x32xf32> to vector<1x8x32xf32>
    tpu.vector_store %arg15[%c0_49, %c0_50, %c0_51], %70 {strides = array<i32>} : memref<1x8x32xf32, #tpu.memory_space<vmem>>, vector<1x8x32xf32>,
    return
  }
  func.func @transform_0(%arg0: i32, %arg1: memref<1xi32, #tpu.memory_space<smem>>) -> (i32, i32, i32) {
    %c0_i32 = arith.constant 0 : i32
    %c0_i32_0 = arith.constant 0 : i32
    %c0_i32_1 = arith.constant 0 : i32
    return %arg0, %c0_i32, %c0_i32_0 : i32, i32, i32
  }
  func.func @transform_1(%arg0: i32, %arg1: memref<1xi32, #tpu.memory_space<smem>>) -> (i32, i32) {
    %c0_i32 = arith.constant 0 : i32
    %c0_i32_0 = arith.constant 0 : i32
    %c0_i32_1 = arith.constant 0 : i32
    return %c0_i32, %c0_i32_0 : i32, i32
  }
  func.func @transform_2(%arg0: i32, %arg1: memref<1xi32, #tpu.memory_space<smem>>) -> (i32, i32, i32, i32) {
    %c0_i32 = arith.constant 0 : i32
    %c0_i32_0 = arith.constant 0 : i32
    %c0_i32_1 = arith.constant 0 : i32
    %c0_i32_2 = arith.constant 0 : i32
    return %arg0, %c0_i32, %c0_i32_0, %c0_i32_1 : i32, i32, i32, i32
  }
  func.func @transform_3(%arg0: i32, %arg1: memref<1xi32, #tpu.memory_space<smem>>) -> (i32, i32) {
    %c0_i32 = arith.constant 0 : i32
    %c0_i32_0 = arith.constant 0 : i32
    %c0_i32_1 = arith.constant 0 : i32
    return %c0_i32, %c0_i32_0 : i32, i32
  }
  func.func @transform_4(%arg0: i32, %arg1: memref<1xi32, #tpu.memory_space<smem>>) -> (i32, i32) {
    %c0_i32 = arith.constant 0 : i32
    %c0_i32_0 = arith.constant 0 : i32
    %c0_i32_1 = arith.constant 0 : i32
    return %c0_i32, %c0_i32_0 : i32, i32
  }
  func.func @transform_5(%arg0: i32, %arg1: memref<1xi32, #tpu.memory_space<smem>>) -> (i32, i32) {
    %c0_i32 = arith.constant 0 : i32
    %c0_i32_0 = arith.constant 0 : i32
    %c0_i32_1 = arith.constant 0 : i32
    return %c0_i32, %c0_i32_0 : i32, i32
  }
  func.func @transform_6(%arg0: i32, %arg1: memref<1xi32, #tpu.memory_space<smem>>) -> (i32, i32) {
    %c0_i32 = arith.constant 0 : i32
    %c0_i32_0 = arith.constant 0 : i32
    %c0_i32_1 = arith.constant 0 : i32
    return %c0_i32, %c0_i32_0 : i32, i32
  }
  func.func @transform_7(%arg0: i32, %arg1: memref<1xi32, #tpu.memory_space<smem>>) -> (i32, i32) {
    %c0_i32 = arith.constant 0 : i32
    %c0_i32_0 = arith.constant 0 : i32
    %c0_i32_1 = arith.constant 0 : i32
    return %c0_i32, %c0_i32_0 : i32, i32
  }
  func.func @transform_8(%arg0: i32, %arg1: memref<1xi32, #tpu.memory_space<smem>>) -> (i32, i32) {
    %c0_i32 = arith.constant 0 : i32
    %c0_i32_0 = arith.constant 0 : i32
    %c0_i32_1 = arith.constant 0 : i32
    return %c0_i32, %c0_i32_0 : i32, i32
  }
  func.func @transform_9(%arg0: i32, %arg1: memref<1xi32, #tpu.memory_space<smem>>) -> (i32, i32) {
    %c0_i32 = arith.constant 0 : i32
    %c0_i32_0 = arith.constant 0 : i32
    %c0_i32_1 = arith.constant 0 : i32
    return %c0_i32, %c0_i32_0 : i32, i32
  }
  func.func @transform_10(%arg0: i32, %arg1: memref<1xi32, #tpu.memory_space<smem>>) -> (i32, i32) {
    %c0_i32 = arith.constant 0 : i32
    %c0_i32_0 = arith.constant 0 : i32
    %c0_i32_1 = arith.constant 0 : i32
    return %c0_i32, %c0_i32_0 : i32, i32
  }
  func.func @transform_11(%arg0: i32, %arg1: memref<1xi32, #tpu.memory_space<smem>>) -> (i32, i32) {
    %c0_i32 = arith.constant 0 : i32
    %c0_i32_0 = arith.constant 0 : i32
    %c0_i32_1 = arith.constant 0 : i32
    return %c0_i32, %c0_i32_0 : i32, i32
  }
  func.func @transform_12(%arg0: i32, %arg1: memref<1xi32, #tpu.memory_space<smem>>) -> (i32, i32) {
    %c0_i32 = arith.constant 0 : i32
    %c0_i32_0 = arith.constant 0 : i32
    %c0_i32_1 = arith.constant 0 : i32
    return %c0_i32, %c0_i32_0 : i32, i32
  }
  func.func @transform_13(%arg0: i32, %arg1: memref<1xi32, #tpu.memory_space<smem>>) -> (i32, i32, i32) {
    %c0_i32 = arith.constant 0 : i32
    %c0_i32_0 = arith.constant 0 : i32
    %c0_i32_1 = arith.constant 0 : i32
    return %arg0, %c0_i32, %c0_i32_0 : i32, i32, i32
  }
  func.func @transform_14(%arg0: i32, %arg1: memref<1xi32, #tpu.memory_space<smem>>) -> (i32, i32, i32, i32) {
    %c0_i32 = arith.constant 0 : i32
    %c0_i32_0 = arith.constant 0 : i32
    %c0_i32_1 = arith.constant 0 : i32
    %c0_i32_2 = arith.constant 0 : i32
    return %arg0, %c0_i32, %c0_i32_0, %c0_i32_1 : i32, i32, i32, i32
  }
}

module attributes {stable_mosaic.version = 11 : i64} {
  func.func @kernel(%arg0: i32, %arg1: memref<1xi32, #tpu.memory_space<smem>>, %arg2: memref<1x8x128xf32, #tpu.memory_space<vmem>>, %arg3: memref<8x8xf32, #tpu.memory_space<vmem>>, %arg4: memref<1x3x8x128xf32, #tpu.memory_space<vmem>>, %arg5: memref<1x128xf32, #tpu.memory_space<vmem>>, %arg6: memref<1x128xf32, #tpu.memory_space<vmem>>, %arg7: memref<128x128xf32, #tpu.memory_space<vmem>>, %arg8: memref<1x128xf32, #tpu.memory_space<vmem>>, %arg9: memref<128x128xf32, #tpu.memory_space<vmem>>, %arg10: memref<1x128xf32, #tpu.memory_space<vmem>>, %arg11: memref<128x256xf32, #tpu.memory_space<vmem>>, %arg12: memref<8x256xf32, #tpu.memory_space<vmem>>, %arg13: memref<256x32xf32, #tpu.memory_space<vmem>>, %arg14: memref<8x32xf32, #tpu.memory_space<vmem>>, %arg15: memref<1x8x32xf32, #tpu.memory_space<vmem>>, %arg16: memref<1x3x8x128xf32, #tpu.memory_space<vmem>>) attributes {dimension_semantics = [#tpu.dimension_semantics<parallel>], iteration_bounds = array<i64: 4>, scalar_prefetch = 1 : i64, scratch_operands = 0 : i64, tpu.core_type = #tpu.core_type<tc>, window_params = [{transform_indices = @transform_0, window_bounds = array<i64: 1, 8, 128>}, {pipeline_mode = #tpu.pipeline_mode<synchronous>, transform_indices = @transform_1, window_bounds = array<i64: 8, 8>}, {transform_indices = @transform_2, window_bounds = array<i64: 1, 3, 8, 128>}, {pipeline_mode = #tpu.pipeline_mode<synchronous>, transform_indices = @transform_3, window_bounds = array<i64: 1, 128>}, {pipeline_mode = #tpu.pipeline_mode<synchronous>, transform_indices = @transform_4, window_bounds = array<i64: 1, 128>}, {pipeline_mode = #tpu.pipeline_mode<synchronous>, transform_indices = @transform_5, window_bounds = array<i64: 128, 128>}, {pipeline_mode = #tpu.pipeline_mode<synchronous>, transform_indices = @transform_6, window_bounds = array<i64: 1, 128>}, {pipeline_mode = #tpu.pipeline_mode<synchronous>, transform_indices = @transform_7, window_bounds = array<i64: 128, 128>}, {pipeline_mode = #tpu.pipeline_mode<synchronous>, transform_indices = @transform_8, window_bounds = array<i64: 1, 128>}, {pipeline_mode = #tpu.pipeline_mode<synchronous>, transform_indices = @transform_9, window_bounds = array<i64: 128, 256>}, {pipeline_mode = #tpu.pipeline_mode<synchronous>, transform_indices = @transform_10, window_bounds = array<i64: 8, 256>}, {pipeline_mode = #tpu.pipeline_mode<synchronous>, transform_indices = @transform_11, window_bounds = array<i64: 256, 32>}, {pipeline_mode = #tpu.pipeline_mode<synchronous>, transform_indices = @transform_12, window_bounds = array<i64: 8, 32>}, {transform_indices = @transform_13, window_bounds = array<i64: 1, 8, 32>}, {transform_indices = @transform_14, window_bounds = array<i64: 1, 3, 8, 128>}]} {
    %c0 = arith.constant 0 : index
    %c0_0 = arith.constant 0 : index
    %c0_1 = arith.constant 0 : index
    %c0_2 = arith.constant 0 : index
    %0 = vector.load %arg4[%c0, %c0_0, %c0_1, %c0_2] : memref<1x3x8x128xf32, #tpu.memory_space<vmem>>, vector<1x1x8x128xf32>
    %1 = vector.shape_cast %0 : vector<1x1x8x128xf32> to vector<8x128xf32>
    %c0_3 = arith.constant 0 : index
    %c1 = arith.constant 1 : index
    %c0_4 = arith.constant 0 : index
    %c0_5 = arith.constant 0 : index
    %2 = vector.load %arg4[%c0_3, %c1, %c0_4, %c0_5] : memref<1x3x8x128xf32, #tpu.memory_space<vmem>>, vector<1x1x8x128xf32>
    %3 = vector.shape_cast %2 : vector<1x1x8x128xf32> to vector<8x128xf32>
    %c0_6 = arith.constant 0 : index
    %c2 = arith.constant 2 : index
    %c0_7 = arith.constant 0 : index
    %c0_8 = arith.constant 0 : index
    %4 = vector.load %arg4[%c0_6, %c2, %c0_7, %c0_8] : memref<1x3x8x128xf32, #tpu.memory_space<vmem>>, vector<1x1x8x128xf32>
    %5 = vector.shape_cast %4 : vector<1x1x8x128xf32> to vector<8x128xf32>
    %c0_9 = arith.constant 0 : index
    %c0_10 = arith.constant 0 : index
    %c0_11 = arith.constant 0 : index
    %c0_12 = arith.constant 0 : index
    %6 = vector.load %arg16[%c0_9, %c0_10, %c0_11, %c0_12] : memref<1x3x8x128xf32, #tpu.memory_space<vmem>>, vector<1x1x8x128xf32>
    %7 = vector.shape_cast %6 : vector<1x1x8x128xf32> to vector<8x128xf32>
    %8 = vector.shape_cast %1 : vector<8x128xf32> to vector<1x1x8x128xf32>
    tpu.vector_store %arg16[%c0_9, %c0_10, %c0_11, %c0_12], %8 {strides = array<i32>} : memref<1x3x8x128xf32, #tpu.memory_space<vmem>>, vector<1x1x8x128xf32>,
    %c0_13 = arith.constant 0 : index
    %c1_14 = arith.constant 1 : index
    %c0_15 = arith.constant 0 : index
    %c0_16 = arith.constant 0 : index
    %9 = vector.load %arg16[%c0_13, %c1_14, %c0_15, %c0_16] : memref<1x3x8x128xf32, #tpu.memory_space<vmem>>, vector<1x1x8x128xf32>
    %10 = vector.shape_cast %9 : vector<1x1x8x128xf32> to vector<8x128xf32>
    %11 = vector.shape_cast %3 : vector<8x128xf32> to vector<1x1x8x128xf32>
    tpu.vector_store %arg16[%c0_13, %c1_14, %c0_15, %c0_16], %11 {strides = array<i32>} : memref<1x3x8x128xf32, #tpu.memory_space<vmem>>, vector<1x1x8x128xf32>,
    %c0_17 = arith.constant 0 : index
    %c2_18 = arith.constant 2 : index
    %c0_19 = arith.constant 0 : index
    %c0_20 = arith.constant 0 : index
    %12 = vector.load %arg16[%c0_17, %c2_18, %c0_19, %c0_20] : memref<1x3x8x128xf32, #tpu.memory_space<vmem>>, vector<1x1x8x128xf32>
    %13 = vector.shape_cast %12 : vector<1x1x8x128xf32> to vector<8x128xf32>
    %14 = vector.shape_cast %5 : vector<8x128xf32> to vector<1x1x8x128xf32>
    tpu.vector_store %arg16[%c0_17, %c2_18, %c0_19, %c0_20], %14 {strides = array<i32>} : memref<1x3x8x128xf32, #tpu.memory_space<vmem>>, vector<1x1x8x128xf32>,
    %c0_21 = arith.constant 0 : index
    %c0_22 = arith.constant 0 : index
    %15 = vector.load %arg3[%c0_21, %c0_22] : memref<8x8xf32, #tpu.memory_space<vmem>>, vector<8x8xf32>
    %c0_23 = arith.constant 0 : index
    %c0_24 = arith.constant 0 : index
    %c0_25 = arith.constant 0 : index
    %16 = vector.load %arg2[%c0_23, %c0_24, %c0_25] : memref<1x8x128xf32, #tpu.memory_space<vmem>>, vector<1x8x128xf32>
    %17 = vector.shape_cast %16 : vector<1x8x128xf32> to vector<8x128xf32>
    %c0_26 = arith.constant 0 : index
    %c0_27 = arith.constant 0 : index
    %18 = vector.load %arg5[%c0_26, %c0_27] : memref<1x128xf32, #tpu.memory_space<vmem>>, vector<1x128xf32>
    %19 = vector.broadcast %18 : vector<1x128xf32> to vector<8x128xf32>
    %20 = arith.mulf %17, %19 : vector<8x128xf32>
    %cst = arith.constant dense<0.000000e+00> : vector<8x128xf32>
    %21 = tpu.matmul %15, %20, %cst {dimension_numbers = #tpu.dot_dimension_numbers<[1], [0], [0], [1], [0, 0, 1, 1], [], []>} : vector<8x8xf32>, vector<8x128xf32>, vector<8x128xf32> -> vector<8x128xf32>
    %c0_28 = arith.constant 0 : index
    %c0_29 = arith.constant 0 : index
    %22 = vector.load %arg6[%c0_28, %c0_29] : memref<1x128xf32, #tpu.memory_space<vmem>>, vector<1x128xf32>
    %23 = vector.broadcast %22 : vector<1x128xf32> to vector<8x128xf32>
    %24 = arith.addf %21, %23 : vector<8x128xf32>
    %cst_30 = arith.constant 0.000000e+00 : f32
    %25 = vector.broadcast %cst_30 : f32 to vector<8x128xf32>
    %26 = arith.maximumf %24, %25 : vector<8x128xf32>
    %27 = arith.mulf %26, %1 : vector<8x128xf32>
    %c0_31 = arith.constant 0 : index
    %c0_32 = arith.constant 0 : index
    %28 = vector.load %arg7[%c0_31, %c0_32] : memref<128x128xf32, #tpu.memory_space<vmem>>, vector<128x128xf32>
    %cst_33 = arith.constant dense<0.000000e+00> : vector<8x128xf32>
    %29 = tpu.matmul %27, %28, %cst_33 {dimension_numbers = #tpu.dot_dimension_numbers<[1], [0], [0], [1], [0, 0, 1, 1], [], []>} : vector<8x128xf32>, vector<128x128xf32>, vector<8x128xf32> -> vector<8x128xf32>
    %cst_34 = arith.constant dense<0.000000e+00> : vector<8x128xf32>
    %30 = tpu.matmul %15, %29, %cst_34 {dimension_numbers = #tpu.dot_dimension_numbers<[1], [0], [0], [1], [0, 0, 1, 1], [], []>} : vector<8x8xf32>, vector<8x128xf32>, vector<8x128xf32> -> vector<8x128xf32>
    %c0_35 = arith.constant 0 : index
    %c0_36 = arith.constant 0 : index
    %31 = vector.load %arg8[%c0_35, %c0_36] : memref<1x128xf32, #tpu.memory_space<vmem>>, vector<1x128xf32>
    %32 = vector.broadcast %31 : vector<1x128xf32> to vector<8x128xf32>
    %33 = arith.addf %30, %32 : vector<8x128xf32>
    %cst_37 = arith.constant 0.000000e+00 : f32
    %34 = vector.broadcast %cst_37 : f32 to vector<8x128xf32>
    %35 = arith.maximumf %33, %34 : vector<8x128xf32>
    %36 = arith.mulf %35, %3 : vector<8x128xf32>
    %c0_38 = arith.constant 0 : index
    %c0_39 = arith.constant 0 : index
    %37 = vector.load %arg9[%c0_38, %c0_39] : memref<128x128xf32, #tpu.memory_space<vmem>>, vector<128x128xf32>
    %cst_40 = arith.constant dense<0.000000e+00> : vector<8x128xf32>
    %38 = tpu.matmul %36, %37, %cst_40 {dimension_numbers = #tpu.dot_dimension_numbers<[1], [0], [0], [1], [0, 0, 1, 1], [], []>} : vector<8x128xf32>, vector<128x128xf32>, vector<8x128xf32> -> vector<8x128xf32>
    %cst_41 = arith.constant dense<0.000000e+00> : vector<8x128xf32>
    %39 = tpu.matmul %15, %38, %cst_41 {dimension_numbers = #tpu.dot_dimension_numbers<[1], [0], [0], [1], [0, 0, 1, 1], [], []>} : vector<8x8xf32>, vector<8x128xf32>, vector<8x128xf32> -> vector<8x128xf32>
    %c0_42 = arith.constant 0 : index
    %c0_43 = arith.constant 0 : index
    %40 = vector.load %arg10[%c0_42, %c0_43] : memref<1x128xf32, #tpu.memory_space<vmem>>, vector<1x128xf32>
    %41 = vector.broadcast %40 : vector<1x128xf32> to vector<8x128xf32>
    %42 = arith.addf %39, %41 : vector<8x128xf32>
    %cst_44 = arith.constant 0.000000e+00 : f32
    %43 = vector.broadcast %cst_44 : f32 to vector<8x128xf32>
    %44 = arith.maximumf %42, %43 : vector<8x128xf32>
    %45 = arith.mulf %44, %5 : vector<8x128xf32>
    %c0_45 = arith.constant 0 : index
    %c0_46 = arith.constant 0 : index
    %46 = vector.load %arg11[%c0_45, %c0_46] : memref<128x256xf32, #tpu.memory_space<vmem>>, vector<128x256xf32>
    %cst_47 = arith.constant dense<0.000000e+00> : vector<8x256xf32>
    %47 = tpu.matmul %45, %46, %cst_47 {dimension_numbers = #tpu.dot_dimension_numbers<[1], [0], [0], [1], [0, 0, 1, 1], [], []>} : vector<8x128xf32>, vector<128x256xf32>, vector<8x256xf32> -> vector<8x256xf32>
    %c0_48 = arith.constant 0 : index
    %c0_49 = arith.constant 0 : index
    %48 = vector.load %arg12[%c0_48, %c0_49] : memref<8x256xf32, #tpu.memory_space<vmem>>, vector<8x256xf32>
    %49 = arith.mulf %47, %48 : vector<8x256xf32>
    %c0_50 = arith.constant 0 : index
    %c0_51 = arith.constant 0 : index
    %50 = vector.load %arg13[%c0_50, %c0_51] : memref<256x32xf32, #tpu.memory_space<vmem>>, vector<256x32xf32>
    %cst_52 = arith.constant dense<0.000000e+00> : vector<8x32xf32>
    %51 = tpu.matmul %49, %50, %cst_52 {dimension_numbers = #tpu.dot_dimension_numbers<[1], [0], [0], [1], [0, 0, 1, 1], [], []>} : vector<8x256xf32>, vector<256x32xf32>, vector<8x32xf32> -> vector<8x32xf32>
    %c0_53 = arith.constant 0 : index
    %c0_54 = arith.constant 0 : index
    %52 = vector.load %arg14[%c0_53, %c0_54] : memref<8x32xf32, #tpu.memory_space<vmem>>, vector<8x32xf32>
    %53 = arith.addf %51, %52 : vector<8x32xf32>
    %c0_55 = arith.constant 0 : index
    %c0_56 = arith.constant 0 : index
    %c0_57 = arith.constant 0 : index
    %54 = vector.load %arg15[%c0_55, %c0_56, %c0_57] : memref<1x8x32xf32, #tpu.memory_space<vmem>>, vector<1x8x32xf32>
    %55 = vector.shape_cast %54 : vector<1x8x32xf32> to vector<8x32xf32>
    %56 = vector.shape_cast %53 : vector<8x32xf32> to vector<1x8x32xf32>
    tpu.vector_store %arg15[%c0_55, %c0_56, %c0_57], %56 {strides = array<i32>} : memref<1x8x32xf32, #tpu.memory_space<vmem>>, vector<1x8x32xf32>,
    return
  }
  func.func @transform_0(%arg0: i32, %arg1: memref<1xi32, #tpu.memory_space<smem>>) -> (i32, i32, i32) {
    %c0_i32 = arith.constant 0 : i32
    %c0_i32_0 = arith.constant 0 : i32
    %c0_i32_1 = arith.constant 0 : i32
    return %arg0, %c0_i32, %c0_i32_0 : i32, i32, i32
  }
  func.func @transform_1(%arg0: i32, %arg1: memref<1xi32, #tpu.memory_space<smem>>) -> (i32, i32) {
    %c0_i32 = arith.constant 0 : i32
    %c0_i32_0 = arith.constant 0 : i32
    %c0_i32_1 = arith.constant 0 : i32
    return %c0_i32, %c0_i32_0 : i32, i32
  }
  func.func @transform_2(%arg0: i32, %arg1: memref<1xi32, #tpu.memory_space<smem>>) -> (i32, i32, i32, i32) {
    %c0_i32 = arith.constant 0 : i32
    %c0_i32_0 = arith.constant 0 : i32
    %c0_i32_1 = arith.constant 0 : i32
    %c0_i32_2 = arith.constant 0 : i32
    return %arg0, %c0_i32, %c0_i32_0, %c0_i32_1 : i32, i32, i32, i32
  }
  func.func @transform_3(%arg0: i32, %arg1: memref<1xi32, #tpu.memory_space<smem>>) -> (i32, i32) {
    %c0_i32 = arith.constant 0 : i32
    %c0_i32_0 = arith.constant 0 : i32
    %c0_i32_1 = arith.constant 0 : i32
    return %c0_i32, %c0_i32_0 : i32, i32
  }
  func.func @transform_4(%arg0: i32, %arg1: memref<1xi32, #tpu.memory_space<smem>>) -> (i32, i32) {
    %c0_i32 = arith.constant 0 : i32
    %c0_i32_0 = arith.constant 0 : i32
    %c0_i32_1 = arith.constant 0 : i32
    return %c0_i32, %c0_i32_0 : i32, i32
  }
  func.func @transform_5(%arg0: i32, %arg1: memref<1xi32, #tpu.memory_space<smem>>) -> (i32, i32) {
    %c0_i32 = arith.constant 0 : i32
    %c0_i32_0 = arith.constant 0 : i32
    %c0_i32_1 = arith.constant 0 : i32
    return %c0_i32, %c0_i32_0 : i32, i32
  }
  func.func @transform_6(%arg0: i32, %arg1: memref<1xi32, #tpu.memory_space<smem>>) -> (i32, i32) {
    %c0_i32 = arith.constant 0 : i32
    %c0_i32_0 = arith.constant 0 : i32
    %c0_i32_1 = arith.constant 0 : i32
    return %c0_i32, %c0_i32_0 : i32, i32
  }
  func.func @transform_7(%arg0: i32, %arg1: memref<1xi32, #tpu.memory_space<smem>>) -> (i32, i32) {
    %c0_i32 = arith.constant 0 : i32
    %c0_i32_0 = arith.constant 0 : i32
    %c0_i32_1 = arith.constant 0 : i32
    return %c0_i32, %c0_i32_0 : i32, i32
  }
  func.func @transform_8(%arg0: i32, %arg1: memref<1xi32, #tpu.memory_space<smem>>) -> (i32, i32) {
    %c0_i32 = arith.constant 0 : i32
    %c0_i32_0 = arith.constant 0 : i32
    %c0_i32_1 = arith.constant 0 : i32
    return %c0_i32, %c0_i32_0 : i32, i32
  }
  func.func @transform_9(%arg0: i32, %arg1: memref<1xi32, #tpu.memory_space<smem>>) -> (i32, i32) {
    %c0_i32 = arith.constant 0 : i32
    %c0_i32_0 = arith.constant 0 : i32
    %c0_i32_1 = arith.constant 0 : i32
    return %c0_i32, %c0_i32_0 : i32, i32
  }
  func.func @transform_10(%arg0: i32, %arg1: memref<1xi32, #tpu.memory_space<smem>>) -> (i32, i32) {
    %c0_i32 = arith.constant 0 : i32
    %c0_i32_0 = arith.constant 0 : i32
    %c0_i32_1 = arith.constant 0 : i32
    return %c0_i32, %c0_i32_0 : i32, i32
  }
  func.func @transform_11(%arg0: i32, %arg1: memref<1xi32, #tpu.memory_space<smem>>) -> (i32, i32) {
    %c0_i32 = arith.constant 0 : i32
    %c0_i32_0 = arith.constant 0 : i32
    %c0_i32_1 = arith.constant 0 : i32
    return %c0_i32, %c0_i32_0 : i32, i32
  }
  func.func @transform_12(%arg0: i32, %arg1: memref<1xi32, #tpu.memory_space<smem>>) -> (i32, i32) {
    %c0_i32 = arith.constant 0 : i32
    %c0_i32_0 = arith.constant 0 : i32
    %c0_i32_1 = arith.constant 0 : i32
    return %c0_i32, %c0_i32_0 : i32, i32
  }
  func.func @transform_13(%arg0: i32, %arg1: memref<1xi32, #tpu.memory_space<smem>>) -> (i32, i32, i32) {
    %c0_i32 = arith.constant 0 : i32
    %c0_i32_0 = arith.constant 0 : i32
    %c0_i32_1 = arith.constant 0 : i32
    return %arg0, %c0_i32, %c0_i32_0 : i32, i32, i32
  }
  func.func @transform_14(%arg0: i32, %arg1: memref<1xi32, #tpu.memory_space<smem>>) -> (i32, i32, i32, i32) {
    %c0_i32 = arith.constant 0 : i32
    %c0_i32_0 = arith.constant 0 : i32
    %c0_i32_1 = arith.constant 0 : i32
    %c0_i32_2 = arith.constant 0 : i32
    return %arg0, %c0_i32, %c0_i32_0, %c0_i32_1 : i32, i32, i32, i32
  }
}

</mosaic_0001>

<llo_original>
// kernel: dqgn_forward.1
$region0: #{dqgn_forward.1}
  #allocation0 [shape = 'u32[]', space=smem, size = 0x4, offset = 0x4, fixed_abs, tag = 'smem constant byte address 0x4 - core index']
  #allocation1 [shape = 'u32[144,128]{1,0:T(1,128)}', space=vmem, size = 0x12000, scoped, tag = 'internal scratch']
  #allocation2 [shape = 's32[1]{0}', space=sflag, size = 0x4, scoped, tag = 'scoped memory for dqgn_forward.1']
  #allocation3 [shape = 's32[1]{0:T(128)S(6)}', space=smem, size = 0x200, scoped, tag = 'prefetched SMEM operand 0']
  %s0 = inlined_call_operand.<no memory space> [shape: s32[1], index: 0, kind: input, shape index: {}]
  %s1 = inlined_call_operand.vmem [shape: f32[4,8,128], index: 1, kind: input, shape index: {}]
  %s2 = inlined_call_operand.vmem [shape: f32[8,8], index: 2, kind: input, shape index: {}]
  %s3 = inlined_call_operand.vmem [shape: f32[4,3,8,128], index: 3, kind: input, shape index: {}]
  %s4 = inlined_call_operand.vmem [shape: f32[1,128], index: 4, kind: input, shape index: {}]
  %s5 = inlined_call_operand.vmem [shape: f32[1,128], index: 5, kind: input, shape index: {}]
  %s6 = inlined_call_operand.vmem [shape: f32[128,128], index: 6, kind: input, shape index: {}]
  %s7 = inlined_call_operand.vmem [shape: f32[1,128], index: 7, kind: input, shape index: {}]
  %s8 = inlined_call_operand.vmem [shape: f32[128,128], index: 8, kind: input, shape index: {}]
  %s9 = inlined_call_operand.vmem [shape: f32[1,128], index: 9, kind: input, shape index: {}]
  %s10 = inlined_call_operand.vmem [shape: f32[128,256], index: 10, kind: input, shape index: {}]
  %s11 = inlined_call_operand.vmem [shape: f32[8,256], index: 11, kind: input, shape index: {}]
  %s12 = inlined_call_operand.vmem [shape: f32[256,32], index: 12, kind: input, shape index: {}]
  %s13 = inlined_call_operand.vmem [shape: f32[8,32], index: 13, kind: input, shape index: {}]
  %s14 = inlined_call_operand.vmem [shape: f32[4,8,32], index: 14, kind: output, shape index: {0}]
  %s15 = inlined_call_operand.vmem [shape: f32[4,3,8,128], index: 15, kind: output, shape index: {1}]
  %16 = xla_tuple %s14, %s15
  %s17 = sld [smem:[#allocation0]]
  $region93: #{dqgn_forward.1} parent=0
    _
  %s19 = ssub.s32 1, %s17
  %s20 = scalar_select 0, %s19, %s17
  %21 = sst [smem:[#allocation3]] %s0
  loop: start=0, step=1, limit=6
  $region2: #{dqgn_forward.1} parent=0 // loop_pre_header
    _
  $region3: #{dqgn_forward.1} parent=0 // loop_header
    %s23 = sphi 0, %s27
    %p24 = scmp.ge.s32.totalorder %s23, 6
    %s33 = sphi 0, %s35
    %s36 = sphi 0, %s33
    %s37 = sphi 0, %s36
    %s53 = sphi 0, %s37
    %s57 = sphi 0, %s57
    %s59 = sphi 0, %s57
    %s60 = sphi 0, %s59
    %s74 = sphi 0, %s60
    %s80 = sphi 0, %s82
    %s83 = sphi 0, %s80
    %s84 = sphi 0, %s83
    %s100 = sphi 0, %s84
    %s104 = sphi 0, %s104
    %s106 = sphi 0, %s104
    %s107 = sphi 0, %s106
    %s121 = sphi 0, %s107
    %s125 = sphi 0, %s125
    %s127 = sphi 0, %s125
    %s128 = sphi 0, %s127
    %s142 = sphi 0, %s128
    %s146 = sphi 0, %s146
    %s148 = sphi 0, %s146
    %s149 = sphi 0, %s148
    %s163 = sphi 0, %s149
    %s167 = sphi 0, %s167
    %s169 = sphi 0, %s167
    %s170 = sphi 0, %s169
    %s184 = sphi 0, %s170
    %s188 = sphi 0, %s188
    %s190 = sphi 0, %s188
    %s191 = sphi 0, %s190
    %s205 = sphi 0, %s191
    %s209 = sphi 0, %s209
    %s211 = sphi 0, %s209
    %s212 = sphi 0, %s211
    %s226 = sphi 0, %s212
    %s230 = sphi 0, %s230
    %s232 = sphi 0, %s230
    %s233 = sphi 0, %s232
    %s247 = sphi 0, %s233
    %s251 = sphi 0, %s251
    %s253 = sphi 0, %s251
    %s254 = sphi 0, %s253
    %s268 = sphi 0, %s254
    %s272 = sphi 0, %s272
    %s274 = sphi 0, %s272
    %s275 = sphi 0, %s274
    %s289 = sphi 0, %s275
    %s293 = sphi 0, %s293
    %s295 = sphi 0, %s293
    %s296 = sphi 0, %s295
    %s310 = sphi 0, %s296
    %s316 = sphi 0, %s318
    %s319 = sphi 0, %s316
    %s320 = sphi 0, %s319
    %s336 = sphi 0, %s320
    %s342 = sphi 0, %s344
    %s345 = sphi 0, %s342
    %s346 = sphi 0, %s345
    %s362 = sphi 0, %s346
  $region4: #{dqgn_forward.1} parent=0 // loop_header_branch
    %26 = sbr.rel (%p24) target = $region8
  $region5: #{dqgn_forward.1} parent=0 // loop_body
    %s28 = ssub.s32 %s23, 1
    %s29 = ssub.s32 %s23, 2
    %s30 = sadd.s32 %s23, 1
    %s31 = ssub.s32 %s23, %s30
    %p32 = scmp.eq.s32.totalorder %s31, 0
    %s34 = sadd.s32 %s33, 1
    %s35 = scalar_select %p32, %s33, %s34
    %p38 = pneg %p32
    %p39 = scmp.eq.s32.totalorder %s23, 3
    %p40 = por %p38, %p39
    %p41 = scmp.ne.s32.totalorder %s33, %s36
    %p42 = scmp.eq.s32.totalorder %s23, 0
    %p43 = por %p41, %p42
    %p44 = scmp.ne.s32.totalorder %s33, %s36
    %p45 = scmp.eq.s32.totalorder %s28, 3
    %p46 = por %p44, %p45
    %p47 = scmp.ne.s32.totalorder %s36, %s37
    %p48 = scmp.eq.s32.totalorder %s28, 0
    %p49 = por %p47, %p48
    %p50 = scmp.ne.s32.totalorder %s36, %s37
    %p51 = scmp.eq.s32.totalorder %s29, 3
    %p52 = por %p50, %p51
    %p54 = scmp.ne.s32.totalorder %s37, %s53
    %p55 = scmp.eq.s32.totalorder %s29, 0
    %p56 = por %p54, %p55
    %s58 = sadd.s32 %s57, 1
    %p61 = scmp.eq.s32.totalorder %s23, 3
    %p62 = scmp.ne.s32.totalorder %s57, %s59
    %p63 = scmp.eq.s32.totalorder %s23, 0
    %p64 = por %p62, %p63
    %p65 = scmp.ne.s32.totalorder %s57, %s59
    %p66 = scmp.eq.s32.totalorder %s28, 3
    %p67 = por %p65, %p66
    %p68 = scmp.ne.s32.totalorder %s59, %s60
    %p69 = scmp.eq.s32.totalorder %s28, 0
    %p70 = por %p68, %p69
    %p71 = scmp.ne.s32.totalorder %s59, %s60
    %p72 = scmp.eq.s32.totalorder %s29, 3
    %p73 = por %p71, %p72
    %p75 = scmp.ne.s32.totalorder %s60, %s74
    %p76 = scmp.eq.s32.totalorder %s29, 0
    %p77 = por %p75, %p76
    %s78 = ssub.s32 %s23, %s30
    %p79 = scmp.eq.s32.totalorder %s78, 0
    %s81 = sadd.s32 %s80, 1
    %s82 = scalar_select %p79, %s80, %s81
    %p85 = pneg %p79
    %p86 = scmp.eq.s32.totalorder %s23, 3
    %p87 = por %p85, %p86
    %p88 = scmp.ne.s32.totalorder %s80, %s83
    %p89 = scmp.eq.s32.totalorder %s23, 0
    %p90 = por %p88, %p89
    %p91 = scmp.ne.s32.totalorder %s80, %s83
    %p92 = scmp.eq.s32.totalorder %s28, 3
    %p93 = por %p91, %p92
    %p94 = scmp.ne.s32.totalorder %s83, %s84
    %p95 = scmp.eq.s32.totalorder %s28, 0
    %p96 = por %p94, %p95
    %p97 = scmp.ne.s32.totalorder %s83, %s84
    %p98 = scmp.eq.s32.totalorder %s29, 3
    %p99 = por %p97, %p98
    %p101 = scmp.ne.s32.totalorder %s84, %s100
    %p102 = scmp.eq.s32.totalorder %s29, 0
    %p103 = por %p101, %p102
    %s105 = sadd.s32 %s104, 1
    %p108 = scmp.eq.s32.totalorder %s23, 3
    %p109 = scmp.ne.s32.totalorder %s104, %s106
    %p110 = scmp.eq.s32.totalorder %s23, 0
    %p111 = por %p109, %p110
    %p112 = scmp.ne.s32.totalorder %s104, %s106
    %p113 = scmp.eq.s32.totalorder %s28, 3
    %p114 = por %p112, %p113
    %p115 = scmp.ne.s32.totalorder %s106, %s107
    %p116 = scmp.eq.s32.totalorder %s28, 0
    %p117 = por %p115, %p116
    %p118 = scmp.ne.s32.totalorder %s106, %s107
    %p119 = scmp.eq.s32.totalorder %s29, 3
    %p120 = por %p118, %p119
    %p122 = scmp.ne.s32.totalorder %s107, %s121
    %p123 = scmp.eq.s32.totalorder %s29, 0
    %p124 = por %p122, %p123
    %s126 = sadd.s32 %s125, 1
    %p129 = scmp.eq.s32.totalorder %s23, 3
    %p130 = scmp.ne.s32.totalorder %s125, %s127
    %p131 = scmp.eq.s32.totalorder %s23, 0
    %p132 = por %p130, %p131
    %p133 = scmp.ne.s32.totalorder %s125, %s127
    %p134 = scmp.eq.s32.totalorder %s28, 3
    %p135 = por %p133, %p134
    %p136 = scmp.ne.s32.totalorder %s127, %s128
    %p137 = scmp.eq.s32.totalorder %s28, 0
    %p138 = por %p136, %p137
    %p139 = scmp.ne.s32.totalorder %s127, %s128
    %p140 = scmp.eq.s32.totalorder %s29, 3
    %p141 = por %p139, %p140
    %p143 = scmp.ne.s32.totalorder %s128, %s142
    %p144 = scmp.eq.s32.totalorder %s29, 0
    %p145 = por %p143, %p144
    %s147 = sadd.s32 %s146, 1
    %p150 = scmp.eq.s32.totalorder %s23, 3
    %p151 = scmp.ne.s32.totalorder %s146, %s148
    %p152 = scmp.eq.s32.totalorder %s23, 0
    %p153 = por %p151, %p152
    %p154 = scmp.ne.s32.totalorder %s146, %s148
    %p155 = scmp.eq.s32.totalorder %s28, 3
    %p156 = por %p154, %p155
    %p157 = scmp.ne.s32.totalorder %s148, %s149
    %p158 = scmp.eq.s32.totalorder %s28, 0
    %p159 = por %p157, %p158
    %p160 = scmp.ne.s32.totalorder %s148, %s149
    %p161 = scmp.eq.s32.totalorder %s29, 3
    %p162 = por %p160, %p161
    %p164 = scmp.ne.s32.totalorder %s149, %s163
    %p165 = scmp.eq.s32.totalorder %s29, 0
    %p166 = por %p164, %p165
    %s168 = sadd.s32 %s167, 1
    %p171 = scmp.eq.s32.totalorder %s23, 3
    %p172 = scmp.ne.s32.totalorder %s167, %s169
    %p173 = scmp.eq.s32.totalorder %s23, 0
    %p174 = por %p172, %p173
    %p175 = scmp.ne.s32.totalorder %s167, %s169
    %p176 = scmp.eq.s32.totalorder %s28, 3
    %p177 = por %p175, %p176
    %p178 = scmp.ne.s32.totalorder %s169, %s170
    %p179 = scmp.eq.s32.totalorder %s28, 0
    %p180 = por %p178, %p179
    %p181 = scmp.ne.s32.totalorder %s169, %s170
    %p182 = scmp.eq.s32.totalorder %s29, 3
    %p183 = por %p181, %p182
    %p185 = scmp.ne.s32.totalorder %s170, %s184
    %p186 = scmp.eq.s32.totalorder %s29, 0
    %p187 = por %p185, %p186
    %s189 = sadd.s32 %s188, 1
    %p192 = scmp.eq.s32.totalorder %s23, 3
    %p193 = scmp.ne.s32.totalorder %s188, %s190
    %p194 = scmp.eq.s32.totalorder %s23, 0
    %p195 = por %p193, %p194
    %p196 = scmp.ne.s32.totalorder %s188, %s190
    %p197 = scmp.eq.s32.totalorder %s28, 3
    %p198 = por %p196, %p197
    %p199 = scmp.ne.s32.totalorder %s190, %s191
    %p200 = scmp.eq.s32.totalorder %s28, 0
    %p201 = por %p199, %p200
    %p202 = scmp.ne.s32.totalorder %s190, %s191
    %p203 = scmp.eq.s32.totalorder %s29, 3
    %p204 = por %p202, %p203
    %p206 = scmp.ne.s32.totalorder %s191, %s205
    %p207 = scmp.eq.s32.totalorder %s29, 0
    %p208 = por %p206, %p207
    %s210 = sadd.s32 %s209, 1
    %p213 = scmp.eq.s32.totalorder %s23, 3
    %p214 = scmp.ne.s32.totalorder %s209, %s211
    %p215 = scmp.eq.s32.totalorder %s23, 0
    %p216 = por %p214, %p215
    %p217 = scmp.ne.s32.totalorder %s209, %s211
    %p218 = scmp.eq.s32.totalorder %s28, 3
    %p219 = por %p217, %p218
    %p220 = scmp.ne.s32.totalorder %s211, %s212
    %p221 = scmp.eq.s32.totalorder %s28, 0
    %p222 = por %p220, %p221
    %p223 = scmp.ne.s32.totalorder %s211, %s212
    %p224 = scmp.eq.s32.totalorder %s29, 3
    %p225 = por %p223, %p224
    %p227 = scmp.ne.s32.totalorder %s212, %s226
    %p228 = scmp.eq.s32.totalorder %s29, 0
    %p229 = por %p227, %p228
    %s231 = sadd.s32 %s230, 1
    %p234 = scmp.eq.s32.totalorder %s23, 3
    %p235 = scmp.ne.s32.totalorder %s230, %s232
    %p236 = scmp.eq.s32.totalorder %s23, 0
    %p237 = por %p235, %p236
    %p238 = scmp.ne.s32.totalorder %s230, %s232
    %p239 = scmp.eq.s32.totalorder %s28, 3
    %p240 = por %p238, %p239
    %p241 = scmp.ne.s32.totalorder %s232, %s233
    %p242 = scmp.eq.s32.totalorder %s28, 0
    %p243 = por %p241, %p242
    %p244 = scmp.ne.s32.totalorder %s232, %s233
    %p245 = scmp.eq.s32.totalorder %s29, 3
    %p246 = por %p244, %p245
    %p248 = scmp.ne.s32.totalorder %s233, %s247
    %p249 = scmp.eq.s32.totalorder %s29, 0
    %p250 = por %p248, %p249
    %s252 = sadd.s32 %s251, 1
    %p255 = scmp.eq.s32.totalorder %s23, 3
    %p256 = scmp.ne.s32.totalorder %s251, %s253
    %p257 = scmp.eq.s32.totalorder %s23, 0
    %p258 = por %p256, %p257
    %p259 = scmp.ne.s32.totalorder %s251, %s253
    %p260 = scmp.eq.s32.totalorder %s28, 3
    %p261 = por %p259, %p260
    %p262 = scmp.ne.s32.totalorder %s253, %s254
    %p263 = scmp.eq.s32.totalorder %s28, 0
    %p264 = por %p262, %p263
    %p265 = scmp.ne.s32.totalorder %s253, %s254
    %p266 = scmp.eq.s32.totalorder %s29, 3
    %p267 = por %p265, %p266
    %p269 = scmp.ne.s32.totalorder %s254, %s268
    %p270 = scmp.eq.s32.totalorder %s29, 0
    %p271 = por %p269, %p270
    %s273 = sadd.s32 %s272, 1
    %p276 = scmp.eq.s32.totalorder %s23, 3
    %p277 = scmp.ne.s32.totalorder %s272, %s274
    %p278 = scmp.eq.s32.totalorder %s23, 0
    %p279 = por %p277, %p278
    %p280 = scmp.ne.s32.totalorder %s272, %s274
    %p281 = scmp.eq.s32.totalorder %s28, 3
    %p282 = por %p280, %p281
    %p283 = scmp.ne.s32.totalorder %s274, %s275
    %p284 = scmp.eq.s32.totalorder %s28, 0
    %p285 = por %p283, %p284
    %p286 = scmp.ne.s32.totalorder %s274, %s275
    %p287 = scmp.eq.s32.totalorder %s29, 3
    %p288 = por %p286, %p287
    %p290 = scmp.ne.s32.totalorder %s275, %s289
    %p291 = scmp.eq.s32.totalorder %s29, 0
    %p292 = por %p290, %p291
    %s294 = sadd.s32 %s293, 1
    %p297 = scmp.eq.s32.totalorder %s23, 3
    %p298 = scmp.ne.s32.totalorder %s293, %s295
    %p299 = scmp.eq.s32.totalorder %s23, 0
    %p300 = por %p298, %p299
    %p301 = scmp.ne.s32.totalorder %s293, %s295
    %p302 = scmp.eq.s32.totalorder %s28, 3
    %p303 = por %p301, %p302
    %p304 = scmp.ne.s32.totalorder %s295, %s296
    %p305 = scmp.eq.s32.totalorder %s28, 0
    %p306 = por %p304, %p305
    %p307 = scmp.ne.s32.totalorder %s295, %s296
    %p308 = scmp.eq.s32.totalorder %s29, 3
    %p309 = por %p307, %p308
    %p311 = scmp.ne.s32.totalorder %s296, %s310
    %p312 = scmp.eq.s32.totalorder %s29, 0
    %p313 = por %p311, %p312
    %s314 = ssub.s32 %s23, %s30
    %p315 = scmp.eq.s32.totalorder %s314, 0
    %s317 = sadd.s32 %s316, 1
    %s318 = scalar_select %p315, %s316, %s317
    %p321 = pneg %p315
    %p322 = scmp.eq.s32.totalorder %s23, 3
    %p323 = por %p321, %p322
    %p324 = scmp.ne.s32.totalorder %s316, %s319
    %p325 = scmp.eq.s32.totalorder %s23, 0
    %p326 = por %p324, %p325
    %p327 = scmp.ne.s32.totalorder %s316, %s319
    %p328 = scmp.eq.s32.totalorder %s28, 3
    %p329 = por %p327, %p328
    %p330 = scmp.ne.s32.totalorder %s319, %s320
    %p331 = scmp.eq.s32.totalorder %s28, 0
    %p332 = por %p330, %p331
    %p333 = scmp.ne.s32.totalorder %s319, %s320
    %p334 = scmp.eq.s32.totalorder %s29, 3
    %p335 = por %p333, %p334
    %p337 = scmp.ne.s32.totalorder %s320, %s336
    %p338 = scmp.eq.s32.totalorder %s29, 0
    %p339 = por %p337, %p338
    %s340 = ssub.s32 %s23, %s30
    %p341 = scmp.eq.s32.totalorder %s340, 0
    %s343 = sadd.s32 %s342, 1
    %s344 = scalar_select %p341, %s342, %s343
    %p347 = pneg %p341
    %p348 = scmp.eq.s32.totalorder %s23, 3
    %p349 = por %p347, %p348
    %p350 = scmp.ne.s32.totalorder %s342, %s345
    %p351 = scmp.eq.s32.totalorder %s23, 0
    %p352 = por %p350, %p351
    %p353 = scmp.ne.s32.totalorder %s342, %s345
    %p354 = scmp.eq.s32.totalorder %s28, 3
    %p355 = por %p353, %p354
    %p356 = scmp.ne.s32.totalorder %s345, %s346
    %p357 = scmp.eq.s32.totalorder %s28, 0
    %p358 = por %p356, %p357
    %p359 = scmp.ne.s32.totalorder %s345, %s346
    %p360 = scmp.eq.s32.totalorder %s29, 3
    %p361 = por %p359, %p360
    %p363 = scmp.ne.s32.totalorder %s346, %s362
    %p364 = scmp.eq.s32.totalorder %s29, 0
    %p365 = por %p363, %p364
    %p366 = scmp.le.s32.totalorder 1, %s23
    %p367 = scmp.lt.s32.totalorder %s23, 5
    %p368 = pnand %p366, %p367
    %p369 = pneg %p368
    // Predicated region
    $region9: #{dqgn_forward.1} parent=5 // pred_check
      _
    $region10: #{dqgn_forward.1} parent=5 // pred_check_branch
      %371 = sbr.rel (%p368) target = $region12
    $region11: #{dqgn_forward.1} parent=5 // pred_region
      %s372 = ssub.s32 %s23, 1
      // Predicated region
      $region13: #{dqgn_forward.1} parent=11 // pred_check
        %p373 = pneg %p70
      $region14: #{dqgn_forward.1} parent=11 // pred_check_branch
        %375 = sbr.rel (%p373) target = $region16
      $region15: #{dqgn_forward.1} parent=11 // pred_region
        _
      $region16: #{dqgn_forward.1} parent=11 // pred_fallthru
        _
      // Predicated region
      $region17: #{dqgn_forward.1} parent=11 // pred_check
        %p376 = pneg %p117
      $region18: #{dqgn_forward.1} parent=11 // pred_check_branch
        %378 = sbr.rel (%p376) target = $region20
      $region19: #{dqgn_forward.1} parent=11 // pred_region
        _
      $region20: #{dqgn_forward.1} parent=11 // pred_fallthru
        _
      // Predicated region
      $region21: #{dqgn_forward.1} parent=11 // pred_check
        %p379 = pneg %p138
      $region22: #{dqgn_forward.1} parent=11 // pred_check_branch
        %381 = sbr.rel (%p379) target = $region24
      $region23: #{dqgn_forward.1} parent=11 // pred_region
        _
      $region24: #{dqgn_forward.1} parent=11 // pred_fallthru
        _
      // Predicated region
      $region25: #{dqgn_forward.1} parent=11 // pred_check
        %p382 = pneg %p159
      $region26: #{dqgn_forward.1} parent=11 // pred_check_branch
        %384 = sbr.rel (%p382) target = $region28
      $region27: #{dqgn_forward.1} parent=11 // pred_region
        _
      $region28: #{dqgn_forward.1} parent=11 // pred_fallthru
        _
      // Predicated region
      $region29: #{dqgn_forward.1} parent=11 // pred_check
        %p385 = pneg %p180
      $region30: #{dqgn_forward.1} parent=11 // pred_check_branch
        %387 = sbr.rel (%p385) target = $region32
      $region31: #{dqgn_forward.1} parent=11 // pred_region
        _
      $region32: #{dqgn_forward.1} parent=11 // pred_fallthru
        _
      // Predicated region
      $region33: #{dqgn_forward.1} parent=11 // pred_check
        %p388 = pneg %p201
      $region34: #{dqgn_forward.1} parent=11 // pred_check_branch
        %390 = sbr.rel (%p388) target = $region36
      $region35: #{dqgn_forward.1} parent=11 // pred_region
        _
      $region36: #{dqgn_forward.1} parent=11 // pred_fallthru
        _
      // Predicated region
      $region37: #{dqgn_forward.1} parent=11 // pred_check
        %p391 = pneg %p222
      $region38: #{dqgn_forward.1} parent=11 // pred_check_branch
        %393 = sbr.rel (%p391) target = $region40
      $region39: #{dqgn_forward.1} parent=11 // pred_region
        _
      $region40: #{dqgn_forward.1} parent=11 // pred_fallthru
        _
      // Predicated region
      $region41: #{dqgn_forward.1} parent=11 // pred_check
        %p394 = pneg %p243
      $region42: #{dqgn_forward.1} parent=11 // pred_check_branch
        %396 = sbr.rel (%p394) target = $region44
      $region43: #{dqgn_forward.1} parent=11 // pred_region
        _
      $region44: #{dqgn_forward.1} parent=11 // pred_fallthru
        _
      // Predicated region
      $region45: #{dqgn_forward.1} parent=11 // pred_check
        %p397 = pneg %p264
      $region46: #{dqgn_forward.1} parent=11 // pred_check_branch
        %399 = sbr.rel (%p397) target = $region48
      $region47: #{dqgn_forward.1} parent=11 // pred_region
        _
      $region48: #{dqgn_forward.1} parent=11 // pred_fallthru
        _
      // Predicated region
      $region49: #{dqgn_forward.1} parent=11 // pred_check
        %p400 = pneg %p285
      $region50: #{dqgn_forward.1} parent=11 // pred_check_branch
        %402 = sbr.rel (%p400) target = $region52
      $region51: #{dqgn_forward.1} parent=11 // pred_region
        _
      $region52: #{dqgn_forward.1} parent=11 // pred_fallthru
        _
      // Predicated region
      $region53: #{dqgn_forward.1} parent=11 // pred_check
        %p403 = pneg %p306
      $region54: #{dqgn_forward.1} parent=11 // pred_check_branch
        %405 = sbr.rel (%p403) target = $region56
      $region55: #{dqgn_forward.1} parent=11 // pred_region
        _
      $region56: #{dqgn_forward.1} parent=11 // pred_fallthru
        _
    $region12: #{dqgn_forward.1} parent=5 // pred_fallthru
      _
    %p406 = scmp.lt.s32.totalorder %s23, 4
    // Predicated region
    $region57: #{dqgn_forward.1} parent=5 // pred_check
      %p407 = pneg %p406
    $region58: #{dqgn_forward.1} parent=5 // pred_check_branch
      %409 = sbr.rel (%p407) target = $region60
    $region59: #{dqgn_forward.1} parent=5 // pred_region
      // Predicated region
      $region61: #{dqgn_forward.1} parent=59 // pred_check
        %p410 = pneg %p43
      $region62: #{dqgn_forward.1} parent=59 // pred_check_branch
        %412 = sbr.rel (%p410) target = $region64
      $region63: #{dqgn_forward.1} parent=59 // pred_region
        %p413 = scmp.lt.s32.totalorder %s23, 3
        %s414 = scalar_select %p413, %s23, 3
        %s415 = smul.addr %s414, 8
        %s416 = scalar_lea.vmem %s1, %s415
      $region64: #{dqgn_forward.1} parent=59 // pred_fallthru
        _
      // Predicated region
      $region65: #{dqgn_forward.1} parent=59 // pred_check
        %p417 = pneg %p90
      $region66: #{dqgn_forward.1} parent=59 // pred_check_branch
        %419 = sbr.rel (%p417) target = $region68
      $region67: #{dqgn_forward.1} parent=59 // pred_region
        %p420 = scmp.lt.s32.totalorder %s23, 3
        %s421 = scalar_select %p420, %s23, 3
        %s422 = smul.addr %s421, 3
        %s423 = smul.addr %s422, 8
        %s424 = scalar_lea.vmem %s3, %s423
      $region68: #{dqgn_forward.1} parent=59 // pred_fallthru
        _
    $region60: #{dqgn_forward.1} parent=5 // pred_fallthru
      _
    %p425 = scmp.le.s32.totalorder 1, %s23
    %p426 = scmp.lt.s32.totalorder %s23, 5
    %p427 = pnand %p425, %p426
    %p428 = pneg %p427
    // Predicated region
    $region69: #{dqgn_forward.1} parent=5 // pred_check
      _
    $region70: #{dqgn_forward.1} parent=5 // pred_check_branch
      %430 = sbr.rel (%p427) target = $region72
    $region71: #{dqgn_forward.1} parent=5 // pred_region
      %s431 = ssub.s32 %s23, 1
      %p432 = scmp.lt.s32.totalorder %s28, 3
      %s433 = scalar_select %p432, %s28, 3
      %s434 = smul.addr %s433, 8
      %s435 = scalar_lea.vmem %s1, %s434
      %p436 = pneg %p49
      %p437 = pneg %p46
      %p438 = pneg %p70
      %p439 = pneg %p67
      %p440 = scmp.lt.s32.totalorder %s28, 3
      %s441 = scalar_select %p440, %s28, 3
      %s442 = smul.addr %s441, 3
      %s443 = smul.addr %s442, 8
      %s444 = scalar_lea.vmem %s3, %s443
      %p445 = pneg %p96
      %p446 = pneg %p93
      %p447 = pneg %p117
      %p448 = pneg %p114
      %p449 = pneg %p138
      %p450 = pneg %p135
      %p451 = pneg %p159
      %p452 = pneg %p156
      %p453 = pneg %p180
      %p454 = pneg %p177
      %p455 = pneg %p201
      %p456 = pneg %p198
      %p457 = pneg %p222
      %p458 = pneg %p219
      %p459 = pneg %p243
      %p460 = pneg %p240
      %p461 = pneg %p264
      %p462 = pneg %p261
      %p463 = pneg %p285
      %p464 = pneg %p282
      %p465 = pneg %p306
      %p466 = pneg %p303
      %p467 = pneg %p332
      %p468 = pneg %p329
      %p469 = scmp.lt.s32.totalorder %s28, 3
      %s470 = scalar_select %p469, %s28, 3
      %s471 = smul.addr %s470, 8
      %s472 = scalar_lea.vmem %s14, %s471
      %p473 = pneg %p358
      %p474 = pneg %p355
      %p475 = scmp.lt.s32.totalorder %s28, 3
      %s476 = scalar_select %p475, %s28, 3
      %s477 = smul.addr %s476, 3
      %s478 = smul.addr %s477, 8
      %s479 = scalar_lea.vmem %s15, %s478
      %p480 = scmp.lt.s32.totalorder %s28, 3
      %s481 = scalar_select %p480, %s28, 3
      %s482 = smul.addr %s481, 8
      %s483 = scalar_lea.vmem %s1, %s482
      %p484 = scmp.lt.s32.totalorder %s28, 3
      %s485 = scalar_select %p484, %s28, 3
      %s486 = smul.addr %s485, 3
      %s487 = smul.addr %s486, 8
      %s488 = scalar_lea.vmem %s3, %s487
      %p489 = scmp.lt.s32.totalorder %s28, 3
      %s490 = scalar_select %p489, %s28, 3
      %s491 = smul.addr %s490, 8
      %s492 = scalar_lea.vmem %s14, %s491
      %p493 = scmp.lt.s32.totalorder %s28, 3
      %s494 = scalar_select %p493, %s28, 3
      %s495 = smul.addr %s494, 3
      %s496 = smul.addr %s495, 8
      %s497 = scalar_lea.vmem %s15, %s496
      %s498 = sld [smem:[#allocation3]]
      %s499 = sadd.s32 %s498, %s28
      %v500 = vlaneseq
      %v501 = vstv %s499
      %v502 = vxor.u32 %v501, %v501
      %v503 = vxor.u32 %v502, 466688986
      %v504 = vadd.s32 %v500, %v501
      %v505 = vadd.s32 %v504, %v504
      %v506 = vshll.u32 %v504, 13
      %v507 = vshrl.u32 %v504, 19
      %v508 = vor.u32 %v506, %v507
      %v509 = vxor.u32 %v505, %v508
      %v510 = vadd.s32 %v505, %v509
      %v511 = vshll.u32 %v509, 15
      %v512 = vshrl.u32 %v509, 17
      %v513 = vor.u32 %v511, %v512
      %v514 = vxor.u32 %v510, %v513
      %v515 = vadd.s32 %v510, %v514
      %v516 = vshll.u32 %v514, 26
      %v517 = vshrl.u32 %v514, 6
      %v518 = vor.u32 %v516, %v517
      %v519 = vxor.u32 %v515, %v518
      %v520 = vadd.s32 %v515, %v519
      %v521 = vshll.u32 %v519, 6
      %v522 = vshrl.u32 %v519, 26
      %v523 = vor.u32 %v521, %v522
      %v524 = vxor.u32 %v520, %v523
      %v525 = vadd.s32 %v520, %v501
      %v526 = vadd.s32 %v524, %v503
      %v527 = vadd.s32 %v526, 1
      %v528 = vadd.s32 %v525, %v527
      %v529 = vshll.u32 %v527, 17
      %v530 = vshrl.u32 %v527, 15
      %v531 = vor.u32 %v529, %v530
      %v532 = vxor.u32 %v528, %v531
      %v533 = vadd.s32 %v528, %v532
      %v534 = vshll.u32 %v532, 29
      %v535 = vshrl.u32 %v532, 3
      %v536 = vor.u32 %v534, %v535
      %v537 = vxor.u32 %v533, %v536
      %v538 = vadd.s32 %v533, %v537
      %v539 = vshll.u32 %v537, 16
      %v540 = vshrl.u32 %v537, 16
      %v541 = vor.u32 %v539, %v540
      %v542 = vxor.u32 %v538, %v541
      %v543 = vadd.s32 %v538, %v542
      %v544 = vshll.u32 %v542, 24
      %v545 = vshrl.u32 %v542, 8
      %v546 = vor.u32 %v544, %v545
      %v547 = vxor.u32 %v543, %v546
      %v548 = vadd.s32 %v543, %v503
      %v549 = vadd.s32 %v547, %v501
      %v550 = vadd.s32 %v549, 2
      %v551 = vadd.s32 %v548, %v550
      %v552 = vshll.u32 %v550, 13
      %v553 = vshrl.u32 %v550, 19
      %v554 = vor.u32 %v552, %v553
      %v555 = vxor.u32 %v551, %v554
      %v556 = vadd.s32 %v551, %v555
      %v557 = vshll.u32 %v555, 15
      %v558 = vshrl.u32 %v555, 17
      %v559 = vor.u32 %v557, %v558
      %v560 = vxor.u32 %v556, %v559
      %v561 = vadd.s32 %v556, %v560
      %v562 = vshll.u32 %v560, 26
      %v563 = vshrl.u32 %v560, 6
      %v564 = vor.u32 %v562, %v563
      %v565 = vxor.u32 %v561, %v564
      %v566 = vadd.s32 %v561, %v565
      %v567 = vshll.u32 %v565, 6
      %v568 = vshrl.u32 %v565, 26
      %v569 = vor.u32 %v567, %v568
      %v570 = vxor.u32 %v566, %v569
      %v571 = vadd.s32 %v566, %v501
      %v572 = vadd.s32 %v570, %v501
      %v573 = vadd.s32 %v572, 3
      %v574 = vadd.s32 %v571, %v573
      %v575 = vshll.u32 %v573, 17
      %v576 = vshrl.u32 %v573, 15
      %v577 = vor.u32 %v575, %v576
      %v578 = vxor.u32 %v574, %v577
      %v579 = vadd.s32 %v574, %v578
      %v580 = vshll.u32 %v578, 29
      %v581 = vshrl.u32 %v578, 3
      %v582 = vor.u32 %v580, %v581
      %v583 = vxor.u32 %v579, %v582
      %v584 = vadd.s32 %v579, %v583
      %v585 = vshll.u32 %v583, 16
      %v586 = vshrl.u32 %v583, 16
      %v587 = vor.u32 %v585, %v586
      %v588 = vxor.u32 %v584, %v587
      %v589 = vadd.s32 %v584, %v588
      %v590 = vshll.u32 %v588, 24
      %v591 = vshrl.u32 %v588, 8
      %v592 = vor.u32 %v590, %v591
      %v593 = vxor.u32 %v589, %v592
      %v594 = vadd.s32 %v589, %v501
      %v595 = vadd.s32 %v593, %v503
      %v596 = vadd.s32 %v595, 4
      %v597 = vadd.s32 %v594, %v596
      %v598 = vshll.u32 %v596, 13
      %v599 = vshrl.u32 %v596, 19
      %v600 = vor.u32 %v598, %v599
      %v601 = vxor.u32 %v597, %v600
      %v602 = vadd.s32 %v597, %v601
      %v603 = vshll.u32 %v601, 15
      %v604 = vshrl.u32 %v601, 17
      %v605 = vor.u32 %v603, %v604
      %v606 = vxor.u32 %v602, %v605
      %v607 = vadd.s32 %v602, %v606
      %v608 = vshll.u32 %v606, 26
      %v609 = vshrl.u32 %v606, 6
      %v610 = vor.u32 %v608, %v609
      %v611 = vxor.u32 %v607, %v610
      %v612 = vadd.s32 %v607, %v611
      %v613 = vshll.u32 %v611, 6
      %v614 = vshrl.u32 %v611, 26
      %v615 = vor.u32 %v613, %v614
      %v616 = vxor.u32 %v612, %v615
      %v617 = vadd.s32 %v612, %v503
      %v618 = vadd.s32 %v616, %v501
      %v619 = vadd.s32 %v618, 5
      %v620 = vxor.u32 %v617, %v619
      %621 = set.rngseed %v620
      %v622 = vrng
      %v623 = vand.u32 %v622, 1
      %v624 = vcvt.s32.f32 %v623
      %v625 = vmul.f32 %v624, 2.0
      %v626 = vrng
      %v627 = vand.u32 %v626, 1
      %v628 = vcvt.s32.f32 %v627
      %v629 = vmul.f32 %v628, 2.0
      %v630 = vrng
      %v631 = vand.u32 %v630, 1
      %v632 = vcvt.s32.f32 %v631
      %v633 = vmul.f32 %v632, 2.0
      %634 = vst [vmem:[%s497] sm:$0xff] %v625
      %s635 = scalar_lea.vmem %s497, 8
      %636 = vst [vmem:[%s635] sm:$0xff] %v629
      %s637 = scalar_lea.vmem %s497, 16
      %638 = vst [vmem:[%s637] sm:$0xff] %v633
      %v639 = vld [vmem:[%s2] sm:$0xff]
      %v640 = vld [vmem:[%s483] sm:$0xff]
      %v641 = vld [vmem:[%s4] sm:$0x1]
      %v643 = vlaneseq
      %v644 = vshrl.u32 %v643, 7
      %v645 = vsub.s32 0, %v644
      %v646 = vrot.slane %v641, %v645
      %v648 = vmul.f32 %v640, %v646
      %v649 = vld [vmem:[%s5] sm:$0x1]
      %v651 = vlaneseq
      %v652 = vshrl.u32 %v651, 7
      %v653 = vsub.s32 0, %v652
      %v654 = vrot.slane %v649, %v653
      %vm656 = vcmask 64512
      %v658 = vsel %vm656, %v639, 0
      %660 = vmatprep.subr.mxu0 0.0
      %661 = vmatpush1.msra.mxu0 %v648
      %662 = vmatprep.subr.mxu0 0.0
      %663 = vmatpush1.msra.mxu0 0.0
      %664 = vmatprep.subr.mxu0 0.0
      %665 = vmatpush1.msra.mxu0 0.0
      %666 = vmatprep.subr.mxu0 0.0
      %667 = vmatpush1.msra.mxu0 0.0
      %668 = vmatprep.subr.mxu0 0.0
      %669 = vmatpush1.msra.mxu0 0.0
      %670 = vmatprep.subr.mxu0 0.0
      %671 = vmatpush1.msra.mxu0 0.0
      %672 = vmatprep.subr.mxu0 0.0
      %673 = vmatpush1.msra.mxu0 0.0
      %674 = vmatprep.subr.mxu0 0.0
      %675 = vmatpush1.msra.mxu0 0.0
      %676 = vmatprep.subr.mxu0 0.0
      %677 = vmatpush1.msra.mxu0 0.0
      %678 = vmatprep.subr.mxu0 0.0
      %679 = vmatpush1.msra.mxu0 0.0
      %680 = vmatprep.subr.mxu0 0.0
      %681 = vmatpush1.msra.mxu0 0.0
      %682 = vmatprep.subr.mxu0 0.0
      %683 = vmatpush1.msra.mxu0 0.0
      %684 = vmatprep.subr.mxu0 0.0
      %685 = vmatpush1.msra.mxu0 0.0
      %686 = vmatprep.subr.mxu0 0.0
      %687 = vmatpush1.msra.mxu0 0.0
      %688 = vmatprep.subr.mxu0 0.0
      %689 = vmatpush1.msra.mxu0 0.0
      %690 = vmatprep.subr.mxu0 0.0
      %691 = vmatpush1.msra.mxu0 0.0
      %692 = vmatprep.subr.mxu0 0.0
      %693 = vmatpush1.msra.mxu0 0.0
      %694 = vmatprep.subr.mxu0 0.0
      %695 = vmatpush1.msra.mxu0 0.0
      %696 = vmatprep.subr.mxu0 0.0
      %697 = vmatpush1.msra.mxu0 0.0
      %698 = vmatprep.subr.mxu0 0.0
      %699 = vmatpush1.msra.mxu0 0.0
      %700 = vmatprep.subr.mxu0 0.0
      %701 = vmatpush1.msra.mxu0 0.0
      %702 = vmatprep.subr.mxu0 0.0
      %703 = vmatpush1.msra.mxu0 0.0
      %704 = vmatprep.subr.mxu0 0.0
      %705 = vmatpush1.msra.mxu0 0.0
      %706 = vmatprep.subr.mxu0 0.0
      %707 = vmatpush1.msra.mxu0 0.0
      %708 = vmatprep.subr.mxu0 0.0
      %709 = vmatpush1.msra.mxu0 0.0
      %710 = vmatprep.subr.mxu0 0.0
      %711 = vmatpush1.msra.mxu0 0.0
      %712 = vmatprep.subr.mxu0 0.0
      %713 = vmatpush1.msra.mxu0 0.0
      %714 = vmatprep.subr.mxu0 0.0
      %715 = vmatpush1.msra.mxu0 0.0
      %716 = vmatprep.subr.mxu0 0.0
      %717 = vmatpush1.msra.mxu0 0.0
      %718 = vmatprep.subr.mxu0 0.0
      %719 = vmatpush1.msra.mxu0 0.0
      %720 = vmatprep.subr.mxu0 0.0
      %721 = vmatpush1.msra.mxu0 0.0
      %722 = vmatprep.subr.mxu0 0.0
      %723 = vmatpush1.msra.mxu0 0.0
      %724 = vmatprep.mubr.f32.mxu0 0.0
      %725 = vmatmul.mubr.f32.gmra.mrb[0].mxu0 %v658
      %v726 = vpop.f32.mrb[0].mxu0
      %v727 = vadd.f32 %v654, %v726
      %v728 = vpop.f32.mrb[0].mxu0
      %729 = vdwg.mxu0
      %v730 = vmax.f32 %v727, 0.0
      %v731 = vmul.f32 %v730, %v625
      %v732 = vld [vmem:[%s6] sm:$0xff]
      %v733 = vld [vmem:[%s6 + $0x8] sm:$0xff]
      %v734 = vld [vmem:[%s6 + $0x10] sm:$0xff]
      %v735 = vld [vmem:[%s6 + $0x18] sm:$0xff]
      %v736 = vld [vmem:[%s6 + $0x20] sm:$0xff]
      %v737 = vld [vmem:[%s6 + $0x28] sm:$0xff]
      %v738 = vld [vmem:[%s6 + $0x30] sm:$0xff]
      %v739 = vld [vmem:[%s6 + $0x38] sm:$0xff]
      %v740 = vld [vmem:[%s6 + $0x40] sm:$0xff]
      %v741 = vld [vmem:[%s6 + $0x48] sm:$0xff]
      %v742 = vld [vmem:[%s6 + $0x50] sm:$0xff]
      %v743 = vld [vmem:[%s6 + $0x58] sm:$0xff]
      %v744 = vld [vmem:[%s6 + $0x60] sm:$0xff]
      %v745 = vld [vmem:[%s6 + $0x68] sm:$0xff]
      %v746 = vld [vmem:[%s6 + $0x70] sm:$0xff]
      %v747 = vld [vmem:[%s6 + $0x78] sm:$0xff]
      %748 = vmatprep.subr.mxu0 0.0
      %749 = vmatpush1.msra.mxu0 %v732
      %750 = vmatprep.subr.mxu0 0.0
      %751 = vmatpush1.msra.mxu0 %v733
      %752 = vmatprep.subr.mxu0 0.0
      %753 = vmatpush1.msra.mxu0 %v734
      %754 = vmatprep.subr.mxu0 0.0
      %755 = vmatpush1.msra.mxu0 %v735
      %756 = vmatprep.subr.mxu0 0.0
      %757 = vmatpush1.msra.mxu0 %v736
      %758 = vmatprep.subr.mxu0 0.0
      %759 = vmatpush1.msra.mxu0 %v737
      %760 = vmatprep.subr.mxu0 0.0
      %761 = vmatpush1.msra.mxu0 %v738
      %762 = vmatprep.subr.mxu0 0.0
      %763 = vmatpush1.msra.mxu0 %v739
      %764 = vmatprep.subr.mxu0 0.0
      %765 = vmatpush1.msra.mxu0 %v740
      %766 = vmatprep.subr.mxu0 0.0
      %767 = vmatpush1.msra.mxu0 %v741
      %768 = vmatprep.subr.mxu0 0.0
      %769 = vmatpush1.msra.mxu0 %v742
      %770 = vmatprep.subr.mxu0 0.0
      %771 = vmatpush1.msra.mxu0 %v743
      %772 = vmatprep.subr.mxu0 0.0
      %773 = vmatpush1.msra.mxu0 %v744
      %774 = vmatprep.subr.mxu0 0.0
      %775 = vmatpush1.msra.mxu0 %v745
      %776 = vmatprep.subr.mxu0 0.0
      %777 = vmatpush1.msra.mxu0 %v746
      %778 = vmatprep.subr.mxu0 0.0
      %779 = vmatpush1.msra.mxu0 %v747
      %780 = vmatprep.subr.mxu0 0.0
      %781 = vmatpush1.msra.mxu0 0.0
      %782 = vmatprep.subr.mxu0 0.0
      %783 = vmatpush1.msra.mxu0 0.0
      %784 = vmatprep.subr.mxu0 0.0
      %785 = vmatpush1.msra.mxu0 0.0
      %786 = vmatprep.subr.mxu0 0.0
      %787 = vmatpush1.msra.mxu0 0.0
      %788 = vmatprep.subr.mxu0 0.0
      %789 = vmatpush1.msra.mxu0 0.0
      %790 = vmatprep.subr.mxu0 0.0
      %791 = vmatpush1.msra.mxu0 0.0
      %792 = vmatprep.subr.mxu0 0.0
      %793 = vmatpush1.msra.mxu0 0.0
      %794 = vmatprep.subr.mxu0 0.0
      %795 = vmatpush1.msra.mxu0 0.0
      %796 = vmatprep.subr.mxu0 0.0
      %797 = vmatpush1.msra.mxu0 0.0
      %798 = vmatprep.subr.mxu0 0.0
      %799 = vmatpush1.msra.mxu0 0.0
      %800 = vmatprep.subr.mxu0 0.0
      %801 = vmatpush1.msra.mxu0 0.0
      %802 = vmatprep.subr.mxu0 0.0
      %803 = vmatpush1.msra.mxu0 0.0
      %804 = vmatprep.subr.mxu0 0.0
      %805 = vmatpush1.msra.mxu0 0.0
      %806 = vmatprep.subr.mxu0 0.0
      %807 = vmatpush1.msra.mxu0 0.0
      %808 = vmatprep.subr.mxu0 0.0
      %809 = vmatpush1.msra.mxu0 0.0
      %810 = vmatprep.subr.mxu0 0.0
      %811 = vmatpush1.msra.mxu0 0.0
      %812 = vmatprep.mubr.f32.mxu0 0.0
      %813 = vmatmul.mubr.f32.gmra.mrb[0].mxu0 %v731
      %v814 = vpop.f32.mrb[0].mxu0
      %v815 = vadd.f32 0.0, %v814
      %v816 = vpop.f32.mrb[0].mxu0
      %817 = vdwg.mxu0
      %v818 = vld [vmem:[%s7] sm:$0x1]
      %v820 = vlaneseq
      %v821 = vshrl.u32 %v820, 7
      %v822 = vsub.s32 0, %v821
      %v823 = vrot.slane %v818, %v822
      %825 = vmatprep.subr.mxu0 0.0
      %826 = vmatpush1.msra.mxu0 %v815
      %827 = vmatprep.subr.mxu0 0.0
      %828 = vmatpush1.msra.mxu0 0.0
      %829 = vmatprep.subr.mxu0 0.0
      %830 = vmatpush1.msra.mxu0 0.0
      %831 = vmatprep.subr.mxu0 0.0
      %832 = vmatpush1.msra.mxu0 0.0
      %833 = vmatprep.subr.mxu0 0.0
      %834 = vmatpush1.msra.mxu0 0.0
      %835 = vmatprep.subr.mxu0 0.0
      %836 = vmatpush1.msra.mxu0 0.0
      %837 = vmatprep.subr.mxu0 0.0
      %838 = vmatpush1.msra.mxu0 0.0
      %839 = vmatprep.subr.mxu0 0.0
      %840 = vmatpush1.msra.mxu0 0.0
      %841 = vmatprep.subr.mxu0 0.0
      %842 = vmatpush1.msra.mxu0 0.0
      %843 = vmatprep.subr.mxu0 0.0
      %844 = vmatpush1.msra.mxu0 0.0
      %845 = vmatprep.subr.mxu0 0.0
      %846 = vmatpush1.msra.mxu0 0.0
      %847 = vmatprep.subr.mxu0 0.0
      %848 = vmatpush1.msra.mxu0 0.0
      %849 = vmatprep.subr.mxu0 0.0
      %850 = vmatpush1.msra.mxu0 0.0
      %851 = vmatprep.subr.mxu0 0.0
      %852 = vmatpush1.msra.mxu0 0.0
      %853 = vmatprep.subr.mxu0 0.0
      %854 = vmatpush1.msra.mxu0 0.0
      %855 = vmatprep.subr.mxu0 0.0
      %856 = vmatpush1.msra.mxu0 0.0
      %857 = vmatprep.subr.mxu0 0.0
      %858 = vmatpush1.msra.mxu0 0.0
      %859 = vmatprep.subr.mxu0 0.0
      %860 = vmatpush1.msra.mxu0 0.0
      %861 = vmatprep.subr.mxu0 0.0
      %862 = vmatpush1.msra.mxu0 0.0
      %863 = vmatprep.subr.mxu0 0.0
      %864 = vmatpush1.msra.mxu0 0.0
      %865 = vmatprep.subr.mxu0 0.0
      %866 = vmatpush1.msra.mxu0 0.0
      %867 = vmatprep.subr.mxu0 0.0
      %868 = vmatpush1.msra.mxu0 0.0
      %869 = vmatprep.subr.mxu0 0.0
      %870 = vmatpush1.msra.mxu0 0.0
      %871 = vmatprep.subr.mxu0 0.0
      %872 = vmatpush1.msra.mxu0 0.0
      %873 = vmatprep.subr.mxu0 0.0
      %874 = vmatpush1.msra.mxu0 0.0
      %875 = vmatprep.subr.mxu0 0.0
      %876 = vmatpush1.msra.mxu0 0.0
      %877 = vmatprep.subr.mxu0 0.0
      %878 = vmatpush1.msra.mxu0 0.0
      %879 = vmatprep.subr.mxu0 0.0
      %880 = vmatpush1.msra.mxu0 0.0
      %881 = vmatprep.subr.mxu0 0.0
      %882 = vmatpush1.msra.mxu0 0.0
      %883 = vmatprep.subr.mxu0 0.0
      %884 = vmatpush1.msra.mxu0 0.0
      %885 = vmatprep.subr.mxu0 0.0
      %886 = vmatpush1.msra.mxu0 0.0
      %887 = vmatprep.subr.mxu0 0.0
      %888 = vmatpush1.msra.mxu0 0.0
      %889 = vmatprep.mubr.f32.mxu0 0.0
      %890 = vmatmul.mubr.f32.gmra.mrb[0].mxu0 %v658
      %v891 = vpop.f32.mrb[0].mxu0
      %v892 = vadd.f32 %v823, %v891
      %v893 = vpop.f32.mrb[0].mxu0
      %894 = vdwg.mxu0
      %v895 = vmax.f32 %v892, 0.0
      %v896 = vmul.f32 %v895, %v629
      %v897 = vld [vmem:[%s8] sm:$0xff]
      %v898 = vld [vmem:[%s8 + $0x8] sm:$0xff]
      %v899 = vld [vmem:[%s8 + $0x10] sm:$0xff]
      %v900 = vld [vmem:[%s8 + $0x18] sm:$0xff]
      %v901 = vld [vmem:[%s8 + $0x20] sm:$0xff]
      %v902 = vld [vmem:[%s8 + $0x28] sm:$0xff]
      %v903 = vld [vmem:[%s8 + $0x30] sm:$0xff]
      %v904 = vld [vmem:[%s8 + $0x38] sm:$0xff]
      %v905 = vld [vmem:[%s8 + $0x40] sm:$0xff]
      %v906 = vld [vmem:[%s8 + $0x48] sm:$0xff]
      %v907 = vld [vmem:[%s8 + $0x50] sm:$0xff]
      %v908 = vld [vmem:[%s8 + $0x58] sm:$0xff]
      %v909 = vld [vmem:[%s8 + $0x60] sm:$0xff]
      %v910 = vld [vmem:[%s8 + $0x68] sm:$0xff]
      %v911 = vld [vmem:[%s8 + $0x70] sm:$0xff]
      %v912 = vld [vmem:[%s8 + $0x78] sm:$0xff]
      %913 = vmatprep.subr.mxu0 0.0
      %914 = vmatpush1.msra.mxu0 %v897
      %915 = vmatprep.subr.mxu0 0.0
      %916 = vmatpush1.msra.mxu0 %v898
      %917 = vmatprep.subr.mxu0 0.0
      %918 = vmatpush1.msra.mxu0 %v899
      %919 = vmatprep.subr.mxu0 0.0
      %920 = vmatpush1.msra.mxu0 %v900
      %921 = vmatprep.subr.mxu0 0.0
      %922 = vmatpush1.msra.mxu0 %v901
      %923 = vmatprep.subr.mxu0 0.0
      %924 = vmatpush1.msra.mxu0 %v902
      %925 = vmatprep.subr.mxu0 0.0
      %926 = vmatpush1.msra.mxu0 %v903
      %927 = vmatprep.subr.mxu0 0.0
      %928 = vmatpush1.msra.mxu0 %v904
      %929 = vmatprep.subr.mxu0 0.0
      %930 = vmatpush1.msra.mxu0 %v905
      %931 = vmatprep.subr.mxu0 0.0
      %932 = vmatpush1.msra.mxu0 %v906
      %933 = vmatprep.subr.mxu0 0.0
      %934 = vmatpush1.msra.mxu0 %v907
      %935 = vmatprep.subr.mxu0 0.0
      %936 = vmatpush1.msra.mxu0 %v908
      %937 = vmatprep.subr.mxu0 0.0
      %938 = vmatpush1.msra.mxu0 %v909
      %939 = vmatprep.subr.mxu0 0.0
      %940 = vmatpush1.msra.mxu0 %v910
      %941 = vmatprep.subr.mxu0 0.0
      %942 = vmatpush1.msra.mxu0 %v911
      %943 = vmatprep.subr.mxu0 0.0
      %944 = vmatpush1.msra.mxu0 %v912
      %945 = vmatprep.subr.mxu0 0.0
      %946 = vmatpush1.msra.mxu0 0.0
      %947 = vmatprep.subr.mxu0 0.0
      %948 = vmatpush1.msra.mxu0 0.0
      %949 = vmatprep.subr.mxu0 0.0
      %950 = vmatpush1.msra.mxu0 0.0
      %951 = vmatprep.subr.mxu0 0.0
      %952 = vmatpush1.msra.mxu0 0.0
      %953 = vmatprep.subr.mxu0 0.0
      %954 = vmatpush1.msra.mxu0 0.0
      %955 = vmatprep.subr.mxu0 0.0
      %956 = vmatpush1.msra.mxu0 0.0
      %957 = vmatprep.subr.mxu0 0.0
      %958 = vmatpush1.msra.mxu0 0.0
      %959 = vmatprep.subr.mxu0 0.0
      %960 = vmatpush1.msra.mxu0 0.0
      %961 = vmatprep.subr.mxu0 0.0
      %962 = vmatpush1.msra.mxu0 0.0
      %963 = vmatprep.subr.mxu0 0.0
      %964 = vmatpush1.msra.mxu0 0.0
      %965 = vmatprep.subr.mxu0 0.0
      %966 = vmatpush1.msra.mxu0 0.0
      %967 = vmatprep.subr.mxu0 0.0
      %968 = vmatpush1.msra.mxu0 0.0
      %969 = vmatprep.subr.mxu0 0.0
      %970 = vmatpush1.msra.mxu0 0.0
      %971 = vmatprep.subr.mxu0 0.0
      %972 = vmatpush1.msra.mxu0 0.0
      %973 = vmatprep.subr.mxu0 0.0
      %974 = vmatpush1.msra.mxu0 0.0
      %975 = vmatprep.subr.mxu0 0.0
      %976 = vmatpush1.msra.mxu0 0.0
      %977 = vmatprep.mubr.f32.mxu0 0.0
      %978 = vmatmul.mubr.f32.gmra.mrb[0].mxu0 %v896
      %v979 = vpop.f32.mrb[0].mxu0
      %v980 = vadd.f32 0.0, %v979
      %v981 = vpop.f32.mrb[0].mxu0
      %982 = vdwg.mxu0
      %v983 = vld [vmem:[%s9] sm:$0x1]
      %v985 = vlaneseq
      %v986 = vshrl.u32 %v985, 7
      %v987 = vsub.s32 0, %v986
      %v988 = vrot.slane %v983, %v987
      %990 = vmatprep.subr.mxu0 0.0
      %991 = vmatpush1.msra.mxu0 %v980
      %992 = vmatprep.subr.mxu0 0.0
      %993 = vmatpush1.msra.mxu0 0.0
      %994 = vmatprep.subr.mxu0 0.0
      %995 = vmatpush1.msra.mxu0 0.0
      %996 = vmatprep.subr.mxu0 0.0
      %997 = vmatpush1.msra.mxu0 0.0
      %998 = vmatprep.subr.mxu0 0.0
      %999 = vmatpush1.msra.mxu0 0.0
      %1000 = vmatprep.subr.mxu0 0.0
      %1001 = vmatpush1.msra.mxu0 0.0
      %1002 = vmatprep.subr.mxu0 0.0
      %1003 = vmatpush1.msra.mxu0 0.0
      %1004 = vmatprep.subr.mxu0 0.0
      %1005 = vmatpush1.msra.mxu0 0.0
      %1006 = vmatprep.subr.mxu0 0.0
      %1007 = vmatpush1.msra.mxu0 0.0
      %1008 = vmatprep.subr.mxu0 0.0
      %1009 = vmatpush1.msra.mxu0 0.0
      %1010 = vmatprep.subr.mxu0 0.0
      %1011 = vmatpush1.msra.mxu0 0.0
      %1012 = vmatprep.subr.mxu0 0.0
      %1013 = vmatpush1.msra.mxu0 0.0
      %1014 = vmatprep.subr.mxu0 0.0
      %1015 = vmatpush1.msra.mxu0 0.0
      %1016 = vmatprep.subr.mxu0 0.0
      %1017 = vmatpush1.msra.mxu0 0.0
      %1018 = vmatprep.subr.mxu0 0.0
      %1019 = vmatpush1.msra.mxu0 0.0
      %1020 = vmatprep.subr.mxu0 0.0
      %1021 = vmatpush1.msra.mxu0 0.0
      %1022 = vmatprep.subr.mxu0 0.0
      %1023 = vmatpush1.msra.mxu0 0.0
      %1024 = vmatprep.subr.mxu0 0.0
      %1025 = vmatpush1.msra.mxu0 0.0
      %1026 = vmatprep.subr.mxu0 0.0
      %1027 = vmatpush1.msra.mxu0 0.0
      %1028 = vmatprep.subr.mxu0 0.0
      %1029 = vmatpush1.msra.mxu0 0.0
      %1030 = vmatprep.subr.mxu0 0.0
      %1031 = vmatpush1.msra.mxu0 0.0
      %1032 = vmatprep.subr.mxu0 0.0
      %1033 = vmatpush1.msra.mxu0 0.0
      %1034 = vmatprep.subr.mxu0 0.0
      %1035 = vmatpush1.msra.mxu0 0.0
      %1036 = vmatprep.subr.mxu0 0.0
      %1037 = vmatpush1.msra.mxu0 0.0
      %1038 = vmatprep.subr.mxu0 0.0
      %1039 = vmatpush1.msra.mxu0 0.0
      %1040 = vmatprep.subr.mxu0 0.0
      %1041 = vmatpush1.msra.mxu0 0.0
      %1042 = vmatprep.subr.mxu0 0.0
      %1043 = vmatpush1.msra.mxu0 0.0
      %1044 = vmatprep.subr.mxu0 0.0
      %1045 = vmatpush1.msra.mxu0 0.0
      %1046 = vmatprep.subr.mxu0 0.0
      %1047 = vmatpush1.msra.mxu0 0.0
      %1048 = vmatprep.subr.mxu0 0.0
      %1049 = vmatpush1.msra.mxu0 0.0
      %1050 = vmatprep.subr.mxu0 0.0
      %1051 = vmatpush1.msra.mxu0 0.0
      %1052 = vmatprep.subr.mxu0 0.0
      %1053 = vmatpush1.msra.mxu0 0.0
      %1054 = vmatprep.mubr.f32.mxu0 0.0
      %1055 = vmatmul.mubr.f32.gmra.mrb[0].mxu0 %v658
      %v1056 = vpop.f32.mrb[0].mxu0
      %v1057 = vadd.f32 %v988, %v1056
      %v1058 = vpop.f32.mrb[0].mxu0
      %1059 = vdwg.mxu0
      %v1060 = vmax.f32 %v1057, 0.0
      %v1061 = vmul.f32 %v1060, %v633
      %v1062 = vld [vmem:[%s10] sm:$0xff]
      %v1063 = vld [vmem:[%s10 + $0x8] sm:$0xff]
      %v1064 = vld [vmem:[%s10 + $0x10] sm:$0xff]
      %v1065 = vld [vmem:[%s10 + $0x18] sm:$0xff]
      %v1066 = vld [vmem:[%s10 + $0x20] sm:$0xff]
      %v1067 = vld [vmem:[%s10 + $0x28] sm:$0xff]
      %v1068 = vld [vmem:[%s10 + $0x30] sm:$0xff]
      %v1069 = vld [vmem:[%s10 + $0x38] sm:$0xff]
      %v1070 = vld [vmem:[%s10 + $0x40] sm:$0xff]
      %v1071 = vld [vmem:[%s10 + $0x48] sm:$0xff]
      %v1072 = vld [vmem:[%s10 + $0x50] sm:$0xff]
      %v1073 = vld [vmem:[%s10 + $0x58] sm:$0xff]
      %v1074 = vld [vmem:[%s10 + $0x60] sm:$0xff]
      %v1075 = vld [vmem:[%s10 + $0x68] sm:$0xff]
      %v1076 = vld [vmem:[%s10 + $0x70] sm:$0xff]
      %v1077 = vld [vmem:[%s10 + $0x78] sm:$0xff]
      %v1078 = vld [vmem:[%s10 + $0x80] sm:$0xff]
      %v1079 = vld [vmem:[%s10 + $0x88] sm:$0xff]
      %v1080 = vld [vmem:[%s10 + $0x90] sm:$0xff]
      %v1081 = vld [vmem:[%s10 + $0x98] sm:$0xff]
      %v1082 = vld [vmem:[%s10 + $0xa0] sm:$0xff]
      %v1083 = vld [vmem:[%s10 + $0xa8] sm:$0xff]
      %v1084 = vld [vmem:[%s10 + $0xb0] sm:$0xff]
      %v1085 = vld [vmem:[%s10 + $0xb8] sm:$0xff]
      %v1086 = vld [vmem:[%s10 + $0xc0] sm:$0xff]
      %v1087 = vld [vmem:[%s10 + $0xc8] sm:$0xff]
      %v1088 = vld [vmem:[%s10 + $0xd0] sm:$0xff]
      %v1089 = vld [vmem:[%s10 + $0xd8] sm:$0xff]
      %v1090 = vld [vmem:[%s10 + $0xe0] sm:$0xff]
      %v1091 = vld [vmem:[%s10 + $0xe8] sm:$0xff]
      %v1092 = vld [vmem:[%s10 + $0xf0] sm:$0xff]
      %v1093 = vld [vmem:[%s10 + $0xf8] sm:$0xff]
      %1094 = vmatprep.subr.mxu0 %v1063
      %1095 = vmatpush1.msra.mxu0 %v1062
      %1096 = vmatprep.subr.mxu0 %v1065
      %1097 = vmatpush1.msra.mxu0 %v1064
      %1098 = vmatprep.subr.mxu0 %v1067
      %1099 = vmatpush1.msra.mxu0 %v1066
      %1100 = vmatprep.subr.mxu0 %v1069
      %1101 = vmatpush1.msra.mxu0 %v1068
      %1102 = vmatprep.subr.mxu0 %v1071
      %1103 = vmatpush1.msra.mxu0 %v1070
      %1104 = vmatprep.subr.mxu0 %v1073
      %1105 = vmatpush1.msra.mxu0 %v1072
      %1106 = vmatprep.subr.mxu0 %v1075
      %1107 = vmatpush1.msra.mxu0 %v1074
      %1108 = vmatprep.subr.mxu0 %v1077
      %1109 = vmatpush1.msra.mxu0 %v1076
      %1110 = vmatprep.subr.mxu0 %v1079
      %1111 = vmatpush1.msra.mxu0 %v1078
      %1112 = vmatprep.subr.mxu0 %v1081
      %1113 = vmatpush1.msra.mxu0 %v1080
      %1114 = vmatprep.subr.mxu0 %v1083
      %1115 = vmatpush1.msra.mxu0 %v1082
      %1116 = vmatprep.subr.mxu0 %v1085
      %1117 = vmatpush1.msra.mxu0 %v1084
      %1118 = vmatprep.subr.mxu0 %v1087
      %1119 = vmatpush1.msra.mxu0 %v1086
      %1120 = vmatprep.subr.mxu0 %v1089
      %1121 = vmatpush1.msra.mxu0 %v1088
      %1122 = vmatprep.subr.mxu0 %v1091
      %1123 = vmatpush1.msra.mxu0 %v1090
      %1124 = vmatprep.subr.mxu0 %v1093
      %1125 = vmatpush1.msra.mxu0 %v1092
      %1126 = vmatprep.subr.mxu0 0.0
      %1127 = vmatpush1.msra.mxu0 0.0
      %1128 = vmatprep.subr.mxu0 0.0
      %1129 = vmatpush1.msra.mxu0 0.0
      %1130 = vmatprep.subr.mxu0 0.0
      %1131 = vmatpush1.msra.mxu0 0.0
      %1132 = vmatprep.subr.mxu0 0.0
      %1133 = vmatpush1.msra.mxu0 0.0
      %1134 = vmatprep.subr.mxu0 0.0
      %1135 = vmatpush1.msra.mxu0 0.0
      %1136 = vmatprep.subr.mxu0 0.0
      %1137 = vmatpush1.msra.mxu0 0.0
      %1138 = vmatprep.subr.mxu0 0.0
      %1139 = vmatpush1.msra.mxu0 0.0
      %1140 = vmatprep.subr.mxu0 0.0
      %1141 = vmatpush1.msra.mxu0 0.0
      %1142 = vmatprep.subr.mxu0 0.0
      %1143 = vmatpush1.msra.mxu0 0.0
      %1144 = vmatprep.subr.mxu0 0.0
      %1145 = vmatpush1.msra.mxu0 0.0
      %1146 = vmatprep.subr.mxu0 0.0
      %1147 = vmatpush1.msra.mxu0 0.0
      %1148 = vmatprep.subr.mxu0 0.0
      %1149 = vmatpush1.msra.mxu0 0.0
      %1150 = vmatprep.subr.mxu0 0.0
      %1151 = vmatpush1.msra.mxu0 0.0
      %1152 = vmatprep.subr.mxu0 0.0
      %1153 = vmatpush1.msra.mxu0 0.0
      %1154 = vmatprep.subr.mxu0 0.0
      %1155 = vmatpush1.msra.mxu0 0.0
      %1156 = vmatprep.subr.mxu0 0.0
      %1157 = vmatpush1.msra.mxu0 0.0
      %1158 = vmatprep.mubr.f32.mxu0 0.0
      %1159 = vmatmul.mubr.f32.gmra.mrb[0].mxu0 %v1061
      %v1160 = vpop.f32.mrb[0].mxu0
      %v1161 = vadd.f32 0.0, %v1160
      %v1162 = vpop.f32.mrb[0].mxu0
      %v1163 = vadd.f32 0.0, %v1162
      %1164 = vdwg.mxu0
      %v1165 = vld [vmem:[%s11] sm:$0xff]
      %v1166 = vld [vmem:[%s11 + $0x8] sm:$0xff]
      %v1167 = vmul.f32 %v1161, %v1165
      %v1168 = vmul.f32 %v1163, %v1166
      %v1169 = vld [vmem:[%s12] sm:$0xff]
      %v1170 = vld [vmem:[%s12 + $0x8] sm:$0xff]
      %v1171 = vld [vmem:[%s12 + $0x10] sm:$0xff]
      %v1172 = vld [vmem:[%s12 + $0x18] sm:$0xff]
      %v1173 = vld [vmem:[%s12 + $0x20] sm:$0xff]
      %v1174 = vld [vmem:[%s12 + $0x28] sm:$0xff]
      %v1175 = vld [vmem:[%s12 + $0x30] sm:$0xff]
      %v1176 = vld [vmem:[%s12 + $0x38] sm:$0xff]
      %v1177 = vld [vmem:[%s12 + $0x40] sm:$0xff]
      %v1178 = vld [vmem:[%s12 + $0x48] sm:$0xff]
      %v1179 = vld [vmem:[%s12 + $0x50] sm:$0xff]
      %v1180 = vld [vmem:[%s12 + $0x58] sm:$0xff]
      %v1181 = vld [vmem:[%s12 + $0x60] sm:$0xff]
      %v1182 = vld [vmem:[%s12 + $0x68] sm:$0xff]
      %v1183 = vld [vmem:[%s12 + $0x70] sm:$0xff]
      %v1184 = vld [vmem:[%s12 + $0x78] sm:$0xff]
      %v1185 = vld [vmem:[%s12 + $0x80] sm:$0xff]
      %v1186 = vld [vmem:[%s12 + $0x88] sm:$0xff]
      %v1187 = vld [vmem:[%s12 + $0x90] sm:$0xff]
      %v1188 = vld [vmem:[%s12 + $0x98] sm:$0xff]
      %v1189 = vld [vmem:[%s12 + $0xa0] sm:$0xff]
      %v1190 = vld [vmem:[%s12 + $0xa8] sm:$0xff]
      %v1191 = vld [vmem:[%s12 + $0xb0] sm:$0xff]
      %v1192 = vld [vmem:[%s12 + $0xb8] sm:$0xff]
      %v1193 = vld [vmem:[%s12 + $0xc0] sm:$0xff]
      %v1194 = vld [vmem:[%s12 + $0xc8] sm:$0xff]
      %v1195 = vld [vmem:[%s12 + $0xd0] sm:$0xff]
      %v1196 = vld [vmem:[%s12 + $0xd8] sm:$0xff]
      %v1197 = vld [vmem:[%s12 + $0xe0] sm:$0xff]
      %v1198 = vld [vmem:[%s12 + $0xe8] sm:$0xff]
      %v1199 = vld [vmem:[%s12 + $0xf0] sm:$0xff]
      %v1200 = vld [vmem:[%s12 + $0xf8] sm:$0xff]
      %v1201 = vld [vmem:[%s13] sm:$0xff]
      %1202 = vmatprep.subr.mxu0 0.0
      %1203 = vmatpush1.msra.mxu0 %v1169
      %1204 = vmatprep.subr.mxu0 0.0
      %1205 = vmatpush1.msra.mxu0 %v1170
      %1206 = vmatprep.subr.mxu0 0.0
      %1207 = vmatpush1.msra.mxu0 %v1171
      %1208 = vmatprep.subr.mxu0 0.0
      %1209 = vmatpush1.msra.mxu0 %v1172
      %1210 = vmatprep.subr.mxu0 0.0
      %1211 = vmatpush1.msra.mxu0 %v1173
      %1212 = vmatprep.subr.mxu0 0.0
      %1213 = vmatpush1.msra.mxu0 %v1174
      %1214 = vmatprep.subr.mxu0 0.0
      %1215 = vmatpush1.msra.mxu0 %v1175
      %1216 = vmatprep.subr.mxu0 0.0
      %1217 = vmatpush1.msra.mxu0 %v1176
      %1218 = vmatprep.subr.mxu0 0.0
      %1219 = vmatpush1.msra.mxu0 %v1177
      %1220 = vmatprep.subr.mxu0 0.0
      %1221 = vmatpush1.msra.mxu0 %v1178
      %1222 = vmatprep.subr.mxu0 0.0
      %1223 = vmatpush1.msra.mxu0 %v1179
      %1224 = vmatprep.subr.mxu0 0.0
      %1225 = vmatpush1.msra.mxu0 %v1180
      %1226 = vmatprep.subr.mxu0 0.0
      %1227 = vmatpush1.msra.mxu0 %v1181
      %1228 = vmatprep.subr.mxu0 0.0
      %1229 = vmatpush1.msra.mxu0 %v1182
      %1230 = vmatprep.subr.mxu0 0.0
      %1231 = vmatpush1.msra.mxu0 %v1183
      %1232 = vmatprep.subr.mxu0 0.0
      %1233 = vmatpush1.msra.mxu0 %v1184
      %1234 = vmatprep.subr.mxu0 0.0
      %1235 = vmatpush1.msra.mxu0 %v1185
      %1236 = vmatprep.subr.mxu0 0.0
      %1237 = vmatpush1.msra.mxu0 %v1186
      %1238 = vmatprep.subr.mxu0 0.0
      %1239 = vmatpush1.msra.mxu0 %v1187
      %1240 = vmatprep.subr.mxu0 0.0
      %1241 = vmatpush1.msra.mxu0 %v1188
      %1242 = vmatprep.subr.mxu0 0.0
      %1243 = vmatpush1.msra.mxu0 %v1189
      %1244 = vmatprep.subr.mxu0 0.0
      %1245 = vmatpush1.msra.mxu0 %v1190
      %1246 = vmatprep.subr.mxu0 0.0
      %1247 = vmatpush1.msra.mxu0 %v1191
      %1248 = vmatprep.subr.mxu0 0.0
      %1249 = vmatpush1.msra.mxu0 %v1192
      %1250 = vmatprep.subr.mxu0 0.0
      %1251 = vmatpush1.msra.mxu0 %v1193
      %1252 = vmatprep.subr.mxu0 0.0
      %1253 = vmatpush1.msra.mxu0 %v1194
      %1254 = vmatprep.subr.mxu0 0.0
      %1255 = vmatpush1.msra.mxu0 %v1195
      %1256 = vmatprep.subr.mxu0 0.0
      %1257 = vmatpush1.msra.mxu0 %v1196
      %1258 = vmatprep.subr.mxu0 0.0
      %1259 = vmatpush1.msra.mxu0 %v1197
      %1260 = vmatprep.subr.mxu0 0.0
      %1261 = vmatpush1.msra.mxu0 %v1198
      %1262 = vmatprep.subr.mxu0 0.0
      %1263 = vmatpush1.msra.mxu0 %v1199
      %1264 = vmatprep.subr.mxu0 0.0
      %1265 = vmatpush1.msra.mxu0 %v1200
      %1266 = vmatprep.mubr.f32.mxu0 %v1168
      %1267 = vmatmul.mubr.f32.gmra.mrb[0].mxu0 %v1167
      %v1268 = vpop.f32.mrb[0].mxu0
      %v1269 = vadd.f32 %v1201, %v1268
      %v1270 = vpop.f32.mrb[0].mxu0
      %1271 = vdwg.mxu0
      %vm1272 = vcmask 261120
      %1273 = vst.msk [vmem:[%s492] sm:$0xff] %vm1272, %v1269
      %p1274 = scmp.lt.s32.totalorder %s28, 3
      %s1275 = scalar_select %p1274, %s28, 3
      %s1276 = smul.addr %s1275, 8
      %s1277 = scalar_lea.vmem %s14, %s1276
      %p1278 = scmp.lt.s32.totalorder %s28, 3
      %s1279 = scalar_select %p1278, %s28, 3
      %s1280 = smul.addr %s1279, 3
      %s1281 = smul.addr %s1280, 8
      %s1282 = scalar_lea.vmem %s15, %s1281
      // Predicated region
      $region73: #{dqgn_forward.1} parent=71 // pred_check
        %p1283 = pneg %p329
      $region74: #{dqgn_forward.1} parent=71 // pred_check_branch
        %1285 = sbr.rel (%p1283) target = $region76
      $region75: #{dqgn_forward.1} parent=71 // pred_region
        _
      $region76: #{dqgn_forward.1} parent=71 // pred_fallthru
        _
      // Predicated region
      $region77: #{dqgn_forward.1} parent=71 // pred_check
        %p1286 = pneg %p355
      $region78: #{dqgn_forward.1} parent=71 // pred_check_branch
        %1288 = sbr.rel (%p1286) target = $region80
      $region79: #{dqgn_forward.1} parent=71 // pred_region
        _
      $region80: #{dqgn_forward.1} parent=71 // pred_fallthru
        _
    $region72: #{dqgn_forward.1} parent=5 // pred_fallthru
      _
    %p1289 = scmp.le.s32.totalorder 2, %s23
    // Predicated region
    $region81: #{dqgn_forward.1} parent=5 // pred_check
      %p1290 = pneg %p1289
    $region82: #{dqgn_forward.1} parent=5 // pred_check_branch
      %1292 = sbr.rel (%p1290) target = $region84
    $region83: #{dqgn_forward.1} parent=5 // pred_region
      %s1293 = ssub.s32 %s23, 2
      // Predicated region
      $region85: #{dqgn_forward.1} parent=83 // pred_check
        %p1294 = pneg %p335
      $region86: #{dqgn_forward.1} parent=83 // pred_check_branch
        %1296 = sbr.rel (%p1294) target = $region88
      $region87: #{dqgn_forward.1} parent=83 // pred_region
        %p1297 = scmp.lt.s32.totalorder %s29, 3
        %s1298 = scalar_select %p1297, %s29, 3
        %s1299 = smul.addr %s1298, 8
        %s1300 = scalar_lea.vmem %s14, %s1299
      $region88: #{dqgn_forward.1} parent=83 // pred_fallthru
        _
      // Predicated region
      $region89: #{dqgn_forward.1} parent=83 // pred_check
        %p1301 = pneg %p361
      $region90: #{dqgn_forward.1} parent=83 // pred_check_branch
        %1303 = sbr.rel (%p1301) target = $region92
      $region91: #{dqgn_forward.1} parent=83 // pred_region
        %p1304 = scmp.lt.s32.totalorder %s29, 3
        %s1305 = scalar_select %p1304, %s29, 3
        %s1306 = smul.addr %s1305, 3
        %s1307 = smul.addr %s1306, 8
        %s1308 = scalar_lea.vmem %s15, %s1307
      $region92: #{dqgn_forward.1} parent=83 // pred_fallthru
        _
    $region84: #{dqgn_forward.1} parent=5 // pred_fallthru
      _
  $region6: #{dqgn_forward.1} parent=0 // loop_footer
    %s27 = sadd.s32 1, %s23
  $region7: #{dqgn_forward.1} parent=0 // loop_footer_branch
    %22 = sbr.rel target = $region3
  $region8: #{dqgn_forward.1} parent=0 // loop_exit
    _

// kernel: dqgn_forward.1
$region0: #{dqgn_forward.1}
  #allocation0 [shape = 'u32[]', space=smem, size = 0x4, offset = 0x4, fixed_abs, tag = 'smem constant byte address 0x4 - core index']
  #allocation1 [shape = 'u32[144,128]{1,0:T(1,128)}', space=vmem, size = 0x12000, scoped, tag = 'internal scratch']
  #allocation2 [shape = 's32[1]{0}', space=sflag, size = 0x4, scoped, tag = 'scoped memory for dqgn_forward.1']
  #allocation3 [shape = 's32[1]{0:T(128)S(6)}', space=smem, size = 0x200, scoped, tag = 'prefetched SMEM operand 0']
  %s0 = inlined_call_operand.<no memory space> [shape: s32[1], index: 0, kind: input, shape index: {}]
  %s1 = inlined_call_operand.vmem [shape: f32[4,8,128], index: 1, kind: input, shape index: {}]
  %s2 = inlined_call_operand.vmem [shape: f32[8,8], index: 2, kind: input, shape index: {}]
  %s3 = inlined_call_operand.vmem [shape: f32[4,3,8,128], index: 3, kind: input, shape index: {}]
  %s4 = inlined_call_operand.vmem [shape: f32[1,128], index: 4, kind: input, shape index: {}]
  %s5 = inlined_call_operand.vmem [shape: f32[1,128], index: 5, kind: input, shape index: {}]
  %s6 = inlined_call_operand.vmem [shape: f32[128,128], index: 6, kind: input, shape index: {}]
  %s7 = inlined_call_operand.vmem [shape: f32[1,128], index: 7, kind: input, shape index: {}]
  %s8 = inlined_call_operand.vmem [shape: f32[128,128], index: 8, kind: input, shape index: {}]
  %s9 = inlined_call_operand.vmem [shape: f32[1,128], index: 9, kind: input, shape index: {}]
  %s10 = inlined_call_operand.vmem [shape: f32[128,256], index: 10, kind: input, shape index: {}]
  %s11 = inlined_call_operand.vmem [shape: f32[8,256], index: 11, kind: input, shape index: {}]
  %s12 = inlined_call_operand.vmem [shape: f32[256,32], index: 12, kind: input, shape index: {}]
  %s13 = inlined_call_operand.vmem [shape: f32[8,32], index: 13, kind: input, shape index: {}]
  %s14 = inlined_call_operand.vmem [shape: f32[4,8,32], index: 14, kind: output, shape index: {0}]
  %s15 = inlined_call_operand.vmem [shape: f32[4,3,8,128], index: 15, kind: output, shape index: {1}]
  %16 = xla_tuple %s14, %s15
  %s17 = sld [smem:[#allocation0]]
  $region93: #{dqgn_forward.1} parent=0
    _
  %s19 = ssub.s32 1, %s17
  %s20 = scalar_select 0, %s19, %s17
  %21 = sst [smem:[#allocation3]] %s0
  loop: start=0, step=1, limit=6
  $region2: #{dqgn_forward.1} parent=0 // loop_pre_header
    _
  $region3: #{dqgn_forward.1} parent=0 // loop_header
    %s23 = sphi 0, %s27
    %p24 = scmp.ge.s32.totalorder %s23, 6
    %s33 = sphi 0, %s35
    %s36 = sphi 0, %s33
    %s37 = sphi 0, %s36
    %s53 = sphi 0, %s37
    %s57 = sphi 0, %s57
    %s59 = sphi 0, %s57
    %s60 = sphi 0, %s59
    %s74 = sphi 0, %s60
    %s80 = sphi 0, %s82
    %s83 = sphi 0, %s80
    %s84 = sphi 0, %s83
    %s100 = sphi 0, %s84
    %s104 = sphi 0, %s104
    %s106 = sphi 0, %s104
    %s107 = sphi 0, %s106
    %s121 = sphi 0, %s107
    %s125 = sphi 0, %s125
    %s127 = sphi 0, %s125
    %s128 = sphi 0, %s127
    %s142 = sphi 0, %s128
    %s146 = sphi 0, %s146
    %s148 = sphi 0, %s146
    %s149 = sphi 0, %s148
    %s163 = sphi 0, %s149
    %s167 = sphi 0, %s167
    %s169 = sphi 0, %s167
    %s170 = sphi 0, %s169
    %s184 = sphi 0, %s170
    %s188 = sphi 0, %s188
    %s190 = sphi 0, %s188
    %s191 = sphi 0, %s190
    %s205 = sphi 0, %s191
    %s209 = sphi 0, %s209
    %s211 = sphi 0, %s209
    %s212 = sphi 0, %s211
    %s226 = sphi 0, %s212
    %s230 = sphi 0, %s230
    %s232 = sphi 0, %s230
    %s233 = sphi 0, %s232
    %s247 = sphi 0, %s233
    %s251 = sphi 0, %s251
    %s253 = sphi 0, %s251
    %s254 = sphi 0, %s253
    %s268 = sphi 0, %s254
    %s272 = sphi 0, %s272
    %s274 = sphi 0, %s272
    %s275 = sphi 0, %s274
    %s289 = sphi 0, %s275
    %s293 = sphi 0, %s293
    %s295 = sphi 0, %s293
    %s296 = sphi 0, %s295
    %s310 = sphi 0, %s296
    %s316 = sphi 0, %s318
    %s319 = sphi 0, %s316
    %s320 = sphi 0, %s319
    %s336 = sphi 0, %s320
    %s342 = sphi 0, %s344
    %s345 = sphi 0, %s342
    %s346 = sphi 0, %s345
    %s362 = sphi 0, %s346
  $region4: #{dqgn_forward.1} parent=0 // loop_header_branch
    %26 = sbr.rel (%p24) target = $region8
  $region5: #{dqgn_forward.1} parent=0 // loop_body
    %s28 = ssub.s32 %s23, 1
    %s29 = ssub.s32 %s23, 2
    %s30 = sadd.s32 %s23, 1
    %s31 = ssub.s32 %s23, %s30
    %p32 = scmp.eq.s32.totalorder %s31, 0
    %s34 = sadd.s32 %s33, 1
    %s35 = scalar_select %p32, %s33, %s34
    %p38 = pneg %p32
    %p39 = scmp.eq.s32.totalorder %s23, 3
    %p40 = por %p38, %p39
    %p41 = scmp.ne.s32.totalorder %s33, %s36
    %p42 = scmp.eq.s32.totalorder %s23, 0
    %p43 = por %p41, %p42
    %p44 = scmp.ne.s32.totalorder %s33, %s36
    %p45 = scmp.eq.s32.totalorder %s28, 3
    %p46 = por %p44, %p45
    %p47 = scmp.ne.s32.totalorder %s36, %s37
    %p48 = scmp.eq.s32.totalorder %s28, 0
    %p49 = por %p47, %p48
    %p50 = scmp.ne.s32.totalorder %s36, %s37
    %p51 = scmp.eq.s32.totalorder %s29, 3
    %p52 = por %p50, %p51
    %p54 = scmp.ne.s32.totalorder %s37, %s53
    %p55 = scmp.eq.s32.totalorder %s29, 0
    %p56 = por %p54, %p55
    %s58 = sadd.s32 %s57, 1
    %p61 = scmp.eq.s32.totalorder %s23, 3
    %p62 = scmp.ne.s32.totalorder %s57, %s59
    %p63 = scmp.eq.s32.totalorder %s23, 0
    %p64 = por %p62, %p63
    %p65 = scmp.ne.s32.totalorder %s57, %s59
    %p66 = scmp.eq.s32.totalorder %s28, 3
    %p67 = por %p65, %p66
    %p68 = scmp.ne.s32.totalorder %s59, %s60
    %p69 = scmp.eq.s32.totalorder %s28, 0
    %p70 = por %p68, %p69
    %p71 = scmp.ne.s32.totalorder %s59, %s60
    %p72 = scmp.eq.s32.totalorder %s29, 3
    %p73 = por %p71, %p72
    %p75 = scmp.ne.s32.totalorder %s60, %s74
    %p76 = scmp.eq.s32.totalorder %s29, 0
    %p77 = por %p75, %p76
    %s78 = ssub.s32 %s23, %s30
    %p79 = scmp.eq.s32.totalorder %s78, 0
    %s81 = sadd.s32 %s80, 1
    %s82 = scalar_select %p79, %s80, %s81
    %p85 = pneg %p79
    %p86 = scmp.eq.s32.totalorder %s23, 3
    %p87 = por %p85, %p86
    %p88 = scmp.ne.s32.totalorder %s80, %s83
    %p89 = scmp.eq.s32.totalorder %s23, 0
    %p90 = por %p88, %p89
    %p91 = scmp.ne.s32.totalorder %s80, %s83
    %p92 = scmp.eq.s32.totalorder %s28, 3
    %p93 = por %p91, %p92
    %p94 = scmp.ne.s32.totalorder %s83, %s84
    %p95 = scmp.eq.s32.totalorder %s28, 0
    %p96 = por %p94, %p95
    %p97 = scmp.ne.s32.totalorder %s83, %s84
    %p98 = scmp.eq.s32.totalorder %s29, 3
    %p99 = por %p97, %p98
    %p101 = scmp.ne.s32.totalorder %s84, %s100
    %p102 = scmp.eq.s32.totalorder %s29, 0
    %p103 = por %p101, %p102
    %s105 = sadd.s32 %s104, 1
    %p108 = scmp.eq.s32.totalorder %s23, 3
    %p109 = scmp.ne.s32.totalorder %s104, %s106
    %p110 = scmp.eq.s32.totalorder %s23, 0
    %p111 = por %p109, %p110
    %p112 = scmp.ne.s32.totalorder %s104, %s106
    %p113 = scmp.eq.s32.totalorder %s28, 3
    %p114 = por %p112, %p113
    %p115 = scmp.ne.s32.totalorder %s106, %s107
    %p116 = scmp.eq.s32.totalorder %s28, 0
    %p117 = por %p115, %p116
    %p118 = scmp.ne.s32.totalorder %s106, %s107
    %p119 = scmp.eq.s32.totalorder %s29, 3
    %p120 = por %p118, %p119
    %p122 = scmp.ne.s32.totalorder %s107, %s121
    %p123 = scmp.eq.s32.totalorder %s29, 0
    %p124 = por %p122, %p123
    %s126 = sadd.s32 %s125, 1
    %p129 = scmp.eq.s32.totalorder %s23, 3
    %p130 = scmp.ne.s32.totalorder %s125, %s127
    %p131 = scmp.eq.s32.totalorder %s23, 0
    %p132 = por %p130, %p131
    %p133 = scmp.ne.s32.totalorder %s125, %s127
    %p134 = scmp.eq.s32.totalorder %s28, 3
    %p135 = por %p133, %p134
    %p136 = scmp.ne.s32.totalorder %s127, %s128
    %p137 = scmp.eq.s32.totalorder %s28, 0
    %p138 = por %p136, %p137
    %p139 = scmp.ne.s32.totalorder %s127, %s128
    %p140 = scmp.eq.s32.totalorder %s29, 3
    %p141 = por %p139, %p140
    %p143 = scmp.ne.s32.totalorder %s128, %s142
    %p144 = scmp.eq.s32.totalorder %s29, 0
    %p145 = por %p143, %p144
    %s147 = sadd.s32 %s146, 1
    %p150 = scmp.eq.s32.totalorder %s23, 3
    %p151 = scmp.ne.s32.totalorder %s146, %s148
    %p152 = scmp.eq.s32.totalorder %s23, 0
    %p153 = por %p151, %p152
    %p154 = scmp.ne.s32.totalorder %s146, %s148
    %p155 = scmp.eq.s32.totalorder %s28, 3
    %p156 = por %p154, %p155
    %p157 = scmp.ne.s32.totalorder %s148, %s149
    %p158 = scmp.eq.s32.totalorder %s28, 0
    %p159 = por %p157, %p158
    %p160 = scmp.ne.s32.totalorder %s148, %s149
    %p161 = scmp.eq.s32.totalorder %s29, 3
    %p162 = por %p160, %p161
    %p164 = scmp.ne.s32.totalorder %s149, %s163
    %p165 = scmp.eq.s32.totalorder %s29, 0
    %p166 = por %p164, %p165
    %s168 = sadd.s32 %s167, 1
    %p171 = scmp.eq.s32.totalorder %s23, 3
    %p172 = scmp.ne.s32.totalorder %s167, %s169
    %p173 = scmp.eq.s32.totalorder %s23, 0
    %p174 = por %p172, %p173
    %p175 = scmp.ne.s32.totalorder %s167, %s169
    %p176 = scmp.eq.s32.totalorder %s28, 3
    %p177 = por %p175, %p176
    %p178 = scmp.ne.s32.totalorder %s169, %s170
    %p179 = scmp.eq.s32.totalorder %s28, 0
    %p180 = por %p178, %p179
    %p181 = scmp.ne.s32.totalorder %s169, %s170
    %p182 = scmp.eq.s32.totalorder %s29, 3
    %p183 = por %p181, %p182
    %p185 = scmp.ne.s32.totalorder %s170, %s184
    %p186 = scmp.eq.s32.totalorder %s29, 0
    %p187 = por %p185, %p186
    %s189 = sadd.s32 %s188, 1
    %p192 = scmp.eq.s32.totalorder %s23, 3
    %p193 = scmp.ne.s32.totalorder %s188, %s190
    %p194 = scmp.eq.s32.totalorder %s23, 0
    %p195 = por %p193, %p194
    %p196 = scmp.ne.s32.totalorder %s188, %s190
    %p197 = scmp.eq.s32.totalorder %s28, 3
    %p198 = por %p196, %p197
    %p199 = scmp.ne.s32.totalorder %s190, %s191
    %p200 = scmp.eq.s32.totalorder %s28, 0
    %p201 = por %p199, %p200
    %p202 = scmp.ne.s32.totalorder %s190, %s191
    %p203 = scmp.eq.s32.totalorder %s29, 3
    %p204 = por %p202, %p203
    %p206 = scmp.ne.s32.totalorder %s191, %s205
    %p207 = scmp.eq.s32.totalorder %s29, 0
    %p208 = por %p206, %p207
    %s210 = sadd.s32 %s209, 1
    %p213 = scmp.eq.s32.totalorder %s23, 3
    %p214 = scmp.ne.s32.totalorder %s209, %s211
    %p215 = scmp.eq.s32.totalorder %s23, 0
    %p216 = por %p214, %p215
    %p217 = scmp.ne.s32.totalorder %s209, %s211
    %p218 = scmp.eq.s32.totalorder %s28, 3
    %p219 = por %p217, %p218
    %p220 = scmp.ne.s32.totalorder %s211, %s212
    %p221 = scmp.eq.s32.totalorder %s28, 0
    %p222 = por %p220, %p221
    %p223 = scmp.ne.s32.totalorder %s211, %s212
    %p224 = scmp.eq.s32.totalorder %s29, 3
    %p225 = por %p223, %p224
    %p227 = scmp.ne.s32.totalorder %s212, %s226
    %p228 = scmp.eq.s32.totalorder %s29, 0
    %p229 = por %p227, %p228
    %s231 = sadd.s32 %s230, 1
    %p234 = scmp.eq.s32.totalorder %s23, 3
    %p235 = scmp.ne.s32.totalorder %s230, %s232
    %p236 = scmp.eq.s32.totalorder %s23, 0
    %p237 = por %p235, %p236
    %p238 = scmp.ne.s32.totalorder %s230, %s232
    %p239 = scmp.eq.s32.totalorder %s28, 3
    %p240 = por %p238, %p239
    %p241 = scmp.ne.s32.totalorder %s232, %s233
    %p242 = scmp.eq.s32.totalorder %s28, 0
    %p243 = por %p241, %p242
    %p244 = scmp.ne.s32.totalorder %s232, %s233
    %p245 = scmp.eq.s32.totalorder %s29, 3
    %p246 = por %p244, %p245
    %p248 = scmp.ne.s32.totalorder %s233, %s247
    %p249 = scmp.eq.s32.totalorder %s29, 0
    %p250 = por %p248, %p249
    %s252 = sadd.s32 %s251, 1
    %p255 = scmp.eq.s32.totalorder %s23, 3
    %p256 = scmp.ne.s32.totalorder %s251, %s253
    %p257 = scmp.eq.s32.totalorder %s23, 0
    %p258 = por %p256, %p257
    %p259 = scmp.ne.s32.totalorder %s251, %s253
    %p260 = scmp.eq.s32.totalorder %s28, 3
    %p261 = por %p259, %p260
    %p262 = scmp.ne.s32.totalorder %s253, %s254
    %p263 = scmp.eq.s32.totalorder %s28, 0
    %p264 = por %p262, %p263
    %p265 = scmp.ne.s32.totalorder %s253, %s254
    %p266 = scmp.eq.s32.totalorder %s29, 3
    %p267 = por %p265, %p266
    %p269 = scmp.ne.s32.totalorder %s254, %s268
    %p270 = scmp.eq.s32.totalorder %s29, 0
    %p271 = por %p269, %p270
    %s273 = sadd.s32 %s272, 1
    %p276 = scmp.eq.s32.totalorder %s23, 3
    %p277 = scmp.ne.s32.totalorder %s272, %s274
    %p278 = scmp.eq.s32.totalorder %s23, 0
    %p279 = por %p277, %p278
    %p280 = scmp.ne.s32.totalorder %s272, %s274
    %p281 = scmp.eq.s32.totalorder %s28, 3
    %p282 = por %p280, %p281
    %p283 = scmp.ne.s32.totalorder %s274, %s275
    %p284 = scmp.eq.s32.totalorder %s28, 0
    %p285 = por %p283, %p284
    %p286 = scmp.ne.s32.totalorder %s274, %s275
    %p287 = scmp.eq.s32.totalorder %s29, 3
    %p288 = por %p286, %p287
    %p290 = scmp.ne.s32.totalorder %s275, %s289
    %p291 = scmp.eq.s32.totalorder %s29, 0
    %p292 = por %p290, %p291
    %s294 = sadd.s32 %s293, 1
    %p297 = scmp.eq.s32.totalorder %s23, 3
    %p298 = scmp.ne.s32.totalorder %s293, %s295
    %p299 = scmp.eq.s32.totalorder %s23, 0
    %p300 = por %p298, %p299
    %p301 = scmp.ne.s32.totalorder %s293, %s295
    %p302 = scmp.eq.s32.totalorder %s28, 3
    %p303 = por %p301, %p302
    %p304 = scmp.ne.s32.totalorder %s295, %s296
    %p305 = scmp.eq.s32.totalorder %s28, 0
    %p306 = por %p304, %p305
    %p307 = scmp.ne.s32.totalorder %s295, %s296
    %p308 = scmp.eq.s32.totalorder %s29, 3
    %p309 = por %p307, %p308
    %p311 = scmp.ne.s32.totalorder %s296, %s310
    %p312 = scmp.eq.s32.totalorder %s29, 0
    %p313 = por %p311, %p312
    %s314 = ssub.s32 %s23, %s30
    %p315 = scmp.eq.s32.totalorder %s314, 0
    %s317 = sadd.s32 %s316, 1
    %s318 = scalar_select %p315, %s316, %s317
    %p321 = pneg %p315
    %p322 = scmp.eq.s32.totalorder %s23, 3
    %p323 = por %p321, %p322
    %p324 = scmp.ne.s32.totalorder %s316, %s319
    %p325 = scmp.eq.s32.totalorder %s23, 0
    %p326 = por %p324, %p325
    %p327 = scmp.ne.s32.totalorder %s316, %s319
    %p328 = scmp.eq.s32.totalorder %s28, 3
    %p329 = por %p327, %p328
    %p330 = scmp.ne.s32.totalorder %s319, %s320
    %p331 = scmp.eq.s32.totalorder %s28, 0
    %p332 = por %p330, %p331
    %p333 = scmp.ne.s32.totalorder %s319, %s320
    %p334 = scmp.eq.s32.totalorder %s29, 3
    %p335 = por %p333, %p334
    %p337 = scmp.ne.s32.totalorder %s320, %s336
    %p338 = scmp.eq.s32.totalorder %s29, 0
    %p339 = por %p337, %p338
    %s340 = ssub.s32 %s23, %s30
    %p341 = scmp.eq.s32.totalorder %s340, 0
    %s343 = sadd.s32 %s342, 1
    %s344 = scalar_select %p341, %s342, %s343
    %p347 = pneg %p341
    %p348 = scmp.eq.s32.totalorder %s23, 3
    %p349 = por %p347, %p348
    %p350 = scmp.ne.s32.totalorder %s342, %s345
    %p351 = scmp.eq.s32.totalorder %s23, 0
    %p352 = por %p350, %p351
    %p353 = scmp.ne.s32.totalorder %s342, %s345
    %p354 = scmp.eq.s32.totalorder %s28, 3
    %p355 = por %p353, %p354
    %p356 = scmp.ne.s32.totalorder %s345, %s346
    %p357 = scmp.eq.s32.totalorder %s28, 0
    %p358 = por %p356, %p357
    %p359 = scmp.ne.s32.totalorder %s345, %s346
    %p360 = scmp.eq.s32.totalorder %s29, 3
    %p361 = por %p359, %p360
    %p363 = scmp.ne.s32.totalorder %s346, %s362
    %p364 = scmp.eq.s32.totalorder %s29, 0
    %p365 = por %p363, %p364
    %p366 = scmp.le.s32.totalorder 1, %s23
    %p367 = scmp.lt.s32.totalorder %s23, 5
    %p368 = pnand %p366, %p367
    %p369 = pneg %p368
    // Predicated region
    $region9: #{dqgn_forward.1} parent=5 // pred_check
      _
    $region10: #{dqgn_forward.1} parent=5 // pred_check_branch
      %371 = sbr.rel (%p368) target = $region12
    $region11: #{dqgn_forward.1} parent=5 // pred_region
      %s372 = ssub.s32 %s23, 1
      // Predicated region
      $region13: #{dqgn_forward.1} parent=11 // pred_check
        %p373 = pneg %p70
      $region14: #{dqgn_forward.1} parent=11 // pred_check_branch
        %375 = sbr.rel (%p373) target = $region16
      $region15: #{dqgn_forward.1} parent=11 // pred_region
        _
      $region16: #{dqgn_forward.1} parent=11 // pred_fallthru
        _
      // Predicated region
      $region17: #{dqgn_forward.1} parent=11 // pred_check
        %p376 = pneg %p117
      $region18: #{dqgn_forward.1} parent=11 // pred_check_branch
        %378 = sbr.rel (%p376) target = $region20
      $region19: #{dqgn_forward.1} parent=11 // pred_region
        _
      $region20: #{dqgn_forward.1} parent=11 // pred_fallthru
        _
      // Predicated region
      $region21: #{dqgn_forward.1} parent=11 // pred_check
        %p379 = pneg %p138
      $region22: #{dqgn_forward.1} parent=11 // pred_check_branch
        %381 = sbr.rel (%p379) target = $region24
      $region23: #{dqgn_forward.1} parent=11 // pred_region
        _
      $region24: #{dqgn_forward.1} parent=11 // pred_fallthru
        _
      // Predicated region
      $region25: #{dqgn_forward.1} parent=11 // pred_check
        %p382 = pneg %p159
      $region26: #{dqgn_forward.1} parent=11 // pred_check_branch
        %384 = sbr.rel (%p382) target = $region28
      $region27: #{dqgn_forward.1} parent=11 // pred_region
        _
      $region28: #{dqgn_forward.1} parent=11 // pred_fallthru
        _
      // Predicated region
      $region29: #{dqgn_forward.1} parent=11 // pred_check
        %p385 = pneg %p180
      $region30: #{dqgn_forward.1} parent=11 // pred_check_branch
        %387 = sbr.rel (%p385) target = $region32
      $region31: #{dqgn_forward.1} parent=11 // pred_region
        _
      $region32: #{dqgn_forward.1} parent=11 // pred_fallthru
        _
      // Predicated region
      $region33: #{dqgn_forward.1} parent=11 // pred_check
        %p388 = pneg %p201
      $region34: #{dqgn_forward.1} parent=11 // pred_check_branch
        %390 = sbr.rel (%p388) target = $region36
      $region35: #{dqgn_forward.1} parent=11 // pred_region
        _
      $region36: #{dqgn_forward.1} parent=11 // pred_fallthru
        _
      // Predicated region
      $region37: #{dqgn_forward.1} parent=11 // pred_check
        %p391 = pneg %p222
      $region38: #{dqgn_forward.1} parent=11 // pred_check_branch
        %393 = sbr.rel (%p391) target = $region40
      $region39: #{dqgn_forward.1} parent=11 // pred_region
        _
      $region40: #{dqgn_forward.1} parent=11 // pred_fallthru
        _
      // Predicated region
      $region41: #{dqgn_forward.1} parent=11 // pred_check
        %p394 = pneg %p243
      $region42: #{dqgn_forward.1} parent=11 // pred_check_branch
        %396 = sbr.rel (%p394) target = $region44
      $region43: #{dqgn_forward.1} parent=11 // pred_region
        _
      $region44: #{dqgn_forward.1} parent=11 // pred_fallthru
        _
      // Predicated region
      $region45: #{dqgn_forward.1} parent=11 // pred_check
        %p397 = pneg %p264
      $region46: #{dqgn_forward.1} parent=11 // pred_check_branch
        %399 = sbr.rel (%p397) target = $region48
      $region47: #{dqgn_forward.1} parent=11 // pred_region
        _
      $region48: #{dqgn_forward.1} parent=11 // pred_fallthru
        _
      // Predicated region
      $region49: #{dqgn_forward.1} parent=11 // pred_check
        %p400 = pneg %p285
      $region50: #{dqgn_forward.1} parent=11 // pred_check_branch
        %402 = sbr.rel (%p400) target = $region52
      $region51: #{dqgn_forward.1} parent=11 // pred_region
        _
      $region52: #{dqgn_forward.1} parent=11 // pred_fallthru
        _
      // Predicated region
      $region53: #{dqgn_forward.1} parent=11 // pred_check
        %p403 = pneg %p306
      $region54: #{dqgn_forward.1} parent=11 // pred_check_branch
        %405 = sbr.rel (%p403) target = $region56
      $region55: #{dqgn_forward.1} parent=11 // pred_region
        _
      $region56: #{dqgn_forward.1} parent=11 // pred_fallthru
        _
    $region12: #{dqgn_forward.1} parent=5 // pred_fallthru
      _
    %p406 = scmp.lt.s32.totalorder %s23, 4
    // Predicated region
    $region57: #{dqgn_forward.1} parent=5 // pred_check
      %p407 = pneg %p406
    $region58: #{dqgn_forward.1} parent=5 // pred_check_branch
      %409 = sbr.rel (%p407) target = $region60
    $region59: #{dqgn_forward.1} parent=5 // pred_region
      // Predicated region
      $region61: #{dqgn_forward.1} parent=59 // pred_check
        %p410 = pneg %p43
      $region62: #{dqgn_forward.1} parent=59 // pred_check_branch
        %412 = sbr.rel (%p410) target = $region64
      $region63: #{dqgn_forward.1} parent=59 // pred_region
        %p413 = scmp.lt.s32.totalorder %s23, 3
        %s414 = scalar_select %p413, %s23, 3
        %s415 = smul.addr %s414, 8
        %s416 = scalar_lea.vmem %s1, %s415
      $region64: #{dqgn_forward.1} parent=59 // pred_fallthru
        _
      // Predicated region
      $region65: #{dqgn_forward.1} parent=59 // pred_check
        %p417 = pneg %p90
      $region66: #{dqgn_forward.1} parent=59 // pred_check_branch
        %419 = sbr.rel (%p417) target = $region68
      $region67: #{dqgn_forward.1} parent=59 // pred_region
        %p420 = scmp.lt.s32.totalorder %s23, 3
        %s421 = scalar_select %p420, %s23, 3
        %s422 = smul.addr %s421, 3
        %s423 = smul.addr %s422, 8
        %s424 = scalar_lea.vmem %s3, %s423
      $region68: #{dqgn_forward.1} parent=59 // pred_fallthru
        _
    $region60: #{dqgn_forward.1} parent=5 // pred_fallthru
      _
    %p425 = scmp.le.s32.totalorder 1, %s23
    %p426 = scmp.lt.s32.totalorder %s23, 5
    %p427 = pnand %p425, %p426
    %p428 = pneg %p427
    // Predicated region
    $region69: #{dqgn_forward.1} parent=5 // pred_check
      _
    $region70: #{dqgn_forward.1} parent=5 // pred_check_branch
      %430 = sbr.rel (%p427) target = $region72
    $region71: #{dqgn_forward.1} parent=5 // pred_region
      %s431 = ssub.s32 %s23, 1
      %p432 = scmp.lt.s32.totalorder %s28, 3
      %s433 = scalar_select %p432, %s28, 3
      %s434 = smul.addr %s433, 8
      %s435 = scalar_lea.vmem %s1, %s434
      %p436 = pneg %p49
      %p437 = pneg %p46
      %p438 = pneg %p70
      %p439 = pneg %p67
      %p440 = scmp.lt.s32.totalorder %s28, 3
      %s441 = scalar_select %p440, %s28, 3
      %s442 = smul.addr %s441, 3
      %s443 = smul.addr %s442, 8
      %s444 = scalar_lea.vmem %s3, %s443
      %p445 = pneg %p96
      %p446 = pneg %p93
      %p447 = pneg %p117
      %p448 = pneg %p114
      %p449 = pneg %p138
      %p450 = pneg %p135
      %p451 = pneg %p159
      %p452 = pneg %p156
      %p453 = pneg %p180
      %p454 = pneg %p177
      %p455 = pneg %p201
      %p456 = pneg %p198
      %p457 = pneg %p222
      %p458 = pneg %p219
      %p459 = pneg %p243
      %p460 = pneg %p240
      %p461 = pneg %p264
      %p462 = pneg %p261
      %p463 = pneg %p285
      %p464 = pneg %p282
      %p465 = pneg %p306
      %p466 = pneg %p303
      %p467 = pneg %p332
      %p468 = pneg %p329
      %p469 = scmp.lt.s32.totalorder %s28, 3
      %s470 = scalar_select %p469, %s28, 3
      %s471 = smul.addr %s470, 8
      %s472 = scalar_lea.vmem %s14, %s471
      %p473 = pneg %p358
      %p474 = pneg %p355
      %p475 = scmp.lt.s32.totalorder %s28, 3
      %s476 = scalar_select %p475, %s28, 3
      %s477 = smul.addr %s476, 3
      %s478 = smul.addr %s477, 8
      %s479 = scalar_lea.vmem %s15, %s478
      %p480 = scmp.lt.s32.totalorder %s28, 3
      %s481 = scalar_select %p480, %s28, 3
      %s482 = smul.addr %s481, 8
      %s483 = scalar_lea.vmem %s1, %s482
      %p484 = scmp.lt.s32.totalorder %s28, 3
      %s485 = scalar_select %p484, %s28, 3
      %s486 = smul.addr %s485, 3
      %s487 = smul.addr %s486, 8
      %s488 = scalar_lea.vmem %s3, %s487
      %p489 = scmp.lt.s32.totalorder %s28, 3
      %s490 = scalar_select %p489, %s28, 3
      %s491 = smul.addr %s490, 8
      %s492 = scalar_lea.vmem %s14, %s491
      %p493 = scmp.lt.s32.totalorder %s28, 3
      %s494 = scalar_select %p493, %s28, 3
      %s495 = smul.addr %s494, 3
      %s496 = smul.addr %s495, 8
      %s497 = scalar_lea.vmem %s15, %s496
      %v498 = vld [vmem:[%s488] sm:$0xff]
      %s499 = scalar_lea.vmem %s488, 8
      %v500 = vld [vmem:[%s499] sm:$0xff]
      %s501 = scalar_lea.vmem %s488, 16
      %v502 = vld [vmem:[%s501] sm:$0xff]
      %503 = vst [vmem:[%s497] sm:$0xff] %v498
      %s504 = scalar_lea.vmem %s497, 8
      %505 = vst [vmem:[%s504] sm:$0xff] %v500
      %s506 = scalar_lea.vmem %s497, 16
      %507 = vst [vmem:[%s506] sm:$0xff] %v502
      %v508 = vld [vmem:[%s2] sm:$0xff]
      %v509 = vld [vmem:[%s483] sm:$0xff]
      %v510 = vld [vmem:[%s4] sm:$0x1]
      %v512 = vlaneseq
      %v513 = vshrl.u32 %v512, 7
      %v514 = vsub.s32 0, %v513
      %v515 = vrot.slane %v510, %v514
      %v517 = vmul.f32 %v509, %v515
      %v518 = vld [vmem:[%s5] sm:$0x1]
      %v520 = vlaneseq
      %v521 = vshrl.u32 %v520, 7
      %v522 = vsub.s32 0, %v521
      %v523 = vrot.slane %v518, %v522
      %vm525 = vcmask 64512
      %v527 = vsel %vm525, %v508, 0
      %529 = vmatprep.subr.mxu0 0.0
      %530 = vmatpush1.msra.mxu0 %v517
      %531 = vmatprep.subr.mxu0 0.0
      %532 = vmatpush1.msra.mxu0 0.0
      %533 = vmatprep.subr.mxu0 0.0
      %534 = vmatpush1.msra.mxu0 0.0
      %535 = vmatprep.subr.mxu0 0.0
      %536 = vmatpush1.msra.mxu0 0.0
      %537 = vmatprep.subr.mxu0 0.0
      %538 = vmatpush1.msra.mxu0 0.0
      %539 = vmatprep.subr.mxu0 0.0
      %540 = vmatpush1.msra.mxu0 0.0
      %541 = vmatprep.subr.mxu0 0.0
      %542 = vmatpush1.msra.mxu0 0.0
      %543 = vmatprep.subr.mxu0 0.0
      %544 = vmatpush1.msra.mxu0 0.0
      %545 = vmatprep.subr.mxu0 0.0
      %546 = vmatpush1.msra.mxu0 0.0
      %547 = vmatprep.subr.mxu0 0.0
      %548 = vmatpush1.msra.mxu0 0.0
      %549 = vmatprep.subr.mxu0 0.0
      %550 = vmatpush1.msra.mxu0 0.0
      %551 = vmatprep.subr.mxu0 0.0
      %552 = vmatpush1.msra.mxu0 0.0
      %553 = vmatprep.subr.mxu0 0.0
      %554 = vmatpush1.msra.mxu0 0.0
      %555 = vmatprep.subr.mxu0 0.0
      %556 = vmatpush1.msra.mxu0 0.0
      %557 = vmatprep.subr.mxu0 0.0
      %558 = vmatpush1.msra.mxu0 0.0
      %559 = vmatprep.subr.mxu0 0.0
      %560 = vmatpush1.msra.mxu0 0.0
      %561 = vmatprep.subr.mxu0 0.0
      %562 = vmatpush1.msra.mxu0 0.0
      %563 = vmatprep.subr.mxu0 0.0
      %564 = vmatpush1.msra.mxu0 0.0
      %565 = vmatprep.subr.mxu0 0.0
      %566 = vmatpush1.msra.mxu0 0.0
      %567 = vmatprep.subr.mxu0 0.0
      %568 = vmatpush1.msra.mxu0 0.0
      %569 = vmatprep.subr.mxu0 0.0
      %570 = vmatpush1.msra.mxu0 0.0
      %571 = vmatprep.subr.mxu0 0.0
      %572 = vmatpush1.msra.mxu0 0.0
      %573 = vmatprep.subr.mxu0 0.0
      %574 = vmatpush1.msra.mxu0 0.0
      %575 = vmatprep.subr.mxu0 0.0
      %576 = vmatpush1.msra.mxu0 0.0
      %577 = vmatprep.subr.mxu0 0.0
      %578 = vmatpush1.msra.mxu0 0.0
      %579 = vmatprep.subr.mxu0 0.0
      %580 = vmatpush1.msra.mxu0 0.0
      %581 = vmatprep.subr.mxu0 0.0
      %582 = vmatpush1.msra.mxu0 0.0
      %583 = vmatprep.subr.mxu0 0.0
      %584 = vmatpush1.msra.mxu0 0.0
      %585 = vmatprep.subr.mxu0 0.0
      %586 = vmatpush1.msra.mxu0 0.0
      %587 = vmatprep.subr.mxu0 0.0
      %588 = vmatpush1.msra.mxu0 0.0
      %589 = vmatprep.subr.mxu0 0.0
      %590 = vmatpush1.msra.mxu0 0.0
      %591 = vmatprep.subr.mxu0 0.0
      %592 = vmatpush1.msra.mxu0 0.0
      %593 = vmatprep.mubr.f32.mxu0 0.0
      %594 = vmatmul.mubr.f32.gmra.mrb[0].mxu0 %v527
      %v595 = vpop.f32.mrb[0].mxu0
      %v596 = vadd.f32 %v523, %v595
      %v597 = vpop.f32.mrb[0].mxu0
      %598 = vdwg.mxu0
      %v599 = vmax.f32 %v596, 0.0
      %v600 = vmul.f32 %v599, %v498
      %v601 = vld [vmem:[%s6] sm:$0xff]
      %v602 = vld [vmem:[%s6 + $0x8] sm:$0xff]
      %v603 = vld [vmem:[%s6 + $0x10] sm:$0xff]
      %v604 = vld [vmem:[%s6 + $0x18] sm:$0xff]
      %v605 = vld [vmem:[%s6 + $0x20] sm:$0xff]
      %v606 = vld [vmem:[%s6 + $0x28] sm:$0xff]
      %v607 = vld [vmem:[%s6 + $0x30] sm:$0xff]
      %v608 = vld [vmem:[%s6 + $0x38] sm:$0xff]
      %v609 = vld [vmem:[%s6 + $0x40] sm:$0xff]
      %v610 = vld [vmem:[%s6 + $0x48] sm:$0xff]
      %v611 = vld [vmem:[%s6 + $0x50] sm:$0xff]
      %v612 = vld [vmem:[%s6 + $0x58] sm:$0xff]
      %v613 = vld [vmem:[%s6 + $0x60] sm:$0xff]
      %v614 = vld [vmem:[%s6 + $0x68] sm:$0xff]
      %v615 = vld [vmem:[%s6 + $0x70] sm:$0xff]
      %v616 = vld [vmem:[%s6 + $0x78] sm:$0xff]
      %617 = vmatprep.subr.mxu0 0.0
      %618 = vmatpush1.msra.mxu0 %v601
      %619 = vmatprep.subr.mxu0 0.0
      %620 = vmatpush1.msra.mxu0 %v602
      %621 = vmatprep.subr.mxu0 0.0
      %622 = vmatpush1.msra.mxu0 %v603
      %623 = vmatprep.subr.mxu0 0.0
      %624 = vmatpush1.msra.mxu0 %v604
      %625 = vmatprep.subr.mxu0 0.0
      %626 = vmatpush1.msra.mxu0 %v605
      %627 = vmatprep.subr.mxu0 0.0
      %628 = vmatpush1.msra.mxu0 %v606
      %629 = vmatprep.subr.mxu0 0.0
      %630 = vmatpush1.msra.mxu0 %v607
      %631 = vmatprep.subr.mxu0 0.0
      %632 = vmatpush1.msra.mxu0 %v608
      %633 = vmatprep.subr.mxu0 0.0
      %634 = vmatpush1.msra.mxu0 %v609
      %635 = vmatprep.subr.mxu0 0.0
      %636 = vmatpush1.msra.mxu0 %v610
      %637 = vmatprep.subr.mxu0 0.0
      %638 = vmatpush1.msra.mxu0 %v611
      %639 = vmatprep.subr.mxu0 0.0
      %640 = vmatpush1.msra.mxu0 %v612
      %641 = vmatprep.subr.mxu0 0.0
      %642 = vmatpush1.msra.mxu0 %v613
      %643 = vmatprep.subr.mxu0 0.0
      %644 = vmatpush1.msra.mxu0 %v614
      %645 = vmatprep.subr.mxu0 0.0
      %646 = vmatpush1.msra.mxu0 %v615
      %647 = vmatprep.subr.mxu0 0.0
      %648 = vmatpush1.msra.mxu0 %v616
      %649 = vmatprep.subr.mxu0 0.0
      %650 = vmatpush1.msra.mxu0 0.0
      %651 = vmatprep.subr.mxu0 0.0
      %652 = vmatpush1.msra.mxu0 0.0
      %653 = vmatprep.subr.mxu0 0.0
      %654 = vmatpush1.msra.mxu0 0.0
      %655 = vmatprep.subr.mxu0 0.0
      %656 = vmatpush1.msra.mxu0 0.0
      %657 = vmatprep.subr.mxu0 0.0
      %658 = vmatpush1.msra.mxu0 0.0
      %659 = vmatprep.subr.mxu0 0.0
      %660 = vmatpush1.msra.mxu0 0.0
      %661 = vmatprep.subr.mxu0 0.0
      %662 = vmatpush1.msra.mxu0 0.0
      %663 = vmatprep.subr.mxu0 0.0
      %664 = vmatpush1.msra.mxu0 0.0
      %665 = vmatprep.subr.mxu0 0.0
      %666 = vmatpush1.msra.mxu0 0.0
      %667 = vmatprep.subr.mxu0 0.0
      %668 = vmatpush1.msra.mxu0 0.0
      %669 = vmatprep.subr.mxu0 0.0
      %670 = vmatpush1.msra.mxu0 0.0
      %671 = vmatprep.subr.mxu0 0.0
      %672 = vmatpush1.msra.mxu0 0.0
      %673 = vmatprep.subr.mxu0 0.0
      %674 = vmatpush1.msra.mxu0 0.0
      %675 = vmatprep.subr.mxu0 0.0
      %676 = vmatpush1.msra.mxu0 0.0
      %677 = vmatprep.subr.mxu0 0.0
      %678 = vmatpush1.msra.mxu0 0.0
      %679 = vmatprep.subr.mxu0 0.0
      %680 = vmatpush1.msra.mxu0 0.0
      %681 = vmatprep.mubr.f32.mxu0 0.0
      %682 = vmatmul.mubr.f32.gmra.mrb[0].mxu0 %v600
      %v683 = vpop.f32.mrb[0].mxu0
      %v684 = vadd.f32 0.0, %v683
      %v685 = vpop.f32.mrb[0].mxu0
      %686 = vdwg.mxu0
      %v687 = vld [vmem:[%s7] sm:$0x1]
      %v689 = vlaneseq
      %v690 = vshrl.u32 %v689, 7
      %v691 = vsub.s32 0, %v690
      %v692 = vrot.slane %v687, %v691
      %694 = vmatprep.subr.mxu0 0.0
      %695 = vmatpush1.msra.mxu0 %v684
      %696 = vmatprep.subr.mxu0 0.0
      %697 = vmatpush1.msra.mxu0 0.0
      %698 = vmatprep.subr.mxu0 0.0
      %699 = vmatpush1.msra.mxu0 0.0
      %700 = vmatprep.subr.mxu0 0.0
      %701 = vmatpush1.msra.mxu0 0.0
      %702 = vmatprep.subr.mxu0 0.0
      %703 = vmatpush1.msra.mxu0 0.0
      %704 = vmatprep.subr.mxu0 0.0
      %705 = vmatpush1.msra.mxu0 0.0
      %706 = vmatprep.subr.mxu0 0.0
      %707 = vmatpush1.msra.mxu0 0.0
      %708 = vmatprep.subr.mxu0 0.0
      %709 = vmatpush1.msra.mxu0 0.0
      %710 = vmatprep.subr.mxu0 0.0
      %711 = vmatpush1.msra.mxu0 0.0
      %712 = vmatprep.subr.mxu0 0.0
      %713 = vmatpush1.msra.mxu0 0.0
      %714 = vmatprep.subr.mxu0 0.0
      %715 = vmatpush1.msra.mxu0 0.0
      %716 = vmatprep.subr.mxu0 0.0
      %717 = vmatpush1.msra.mxu0 0.0
      %718 = vmatprep.subr.mxu0 0.0
      %719 = vmatpush1.msra.mxu0 0.0
      %720 = vmatprep.subr.mxu0 0.0
      %721 = vmatpush1.msra.mxu0 0.0
      %722 = vmatprep.subr.mxu0 0.0
      %723 = vmatpush1.msra.mxu0 0.0
      %724 = vmatprep.subr.mxu0 0.0
      %725 = vmatpush1.msra.mxu0 0.0
      %726 = vmatprep.subr.mxu0 0.0
      %727 = vmatpush1.msra.mxu0 0.0
      %728 = vmatprep.subr.mxu0 0.0
      %729 = vmatpush1.msra.mxu0 0.0
      %730 = vmatprep.subr.mxu0 0.0
      %731 = vmatpush1.msra.mxu0 0.0
      %732 = vmatprep.subr.mxu0 0.0
      %733 = vmatpush1.msra.mxu0 0.0
      %734 = vmatprep.subr.mxu0 0.0
      %735 = vmatpush1.msra.mxu0 0.0
      %736 = vmatprep.subr.mxu0 0.0
      %737 = vmatpush1.msra.mxu0 0.0
      %738 = vmatprep.subr.mxu0 0.0
      %739 = vmatpush1.msra.mxu0 0.0
      %740 = vmatprep.subr.mxu0 0.0
      %741 = vmatpush1.msra.mxu0 0.0
      %742 = vmatprep.subr.mxu0 0.0
      %743 = vmatpush1.msra.mxu0 0.0
      %744 = vmatprep.subr.mxu0 0.0
      %745 = vmatpush1.msra.mxu0 0.0
      %746 = vmatprep.subr.mxu0 0.0
      %747 = vmatpush1.msra.mxu0 0.0
      %748 = vmatprep.subr.mxu0 0.0
      %749 = vmatpush1.msra.mxu0 0.0
      %750 = vmatprep.subr.mxu0 0.0
      %751 = vmatpush1.msra.mxu0 0.0
      %752 = vmatprep.subr.mxu0 0.0
      %753 = vmatpush1.msra.mxu0 0.0
      %754 = vmatprep.subr.mxu0 0.0
      %755 = vmatpush1.msra.mxu0 0.0
      %756 = vmatprep.subr.mxu0 0.0
      %757 = vmatpush1.msra.mxu0 0.0
      %758 = vmatprep.mubr.f32.mxu0 0.0
      %759 = vmatmul.mubr.f32.gmra.mrb[0].mxu0 %v527
      %v760 = vpop.f32.mrb[0].mxu0
      %v761 = vadd.f32 %v692, %v760
      %v762 = vpop.f32.mrb[0].mxu0
      %763 = vdwg.mxu0
      %v764 = vmax.f32 %v761, 0.0
      %v765 = vmul.f32 %v764, %v500
      %v766 = vld [vmem:[%s8] sm:$0xff]
      %v767 = vld [vmem:[%s8 + $0x8] sm:$0xff]
      %v768 = vld [vmem:[%s8 + $0x10] sm:$0xff]
      %v769 = vld [vmem:[%s8 + $0x18] sm:$0xff]
      %v770 = vld [vmem:[%s8 + $0x20] sm:$0xff]
      %v771 = vld [vmem:[%s8 + $0x28] sm:$0xff]
      %v772 = vld [vmem:[%s8 + $0x30] sm:$0xff]
      %v773 = vld [vmem:[%s8 + $0x38] sm:$0xff]
      %v774 = vld [vmem:[%s8 + $0x40] sm:$0xff]
      %v775 = vld [vmem:[%s8 + $0x48] sm:$0xff]
      %v776 = vld [vmem:[%s8 + $0x50] sm:$0xff]
      %v777 = vld [vmem:[%s8 + $0x58] sm:$0xff]
      %v778 = vld [vmem:[%s8 + $0x60] sm:$0xff]
      %v779 = vld [vmem:[%s8 + $0x68] sm:$0xff]
      %v780 = vld [vmem:[%s8 + $0x70] sm:$0xff]
      %v781 = vld [vmem:[%s8 + $0x78] sm:$0xff]
      %782 = vmatprep.subr.mxu0 0.0
      %783 = vmatpush1.msra.mxu0 %v766
      %784 = vmatprep.subr.mxu0 0.0
      %785 = vmatpush1.msra.mxu0 %v767
      %786 = vmatprep.subr.mxu0 0.0
      %787 = vmatpush1.msra.mxu0 %v768
      %788 = vmatprep.subr.mxu0 0.0
      %789 = vmatpush1.msra.mxu0 %v769
      %790 = vmatprep.subr.mxu0 0.0
      %791 = vmatpush1.msra.mxu0 %v770
      %792 = vmatprep.subr.mxu0 0.0
      %793 = vmatpush1.msra.mxu0 %v771
      %794 = vmatprep.subr.mxu0 0.0
      %795 = vmatpush1.msra.mxu0 %v772
      %796 = vmatprep.subr.mxu0 0.0
      %797 = vmatpush1.msra.mxu0 %v773
      %798 = vmatprep.subr.mxu0 0.0
      %799 = vmatpush1.msra.mxu0 %v774
      %800 = vmatprep.subr.mxu0 0.0
      %801 = vmatpush1.msra.mxu0 %v775
      %802 = vmatprep.subr.mxu0 0.0
      %803 = vmatpush1.msra.mxu0 %v776
      %804 = vmatprep.subr.mxu0 0.0
      %805 = vmatpush1.msra.mxu0 %v777
      %806 = vmatprep.subr.mxu0 0.0
      %807 = vmatpush1.msra.mxu0 %v778
      %808 = vmatprep.subr.mxu0 0.0
      %809 = vmatpush1.msra.mxu0 %v779
      %810 = vmatprep.subr.mxu0 0.0
      %811 = vmatpush1.msra.mxu0 %v780
      %812 = vmatprep.subr.mxu0 0.0
      %813 = vmatpush1.msra.mxu0 %v781
      %814 = vmatprep.subr.mxu0 0.0
      %815 = vmatpush1.msra.mxu0 0.0
      %816 = vmatprep.subr.mxu0 0.0
      %817 = vmatpush1.msra.mxu0 0.0
      %818 = vmatprep.subr.mxu0 0.0
      %819 = vmatpush1.msra.mxu0 0.0
      %820 = vmatprep.subr.mxu0 0.0
      %821 = vmatpush1.msra.mxu0 0.0
      %822 = vmatprep.subr.mxu0 0.0
      %823 = vmatpush1.msra.mxu0 0.0
      %824 = vmatprep.subr.mxu0 0.0
      %825 = vmatpush1.msra.mxu0 0.0
      %826 = vmatprep.subr.mxu0 0.0
      %827 = vmatpush1.msra.mxu0 0.0
      %828 = vmatprep.subr.mxu0 0.0
      %829 = vmatpush1.msra.mxu0 0.0
      %830 = vmatprep.subr.mxu0 0.0
      %831 = vmatpush1.msra.mxu0 0.0
      %832 = vmatprep.subr.mxu0 0.0
      %833 = vmatpush1.msra.mxu0 0.0
      %834 = vmatprep.subr.mxu0 0.0
      %835 = vmatpush1.msra.mxu0 0.0
      %836 = vmatprep.subr.mxu0 0.0
      %837 = vmatpush1.msra.mxu0 0.0
      %838 = vmatprep.subr.mxu0 0.0
      %839 = vmatpush1.msra.mxu0 0.0
      %840 = vmatprep.subr.mxu0 0.0
      %841 = vmatpush1.msra.mxu0 0.0
      %842 = vmatprep.subr.mxu0 0.0
      %843 = vmatpush1.msra.mxu0 0.0
      %844 = vmatprep.subr.mxu0 0.0
      %845 = vmatpush1.msra.mxu0 0.0
      %846 = vmatprep.mubr.f32.mxu0 0.0
      %847 = vmatmul.mubr.f32.gmra.mrb[0].mxu0 %v765
      %v848 = vpop.f32.mrb[0].mxu0
      %v849 = vadd.f32 0.0, %v848
      %v850 = vpop.f32.mrb[0].mxu0
      %851 = vdwg.mxu0
      %v852 = vld [vmem:[%s9] sm:$0x1]
      %v854 = vlaneseq
      %v855 = vshrl.u32 %v854, 7
      %v856 = vsub.s32 0, %v855
      %v857 = vrot.slane %v852, %v856
      %859 = vmatprep.subr.mxu0 0.0
      %860 = vmatpush1.msra.mxu0 %v849
      %861 = vmatprep.subr.mxu0 0.0
      %862 = vmatpush1.msra.mxu0 0.0
      %863 = vmatprep.subr.mxu0 0.0
      %864 = vmatpush1.msra.mxu0 0.0
      %865 = vmatprep.subr.mxu0 0.0
      %866 = vmatpush1.msra.mxu0 0.0
      %867 = vmatprep.subr.mxu0 0.0
      %868 = vmatpush1.msra.mxu0 0.0
      %869 = vmatprep.subr.mxu0 0.0
      %870 = vmatpush1.msra.mxu0 0.0
      %871 = vmatprep.subr.mxu0 0.0
      %872 = vmatpush1.msra.mxu0 0.0
      %873 = vmatprep.subr.mxu0 0.0
      %874 = vmatpush1.msra.mxu0 0.0
      %875 = vmatprep.subr.mxu0 0.0
      %876 = vmatpush1.msra.mxu0 0.0
      %877 = vmatprep.subr.mxu0 0.0
      %878 = vmatpush1.msra.mxu0 0.0
      %879 = vmatprep.subr.mxu0 0.0
      %880 = vmatpush1.msra.mxu0 0.0
      %881 = vmatprep.subr.mxu0 0.0
      %882 = vmatpush1.msra.mxu0 0.0
      %883 = vmatprep.subr.mxu0 0.0
      %884 = vmatpush1.msra.mxu0 0.0
      %885 = vmatprep.subr.mxu0 0.0
      %886 = vmatpush1.msra.mxu0 0.0
      %887 = vmatprep.subr.mxu0 0.0
      %888 = vmatpush1.msra.mxu0 0.0
      %889 = vmatprep.subr.mxu0 0.0
      %890 = vmatpush1.msra.mxu0 0.0
      %891 = vmatprep.subr.mxu0 0.0
      %892 = vmatpush1.msra.mxu0 0.0
      %893 = vmatprep.subr.mxu0 0.0
      %894 = vmatpush1.msra.mxu0 0.0
      %895 = vmatprep.subr.mxu0 0.0
      %896 = vmatpush1.msra.mxu0 0.0
      %897 = vmatprep.subr.mxu0 0.0
      %898 = vmatpush1.msra.mxu0 0.0
      %899 = vmatprep.subr.mxu0 0.0
      %900 = vmatpush1.msra.mxu0 0.0
      %901 = vmatprep.subr.mxu0 0.0
      %902 = vmatpush1.msra.mxu0 0.0
      %903 = vmatprep.subr.mxu0 0.0
      %904 = vmatpush1.msra.mxu0 0.0
      %905 = vmatprep.subr.mxu0 0.0
      %906 = vmatpush1.msra.mxu0 0.0
      %907 = vmatprep.subr.mxu0 0.0
      %908 = vmatpush1.msra.mxu0 0.0
      %909 = vmatprep.subr.mxu0 0.0
      %910 = vmatpush1.msra.mxu0 0.0
      %911 = vmatprep.subr.mxu0 0.0
      %912 = vmatpush1.msra.mxu0 0.0
      %913 = vmatprep.subr.mxu0 0.0
      %914 = vmatpush1.msra.mxu0 0.0
      %915 = vmatprep.subr.mxu0 0.0
      %916 = vmatpush1.msra.mxu0 0.0
      %917 = vmatprep.subr.mxu0 0.0
      %918 = vmatpush1.msra.mxu0 0.0
      %919 = vmatprep.subr.mxu0 0.0
      %920 = vmatpush1.msra.mxu0 0.0
      %921 = vmatprep.subr.mxu0 0.0
      %922 = vmatpush1.msra.mxu0 0.0
      %923 = vmatprep.mubr.f32.mxu0 0.0
      %924 = vmatmul.mubr.f32.gmra.mrb[0].mxu0 %v527
      %v925 = vpop.f32.mrb[0].mxu0
      %v926 = vadd.f32 %v857, %v925
      %v927 = vpop.f32.mrb[0].mxu0
      %928 = vdwg.mxu0
      %v929 = vmax.f32 %v926, 0.0
      %v930 = vmul.f32 %v929, %v502
      %v931 = vld [vmem:[%s10] sm:$0xff]
      %v932 = vld [vmem:[%s10 + $0x8] sm:$0xff]
      %v933 = vld [vmem:[%s10 + $0x10] sm:$0xff]
      %v934 = vld [vmem:[%s10 + $0x18] sm:$0xff]
      %v935 = vld [vmem:[%s10 + $0x20] sm:$0xff]
      %v936 = vld [vmem:[%s10 + $0x28] sm:$0xff]
      %v937 = vld [vmem:[%s10 + $0x30] sm:$0xff]
      %v938 = vld [vmem:[%s10 + $0x38] sm:$0xff]
      %v939 = vld [vmem:[%s10 + $0x40] sm:$0xff]
      %v940 = vld [vmem:[%s10 + $0x48] sm:$0xff]
      %v941 = vld [vmem:[%s10 + $0x50] sm:$0xff]
      %v942 = vld [vmem:[%s10 + $0x58] sm:$0xff]
      %v943 = vld [vmem:[%s10 + $0x60] sm:$0xff]
      %v944 = vld [vmem:[%s10 + $0x68] sm:$0xff]
      %v945 = vld [vmem:[%s10 + $0x70] sm:$0xff]
      %v946 = vld [vmem:[%s10 + $0x78] sm:$0xff]
      %v947 = vld [vmem:[%s10 + $0x80] sm:$0xff]
      %v948 = vld [vmem:[%s10 + $0x88] sm:$0xff]
      %v949 = vld [vmem:[%s10 + $0x90] sm:$0xff]
      %v950 = vld [vmem:[%s10 + $0x98] sm:$0xff]
      %v951 = vld [vmem:[%s10 + $0xa0] sm:$0xff]
      %v952 = vld [vmem:[%s10 + $0xa8] sm:$0xff]
      %v953 = vld [vmem:[%s10 + $0xb0] sm:$0xff]
      %v954 = vld [vmem:[%s10 + $0xb8] sm:$0xff]
      %v955 = vld [vmem:[%s10 + $0xc0] sm:$0xff]
      %v956 = vld [vmem:[%s10 + $0xc8] sm:$0xff]
      %v957 = vld [vmem:[%s10 + $0xd0] sm:$0xff]
      %v958 = vld [vmem:[%s10 + $0xd8] sm:$0xff]
      %v959 = vld [vmem:[%s10 + $0xe0] sm:$0xff]
      %v960 = vld [vmem:[%s10 + $0xe8] sm:$0xff]
      %v961 = vld [vmem:[%s10 + $0xf0] sm:$0xff]
      %v962 = vld [vmem:[%s10 + $0xf8] sm:$0xff]
      %963 = vmatprep.subr.mxu0 %v932
      %964 = vmatpush1.msra.mxu0 %v931
      %965 = vmatprep.subr.mxu0 %v934
      %966 = vmatpush1.msra.mxu0 %v933
      %967 = vmatprep.subr.mxu0 %v936
      %968 = vmatpush1.msra.mxu0 %v935
      %969 = vmatprep.subr.mxu0 %v938
      %970 = vmatpush1.msra.mxu0 %v937
      %971 = vmatprep.subr.mxu0 %v940
      %972 = vmatpush1.msra.mxu0 %v939
      %973 = vmatprep.subr.mxu0 %v942
      %974 = vmatpush1.msra.mxu0 %v941
      %975 = vmatprep.subr.mxu0 %v944
      %976 = vmatpush1.msra.mxu0 %v943
      %977 = vmatprep.subr.mxu0 %v946
      %978 = vmatpush1.msra.mxu0 %v945
      %979 = vmatprep.subr.mxu0 %v948
      %980 = vmatpush1.msra.mxu0 %v947
      %981 = vmatprep.subr.mxu0 %v950
      %982 = vmatpush1.msra.mxu0 %v949
      %983 = vmatprep.subr.mxu0 %v952
      %984 = vmatpush1.msra.mxu0 %v951
      %985 = vmatprep.subr.mxu0 %v954
      %986 = vmatpush1.msra.mxu0 %v953
      %987 = vmatprep.subr.mxu0 %v956
      %988 = vmatpush1.msra.mxu0 %v955
      %989 = vmatprep.subr.mxu0 %v958
      %990 = vmatpush1.msra.mxu0 %v957
      %991 = vmatprep.subr.mxu0 %v960
      %992 = vmatpush1.msra.mxu0 %v959
      %993 = vmatprep.subr.mxu0 %v962
      %994 = vmatpush1.msra.mxu0 %v961
      %995 = vmatprep.subr.mxu0 0.0
      %996 = vmatpush1.msra.mxu0 0.0
      %997 = vmatprep.subr.mxu0 0.0
      %998 = vmatpush1.msra.mxu0 0.0
      %999 = vmatprep.subr.mxu0 0.0
      %1000 = vmatpush1.msra.mxu0 0.0
      %1001 = vmatprep.subr.mxu0 0.0
      %1002 = vmatpush1.msra.mxu0 0.0
      %1003 = vmatprep.subr.mxu0 0.0
      %1004 = vmatpush1.msra.mxu0 0.0
      %1005 = vmatprep.subr.mxu0 0.0
      %1006 = vmatpush1.msra.mxu0 0.0
      %1007 = vmatprep.subr.mxu0 0.0
      %1008 = vmatpush1.msra.mxu0 0.0
      %1009 = vmatprep.subr.mxu0 0.0
      %1010 = vmatpush1.msra.mxu0 0.0
      %1011 = vmatprep.subr.mxu0 0.0
      %1012 = vmatpush1.msra.mxu0 0.0
      %1013 = vmatprep.subr.mxu0 0.0
      %1014 = vmatpush1.msra.mxu0 0.0
      %1015 = vmatprep.subr.mxu0 0.0
      %1016 = vmatpush1.msra.mxu0 0.0
      %1017 = vmatprep.subr.mxu0 0.0
      %1018 = vmatpush1.msra.mxu0 0.0
      %1019 = vmatprep.subr.mxu0 0.0
      %1020 = vmatpush1.msra.mxu0 0.0
      %1021 = vmatprep.subr.mxu0 0.0
      %1022 = vmatpush1.msra.mxu0 0.0
      %1023 = vmatprep.subr.mxu0 0.0
      %1024 = vmatpush1.msra.mxu0 0.0
      %1025 = vmatprep.subr.mxu0 0.0
      %1026 = vmatpush1.msra.mxu0 0.0
      %1027 = vmatprep.mubr.f32.mxu0 0.0
      %1028 = vmatmul.mubr.f32.gmra.mrb[0].mxu0 %v930
      %v1029 = vpop.f32.mrb[0].mxu0
      %v1030 = vadd.f32 0.0, %v1029
      %v1031 = vpop.f32.mrb[0].mxu0
      %v1032 = vadd.f32 0.0, %v1031
      %1033 = vdwg.mxu0
      %v1034 = vld [vmem:[%s11] sm:$0xff]
      %v1035 = vld [vmem:[%s11 + $0x8] sm:$0xff]
      %v1036 = vmul.f32 %v1030, %v1034
      %v1037 = vmul.f32 %v1032, %v1035
      %v1038 = vld [vmem:[%s12] sm:$0xff]
      %v1039 = vld [vmem:[%s12 + $0x8] sm:$0xff]
      %v1040 = vld [vmem:[%s12 + $0x10] sm:$0xff]
      %v1041 = vld [vmem:[%s12 + $0x18] sm:$0xff]
      %v1042 = vld [vmem:[%s12 + $0x20] sm:$0xff]
      %v1043 = vld [vmem:[%s12 + $0x28] sm:$0xff]
      %v1044 = vld [vmem:[%s12 + $0x30] sm:$0xff]
      %v1045 = vld [vmem:[%s12 + $0x38] sm:$0xff]
      %v1046 = vld [vmem:[%s12 + $0x40] sm:$0xff]
      %v1047 = vld [vmem:[%s12 + $0x48] sm:$0xff]
      %v1048 = vld [vmem:[%s12 + $0x50] sm:$0xff]
      %v1049 = vld [vmem:[%s12 + $0x58] sm:$0xff]
      %v1050 = vld [vmem:[%s12 + $0x60] sm:$0xff]
      %v1051 = vld [vmem:[%s12 + $0x68] sm:$0xff]
      %v1052 = vld [vmem:[%s12 + $0x70] sm:$0xff]
      %v1053 = vld [vmem:[%s12 + $0x78] sm:$0xff]
      %v1054 = vld [vmem:[%s12 + $0x80] sm:$0xff]
      %v1055 = vld [vmem:[%s12 + $0x88] sm:$0xff]
      %v1056 = vld [vmem:[%s12 + $0x90] sm:$0xff]
      %v1057 = vld [vmem:[%s12 + $0x98] sm:$0xff]
      %v1058 = vld [vmem:[%s12 + $0xa0] sm:$0xff]
      %v1059 = vld [vmem:[%s12 + $0xa8] sm:$0xff]
      %v1060 = vld [vmem:[%s12 + $0xb0] sm:$0xff]
      %v1061 = vld [vmem:[%s12 + $0xb8] sm:$0xff]
      %v1062 = vld [vmem:[%s12 + $0xc0] sm:$0xff]
      %v1063 = vld [vmem:[%s12 + $0xc8] sm:$0xff]
      %v1064 = vld [vmem:[%s12 + $0xd0] sm:$0xff]
      %v1065 = vld [vmem:[%s12 + $0xd8] sm:$0xff]
      %v1066 = vld [vmem:[%s12 + $0xe0] sm:$0xff]
      %v1067 = vld [vmem:[%s12 + $0xe8] sm:$0xff]
      %v1068 = vld [vmem:[%s12 + $0xf0] sm:$0xff]
      %v1069 = vld [vmem:[%s12 + $0xf8] sm:$0xff]
      %v1070 = vld [vmem:[%s13] sm:$0xff]
      %1071 = vmatprep.subr.mxu0 0.0
      %1072 = vmatpush1.msra.mxu0 %v1038
      %1073 = vmatprep.subr.mxu0 0.0
      %1074 = vmatpush1.msra.mxu0 %v1039
      %1075 = vmatprep.subr.mxu0 0.0
      %1076 = vmatpush1.msra.mxu0 %v1040
      %1077 = vmatprep.subr.mxu0 0.0
      %1078 = vmatpush1.msra.mxu0 %v1041
      %1079 = vmatprep.subr.mxu0 0.0
      %1080 = vmatpush1.msra.mxu0 %v1042
      %1081 = vmatprep.subr.mxu0 0.0
      %1082 = vmatpush1.msra.mxu0 %v1043
      %1083 = vmatprep.subr.mxu0 0.0
      %1084 = vmatpush1.msra.mxu0 %v1044
      %1085 = vmatprep.subr.mxu0 0.0
      %1086 = vmatpush1.msra.mxu0 %v1045
      %1087 = vmatprep.subr.mxu0 0.0
      %1088 = vmatpush1.msra.mxu0 %v1046
      %1089 = vmatprep.subr.mxu0 0.0
      %1090 = vmatpush1.msra.mxu0 %v1047
      %1091 = vmatprep.subr.mxu0 0.0
      %1092 = vmatpush1.msra.mxu0 %v1048
      %1093 = vmatprep.subr.mxu0 0.0
      %1094 = vmatpush1.msra.mxu0 %v1049
      %1095 = vmatprep.subr.mxu0 0.0
      %1096 = vmatpush1.msra.mxu0 %v1050
      %1097 = vmatprep.subr.mxu0 0.0
      %1098 = vmatpush1.msra.mxu0 %v1051
      %1099 = vmatprep.subr.mxu0 0.0
      %1100 = vmatpush1.msra.mxu0 %v1052
      %1101 = vmatprep.subr.mxu0 0.0
      %1102 = vmatpush1.msra.mxu0 %v1053
      %1103 = vmatprep.subr.mxu0 0.0
      %1104 = vmatpush1.msra.mxu0 %v1054
      %1105 = vmatprep.subr.mxu0 0.0
      %1106 = vmatpush1.msra.mxu0 %v1055
      %1107 = vmatprep.subr.mxu0 0.0
      %1108 = vmatpush1.msra.mxu0 %v1056
      %1109 = vmatprep.subr.mxu0 0.0
      %1110 = vmatpush1.msra.mxu0 %v1057
      %1111 = vmatprep.subr.mxu0 0.0
      %1112 = vmatpush1.msra.mxu0 %v1058
      %1113 = vmatprep.subr.mxu0 0.0
      %1114 = vmatpush1.msra.mxu0 %v1059
      %1115 = vmatprep.subr.mxu0 0.0
      %1116 = vmatpush1.msra.mxu0 %v1060
      %1117 = vmatprep.subr.mxu0 0.0
      %1118 = vmatpush1.msra.mxu0 %v1061
      %1119 = vmatprep.subr.mxu0 0.0
      %1120 = vmatpush1.msra.mxu0 %v1062
      %1121 = vmatprep.subr.mxu0 0.0
      %1122 = vmatpush1.msra.mxu0 %v1063
      %1123 = vmatprep.subr.mxu0 0.0
      %1124 = vmatpush1.msra.mxu0 %v1064
      %1125 = vmatprep.subr.mxu0 0.0
      %1126 = vmatpush1.msra.mxu0 %v1065
      %1127 = vmatprep.subr.mxu0 0.0
      %1128 = vmatpush1.msra.mxu0 %v1066
      %1129 = vmatprep.subr.mxu0 0.0
      %1130 = vmatpush1.msra.mxu0 %v1067
      %1131 = vmatprep.subr.mxu0 0.0
      %1132 = vmatpush1.msra.mxu0 %v1068
      %1133 = vmatprep.subr.mxu0 0.0
      %1134 = vmatpush1.msra.mxu0 %v1069
      %1135 = vmatprep.mubr.f32.mxu0 %v1037
      %1136 = vmatmul.mubr.f32.gmra.mrb[0].mxu0 %v1036
      %v1137 = vpop.f32.mrb[0].mxu0
      %v1138 = vadd.f32 %v1070, %v1137
      %v1139 = vpop.f32.mrb[0].mxu0
      %1140 = vdwg.mxu0
      %vm1141 = vcmask 261120
      %1142 = vst.msk [vmem:[%s492] sm:$0xff] %vm1141, %v1138
      %p1143 = scmp.lt.s32.totalorder %s28, 3
      %s1144 = scalar_select %p1143, %s28, 3
      %s1145 = smul.addr %s1144, 8
      %s1146 = scalar_lea.vmem %s14, %s1145
      %p1147 = scmp.lt.s32.totalorder %s28, 3
      %s1148 = scalar_select %p1147, %s28, 3
      %s1149 = smul.addr %s1148, 3
      %s1150 = smul.addr %s1149, 8
      %s1151 = scalar_lea.vmem %s15, %s1150
      // Predicated region
      $region73: #{dqgn_forward.1} parent=71 // pred_check
        %p1152 = pneg %p329
      $region74: #{dqgn_forward.1} parent=71 // pred_check_branch
        %1154 = sbr.rel (%p1152) target = $region76
      $region75: #{dqgn_forward.1} parent=71 // pred_region
        _
      $region76: #{dqgn_forward.1} parent=71 // pred_fallthru
        _
      // Predicated region
      $region77: #{dqgn_forward.1} parent=71 // pred_check
        %p1155 = pneg %p355
      $region78: #{dqgn_forward.1} parent=71 // pred_check_branch
        %1157 = sbr.rel (%p1155) target = $region80
      $region79: #{dqgn_forward.1} parent=71 // pred_region
        _
      $region80: #{dqgn_forward.1} parent=71 // pred_fallthru
        _
    $region72: #{dqgn_forward.1} parent=5 // pred_fallthru
      _
    %p1158 = scmp.le.s32.totalorder 2, %s23
    // Predicated region
    $region81: #{dqgn_forward.1} parent=5 // pred_check
      %p1159 = pneg %p1158
    $region82: #{dqgn_forward.1} parent=5 // pred_check_branch
      %1161 = sbr.rel (%p1159) target = $region84
    $region83: #{dqgn_forward.1} parent=5 // pred_region
      %s1162 = ssub.s32 %s23, 2
      // Predicated region
      $region85: #{dqgn_forward.1} parent=83 // pred_check
        %p1163 = pneg %p335
      $region86: #{dqgn_forward.1} parent=83 // pred_check_branch
        %1165 = sbr.rel (%p1163) target = $region88
      $region87: #{dqgn_forward.1} parent=83 // pred_region
        %p1166 = scmp.lt.s32.totalorder %s29, 3
        %s1167 = scalar_select %p1166, %s29, 3
        %s1168 = smul.addr %s1167, 8
        %s1169 = scalar_lea.vmem %s14, %s1168
      $region88: #{dqgn_forward.1} parent=83 // pred_fallthru
        _
      // Predicated region
      $region89: #{dqgn_forward.1} parent=83 // pred_check
        %p1170 = pneg %p361
      $region90: #{dqgn_forward.1} parent=83 // pred_check_branch
        %1172 = sbr.rel (%p1170) target = $region92
      $region91: #{dqgn_forward.1} parent=83 // pred_region
        %p1173 = scmp.lt.s32.totalorder %s29, 3
        %s1174 = scalar_select %p1173, %s29, 3
        %s1175 = smul.addr %s1174, 3
        %s1176 = smul.addr %s1175, 8
        %s1177 = scalar_lea.vmem %s15, %s1176
      $region92: #{dqgn_forward.1} parent=83 // pred_fallthru
        _
    $region84: #{dqgn_forward.1} parent=5 // pred_fallthru
      _
  $region6: #{dqgn_forward.1} parent=0 // loop_footer
    %s27 = sadd.s32 1, %s23
  $region7: #{dqgn_forward.1} parent=0 // loop_footer_branch
    %22 = sbr.rel target = $region3
  $region8: #{dqgn_forward.1} parent=0 // loop_exit
    _

</llo_original>
